<compile_context>
chip_gen: v7x
topology: tpu7x:2x2x1
jax: 0.10.0
libtpu: 0.0.40
codegen_flags: <defaults>
</compile_context>

<pallas_src>
import jax
import jax.numpy as jnp
from jax.experimental import pallas as pl
from jax.experimental.pallas import tpu as pltpu

# ---------------- module-consistent config ----------------
N_EMBD = 384            # n_embd from the PyTorch module
HIDDEN = 4 * N_EMBD     # 1536
BATCH = 2
SEQ = 8


# =====================  Pallas kernel  =====================

def _ffn_kernel(x_ref, w1_ref, b1_ref, w2_ref, b2_ref, out_ref, acc_ref):
    """acc += relu(x @ W1[:, k] + b1[k]) @ W2[k, :]; emit acc + b2 on last k.

    x_ref : (TM, C)   f32     w1_ref : (C, HK)  bf16    b1_ref : (1, HK) f32
    w2_ref: (HK, C)   bf16    b2_ref : (1, C)   f32     out_ref: (TM, C) f32
    acc_ref: (TM, C)  f32 VMEM scratch (resident across the hidden axis)
    """
    k = pl.program_id(1)

    @pl.when(k == 0)
    def _():
        acc_ref[...] = jnp.zeros_like(acc_ref)

    # First matmul (bf16 operands, f32 accumulation on the MXU).
    x_bf = x_ref[...].astype(jnp.bfloat16)
    h = jnp.dot(x_bf, w1_ref[...], preferred_element_type=jnp.float32)  # (TM, HK)
    # Bias + ReLU in f32 (VPU); correct per hidden chunk since ReLU is elementwise.
    h = jnp.maximum(h + b1_ref[...], 0.0)

    # Second matmul chunk, accumulated in f32.
    acc_ref[...] += jnp.dot(h.astype(jnp.bfloat16), w2_ref[...],
                            preferred_element_type=jnp.float32)

    @pl.when(k == pl.num_programs(1) - 1)
    def _():
        # TODO(synk): nn.Dropout(0.2) omitted (identity in eval/inference mode).
        out_ref[...] = (acc_ref[...] + b2_ref[...]).astype(out_ref.dtype)


# =====================  pallas_call wrapper  =====================

def feed_forward(x, w1, b1, w2, b2, *, max_row_tile=256, hidden_chunk=512):
    """x: (..., C) f32 -> (..., C) f32, fused FFN in one pallas_call."""
    orig_shape = x.shape
    c = x.shape[-1]
    hdim = w1.shape[1]
    x2 = x.reshape(-1, c)                       # (M, C)
    m = x2.shape[0]

    # Row tiling: one step at small M (weight-DMA-bound regime -> fetch weights
    # once, no grid-step overhead); max_row_tile-row blocks at large M
    # (MXU-bound regime).
    if m <= max_row_tile:
        row_tile = m
        m_pad = m
    else:
        row_tile = max_row_tile
        m_pad = pl.cdiv(m, row_tile) * row_tile
        x2 = jnp.pad(x2, ((0, m_pad - m), (0, 0)))

    # Hidden tiling: single chunk when the f32 hidden tile is small; otherwise
    # chunk so the (row_tile, hidden_tile) intermediate stays small and each
    # W1/W2 chunk DMA overlaps the previous chunk's compute.
    if row_tile * hdim * 4 <= (2 << 20) or hdim % hidden_chunk != 0:
        hidden_tile = hdim
    else:
        hidden_tile = hidden_chunk

    grid = (m_pad // row_tile, hdim // hidden_tile)
    row_sem = "parallel" if grid[0] > 1 else "arbitrary"

    # bf16 weights: halve HBM traffic, native bf16 MXU path. Biases stay f32.
    w1_bf = w1.astype(jnp.bfloat16)
    w2_bf = w2.astype(jnp.bfloat16)

    out = pl.pallas_call(
        _ffn_kernel,
        out_shape=jax.ShapeDtypeStruct((m_pad, c), x.dtype),
        grid=grid,
        in_specs=[
            pl.BlockSpec((row_tile, c), lambda i, k: (i, 0)),        # x rows
            pl.BlockSpec((c, hidden_tile), lambda i, k: (0, k)),     # W1 chunk
            pl.BlockSpec((1, hidden_tile), lambda i, k: (0, k)),     # b1 chunk
            pl.BlockSpec((hidden_tile, c), lambda i, k: (k, 0)),     # W2 chunk
            pl.BlockSpec((1, c), lambda i, k: (0, 0)),               # b2 (resident)
        ],
        out_specs=pl.BlockSpec((row_tile, c), lambda i, k: (i, 0)),
        scratch_shapes=[pltpu.VMEM((row_tile, c), jnp.float32)],
        compiler_params=pltpu.CompilerParams(
            dimension_semantics=(row_sem, "arbitrary")),
    )(x2, w1_bf, b1, w2_bf, b2)

    if m_pad != m:
        out = out[:m]
    return out.reshape(orig_shape)


# =====================  pure-JAX reference  =====================

def ref_forward(x, w1, b1, w2, b2):
    h = jax.nn.relu(x @ w1 + b1[0])
    return h @ w2 + b2[0]


# =====================  main  =====================

if __name__ == "__main__":
    key = jax.random.PRNGKey(0)
    kx, k1, k2 = jax.random.split(key, 3)

    x = jax.random.normal(kx, (BATCH, SEQ, N_EMBD), dtype=jnp.float32)
    w1 = (0.02 * jax.random.normal(k1, (N_EMBD, HIDDEN))).astype(jnp.float32)
    b1 = jnp.zeros((1, HIDDEN), jnp.float32)
    w2 = (0.02 * jax.random.normal(k2, (HIDDEN, N_EMBD))).astype(jnp.float32)
    b2 = jnp.zeros((1, N_EMBD), jnp.float32)

    y = feed_forward(x, w1, b1, w2, b2)
    y = jax.block_until_ready(y)

    ref = ref_forward(x, w1, b1, w2, b2)
    assert y.shape == (BATCH, SEQ, N_EMBD), y.shape
    # Kernel uses bf16 weights/activations on the MXU (f32 accumulation), so
    # compare against the f32 reference with a bf16-appropriate tolerance.
    assert jnp.allclose(y, ref, atol=2e-2, rtol=2e-2), (
        float(jnp.max(jnp.abs(y - ref))))
    print("KERNEL_OK")
</pallas_src>

<mosaic_0001>
module attributes {stable_mosaic.version = 11 : i64} {
  func.func @_ffn_kernel(%arg0: i32, %arg1: i32, %arg2: memref<16x384xf32, #tpu.memory_space<vmem>>, %arg3: memref<384x1536xbf16, #tpu.memory_space<vmem>>, %arg4: memref<1x1536xf32, #tpu.memory_space<vmem>>, %arg5: memref<1536x384xbf16, #tpu.memory_space<vmem>>, %arg6: memref<1x384xf32, #tpu.memory_space<vmem>>, %arg7: memref<16x384xf32, #tpu.memory_space<vmem>>, %arg8: memref<16x384xf32, #tpu.memory_space<vmem>>) attributes {dimension_semantics = [#tpu.dimension_semantics<arbitrary>, #tpu.dimension_semantics<arbitrary>], iteration_bounds = array<i64: 1, 1>, scalar_prefetch = 0 : i64, scratch_operands = 1 : i64, tpu.core_type = #tpu.core_type<tc>, window_params = [{transform_indices = @transform_0, window_bounds = array<i64: 16, 384>}, {transform_indices = @transform_1, window_bounds = array<i64: 384, 1536>}, {transform_indices = @transform_2, window_bounds = array<i64: 1, 1536>}, {transform_indices = @transform_3, window_bounds = array<i64: 1536, 384>}, {pipeline_mode = #tpu.pipeline_mode<synchronous>, transform_indices = @transform_4, window_bounds = array<i64: 1, 384>}, {transform_indices = @transform_5, window_bounds = array<i64: 16, 384>}]} {
    %c0_i32 = arith.constant 0 : i32
    %0 = arith.cmpi eq, %arg1, %c0_i32 : i32
    %1 = arith.extui %0 : i1 to i32
    %c0_i32_0 = arith.constant 0 : i32
    %2 = arith.cmpi ne, %1, %c0_i32_0 : i32
    scf.if %2 {
      %cst_16 = arith.constant 0.000000e+00 : f32
      %21 = vector.broadcast %cst_16 : f32 to vector<16x384xf32>
      %c0_17 = arith.constant 0 : index
      %c0_18 = arith.constant 0 : index
      %22 = vector.load %arg8[%c0_17, %c0_18] : memref<16x384xf32, #tpu.memory_space<vmem>>, vector<16x384xf32>
      tpu.vector_store %arg8[%c0_17, %c0_18], %21 {strides = array<i32>} : memref<16x384xf32, #tpu.memory_space<vmem>>, vector<16x384xf32>,
    } else {
    }
    %c0 = arith.constant 0 : index
    %c0_1 = arith.constant 0 : index
    %3 = vector.load %arg2[%c0, %c0_1] : memref<16x384xf32, #tpu.memory_space<vmem>>, vector<16x384xf32>
    %4 = arith.truncf %3 : vector<16x384xf32> to vector<16x384xbf16>
    %c0_2 = arith.constant 0 : index
    %c0_3 = arith.constant 0 : index
    %5 = vector.load %arg3[%c0_2, %c0_3] : memref<384x1536xbf16, #tpu.memory_space<vmem>>, vector<384x1536xbf16>
    %cst = arith.constant dense<0.000000e+00> : vector<16x1536xf32>
    %6 = tpu.matmul %4, %5, %cst {dimension_numbers = #tpu.dot_dimension_numbers<[1], [0], [0], [1], [0, 0, 1, 1], [], []>} : vector<16x384xbf16>, vector<384x1536xbf16>, vector<16x1536xf32> -> vector<16x1536xf32>
    %c0_4 = arith.constant 0 : index
    %c0_5 = arith.constant 0 : index
    %7 = vector.load %arg4[%c0_4, %c0_5] : memref<1x1536xf32, #tpu.memory_space<vmem>>, vector<1x1536xf32>
    %8 = vector.broadcast %7 : vector<1x1536xf32> to vector<16x1536xf32>
    %9 = arith.addf %6, %8 : vector<16x1536xf32>
    %cst_6 = arith.constant 0.000000e+00 : f32
    %10 = vector.broadcast %cst_6 : f32 to vector<16x1536xf32>
    %11 = arith.maximumf %9, %10 : vector<16x1536xf32>
    %c0_7 = arith.constant 0 : index
    %c0_8 = arith.constant 0 : index
    %12 = vector.load %arg8[%c0_7, %c0_8] : memref<16x384xf32, #tpu.memory_space<vmem>>, vector<16x384xf32>
    %13 = arith.truncf %11 : vector<16x1536xf32> to vector<16x1536xbf16>
    %c0_9 = arith.constant 0 : index
    %c0_10 = arith.constant 0 : index
    %14 = vector.load %arg5[%c0_9, %c0_10] : memref<1536x384xbf16, #tpu.memory_space<vmem>>, vector<1536x384xbf16>
    %cst_11 = arith.constant dense<0.000000e+00> : vector<16x384xf32>
    %15 = tpu.matmul %13, %14, %cst_11 {dimension_numbers = #tpu.dot_dimension_numbers<[1], [0], [0], [1], [0, 0, 1, 1], [], []>} : vector<16x1536xbf16>, vector<1536x384xbf16>, vector<16x384xf32> -> vector<16x384xf32>
    %16 = arith.addf %12, %15 : vector<16x384xf32>
    %c0_12 = arith.constant 0 : index
    %c0_13 = arith.constant 0 : index
    %17 = vector.load %arg8[%c0_12, %c0_13] : memref<16x384xf32, #tpu.memory_space<vmem>>, vector<16x384xf32>
    tpu.vector_store %arg8[%c0_12, %c0_13], %16 {strides = array<i32>} : memref<16x384xf32, #tpu.memory_space<vmem>>, vector<16x384xf32>,
    %c0_i32_14 = arith.constant 0 : i32
    %18 = arith.cmpi eq, %arg1, %c0_i32_14 : i32
    %19 = arith.extui %18 : i1 to i32
    %c0_i32_15 = arith.constant 0 : i32
    %20 = arith.cmpi ne, %19, %c0_i32_15 : i32
    scf.if %20 {
      %c0_16 = arith.constant 0 : index
      %c0_17 = arith.constant 0 : index
      %21 = vector.load %arg8[%c0_16, %c0_17] : memref<16x384xf32, #tpu.memory_space<vmem>>, vector<16x384xf32>
      %c0_18 = arith.constant 0 : index
      %c0_19 = arith.constant 0 : index
      %22 = vector.load %arg6[%c0_18, %c0_19] : memref<1x384xf32, #tpu.memory_space<vmem>>, vector<1x384xf32>
      %23 = vector.broadcast %22 : vector<1x384xf32> to vector<16x384xf32>
      %24 = arith.addf %21, %23 : vector<16x384xf32>
      %c0_20 = arith.constant 0 : index
      %c0_21 = arith.constant 0 : index
      %25 = vector.load %arg7[%c0_20, %c0_21] : memref<16x384xf32, #tpu.memory_space<vmem>>, vector<16x384xf32>
      tpu.vector_store %arg7[%c0_20, %c0_21], %24 {strides = array<i32>} : memref<16x384xf32, #tpu.memory_space<vmem>>, vector<16x384xf32>,
    } else {
    }
    return
  }
  func.func @transform_0(%arg0: i32, %arg1: i32) -> (i32, i32) {
    %c0_i32 = arith.constant 0 : i32
    %c0_i32_0 = arith.constant 0 : i32
    return %arg0, %c0_i32 : i32, i32
  }
  func.func @transform_1(%arg0: i32, %arg1: i32) -> (i32, i32) {
    %c0_i32 = arith.constant 0 : i32
    %c0_i32_0 = arith.constant 0 : i32
    return %c0_i32, %arg1 : i32, i32
  }
  func.func @transform_2(%arg0: i32, %arg1: i32) -> (i32, i32) {
    %c0_i32 = arith.constant 0 : i32
    %c0_i32_0 = arith.constant 0 : i32
    return %c0_i32, %arg1 : i32, i32
  }
  func.func @transform_3(%arg0: i32, %arg1: i32) -> (i32, i32) {
    %c0_i32 = arith.constant 0 : i32
    %c0_i32_0 = arith.constant 0 : i32
    return %arg1, %c0_i32 : i32, i32
  }
  func.func @transform_4(%arg0: i32, %arg1: i32) -> (i32, i32) {
    %c0_i32 = arith.constant 0 : i32
    %c0_i32_0 = arith.constant 0 : i32
    %c0_i32_1 = arith.constant 0 : i32
    return %c0_i32, %c0_i32_0 : i32, i32
  }
  func.func @transform_5(%arg0: i32, %arg1: i32) -> (i32, i32) {
    %c0_i32 = arith.constant 0 : i32
    %c0_i32_0 = arith.constant 0 : i32
    return %arg0, %c0_i32 : i32, i32
  }
}

</mosaic_0001>

<llo_original>
// kernel: tpu_custom_call.1
$region0: #{tpu_custom_call.1}
  #allocation0 [shape = 'u32[]', space=smem, size = 0x4, offset = 0x4, fixed_abs, tag = 'smem constant byte address 0x4 - core index']
  #allocation1 [shape = 'u32[144,128]{1,0:T(1,128)}', space=vmem, size = 0x12000, scoped, tag = 'internal scratch']
  #allocation2 [shape = 'f32[16,384]{1,0:T(8,128)}', space=vmem, size = 0x6000, scoped, tag = 'scratch operand']
  %s0 = inlined_call_operand.hbm [shape: f32[16,384], index: 0, kind: input, shape index: {}]
  %s1 = inlined_call_operand.hbm [shape: bf16[384,1536], index: 1, kind: input, shape index: {}]
  %s2 = inlined_call_operand.hbm [shape: f32[1,1536], index: 2, kind: input, shape index: {}]
  %s3 = inlined_call_operand.hbm [shape: bf16[1536,384], index: 3, kind: input, shape index: {}]
  %s4 = inlined_call_operand.hbm [shape: f32[1,384], index: 4, kind: input, shape index: {}]
  %s5 = inlined_call_operand.hbm [shape: f32[16,384], index: 5, kind: output, shape index: {}]
  %s6 = sld [smem:[#allocation0]]
  $region58: #{tpu_custom_call.1} parent=0
    _
  %s8 = ssub.s32 1, %s6
  %s9 = scalar_select 0, %s8, %s6
  $region1: #{tpu_custom_call.1} parent=0
    #allocation3 [shape = 'u8[24576]{0}', space=vmem, size = 0x6000, scoped, tag = 'input window, operand 0, single buffered']
    #allocation4 [shape = 's32[1]{0}', space=sflag, size = 0x4, scoped, tag = 'scoped memory for tpu_custom_call.1']
    #allocation5 [shape = 's32[1]{0}', space=sflag, size = 0x4, scoped, tag = 'scoped memory for tpu_custom_call.1']
    #allocation6 [shape = 'u8[1179648]{0}', space=vmem, size = 0x120000, scoped, tag = 'input window, operand 1, single buffered']
    #allocation7 [shape = 's32[1]{0}', space=sflag, size = 0x4, scoped, tag = 'scoped memory for tpu_custom_call.1']
    #allocation8 [shape = 'u8[6144]{0}', space=vmem, size = 0x1800, scoped, tag = 'input window, operand 2, single buffered']
    #allocation9 [shape = 'u8[1179648]{0}', space=vmem, size = 0x120000, scoped, tag = 'input window, operand 3, single buffered']
    #allocation10 [shape = 's32[1]{0}', space=sflag, size = 0x4, scoped, tag = 'scoped memory for tpu_custom_call.1']
    #allocation11 [shape = 'u8[1536]{0}', space=vmem, size = 0x800, scoped, tag = 'input window, operand 4, single buffered']
    #allocation12 [shape = 'u8[24576]{0}', space=vmem, size = 0x6000, scoped, tag = 'output window, operand 0, single buffered']
    %10 = vsyncpa [#allocation4], 0
    %11 = vsyncpa [#allocation7], 0
    %12 = vsyncpa [#allocation10], 0
    %13 = vsyncpa [#allocation5], 0
    // Predicated region
    $region2: #{tpu_custom_call.1} parent=1 // pred_check
      _
    $region3: #{tpu_custom_call.1} parent=1 // pred_check_branch
      %15 = sbr.rel (0) target = $region5
    $region4: #{tpu_custom_call.1} parent=1 // pred_region
      %s17 = ssub.s32 768, 768
      %18 = vsyncadd [#allocation4], %s17
      %s19 = sshll.u32 [#allocation3], 4
      %s20 = int_to_ptr.vmem [resolvable:$true] %s19
      %25 = dma.hbm_to_vmem [thread:$0]  %s0, 768, %s20, [#allocation4], 384, 384, 24
    $region5: #{tpu_custom_call.1} parent=1 // pred_fallthru
      _
    // Predicated region
    $region6: #{tpu_custom_call.1} parent=1 // pred_check
      _
    $region7: #{tpu_custom_call.1} parent=1 // pred_check_branch
      %27 = sbr.rel (0) target = $region9
    $region8: #{tpu_custom_call.1} parent=1 // pred_region
      %s29 = ssub.s32 36864, 36864
      %30 = vsyncadd [#allocation7], %s29
      %s31 = sshll.u32 [#allocation6], 4
      %s32 = int_to_ptr.vmem [resolvable:$true] %s31
      %37 = dma.hbm_to_vmem [thread:$0]  %s1, 36864, %s32, [#allocation7], 768, 768, 48
    $region9: #{tpu_custom_call.1} parent=1 // pred_fallthru
      _
    // Predicated region
    $region10: #{tpu_custom_call.1} parent=1 // pred_check
      _
    $region11: #{tpu_custom_call.1} parent=1 // pred_check_branch
      %39 = sbr.rel (0) target = $region13
    $region12: #{tpu_custom_call.1} parent=1 // pred_region
      %s41 = ssub.s32 192, 192
      %42 = vsyncadd [#allocation7], %s41
      %s44 = sshll.u32 [#allocation8], 4
      %s45 = int_to_ptr.vmem [resolvable:$true] %s44
      %47 = dma.hbm_to_vmem [thread:$0]  %s2, 192, %s45, [#allocation7]
    $region13: #{tpu_custom_call.1} parent=1 // pred_fallthru
      _
    // Predicated region
    $region14: #{tpu_custom_call.1} parent=1 // pred_check
      _
    $region15: #{tpu_custom_call.1} parent=1 // pred_check_branch
      %49 = sbr.rel (0) target = $region17
    $region16: #{tpu_custom_call.1} parent=1 // pred_region
      %s51 = ssub.s32 36864, 36864
      %52 = vsyncadd [#allocation10], %s51
      %s53 = sshll.u32 [#allocation9], 4
      %s54 = int_to_ptr.vmem [resolvable:$true] %s53
      %59 = dma.hbm_to_vmem [thread:$0]  %s3, 36864, %s54, [#allocation10], 192, 192, 12
    $region17: #{tpu_custom_call.1} parent=1 // pred_fallthru
      _
    // Predicated region
    $region18: #{tpu_custom_call.1} parent=1 // pred_check
      _
    $region19: #{tpu_custom_call.1} parent=1 // pred_check_branch
      %61 = sbr.rel (0) target = $region21
    $region20: #{tpu_custom_call.1} parent=1 // pred_region
      %s63 = ssub.s32 48, 48
      %64 = vsyncadd [#allocation10], %s63
      %s66 = sshll.u32 [#allocation11], 4
      %s67 = int_to_ptr.vmem [resolvable:$true] %s66
      %69 = dma.hbm_to_vmem [thread:$0]  %s4, 48, %s67, [#allocation10]
    $region21: #{tpu_custom_call.1} parent=1 // pred_fallthru
      _
    // Predicated region
    $region22: #{tpu_custom_call.1} parent=1 // pred_check
      _
    $region23: #{tpu_custom_call.1} parent=1 // pred_check_branch
      %71 = sbr.rel (0) target = $region25
    $region24: #{tpu_custom_call.1} parent=1 // pred_region
      %72 = dma.done [#allocation4], 768
    $region25: #{tpu_custom_call.1} parent=1 // pred_fallthru
      _
    // Predicated region
    $region26: #{tpu_custom_call.1} parent=1 // pred_check
      _
    $region27: #{tpu_custom_call.1} parent=1 // pred_check_branch
      %74 = sbr.rel (0) target = $region29
    $region28: #{tpu_custom_call.1} parent=1 // pred_region
      %75 = dma.done [#allocation7], 36864
    $region29: #{tpu_custom_call.1} parent=1 // pred_fallthru
      _
    // Predicated region
    $region30: #{tpu_custom_call.1} parent=1 // pred_check
      _
    $region31: #{tpu_custom_call.1} parent=1 // pred_check_branch
      %77 = sbr.rel (0) target = $region33
    $region32: #{tpu_custom_call.1} parent=1 // pred_region
      %78 = dma.done [#allocation7], 192
    $region33: #{tpu_custom_call.1} parent=1 // pred_fallthru
      _
    // Predicated region
    $region34: #{tpu_custom_call.1} parent=1 // pred_check
      _
    $region35: #{tpu_custom_call.1} parent=1 // pred_check_branch
      %80 = sbr.rel (0) target = $region37
    $region36: #{tpu_custom_call.1} parent=1 // pred_region
      %81 = dma.done [#allocation10], 36864
    $region37: #{tpu_custom_call.1} parent=1 // pred_fallthru
      _
    // Predicated region
    $region38: #{tpu_custom_call.1} parent=1 // pred_check
      _
    $region39: #{tpu_custom_call.1} parent=1 // pred_check_branch
      %83 = sbr.rel (0) target = $region41
    $region40: #{tpu_custom_call.1} parent=1 // pred_region
      %84 = dma.done [#allocation10], 48
    $region41: #{tpu_custom_call.1} parent=1 // pred_fallthru
      _
    %p86 = scmp.eq.s32.totalorder 0, 0
    // Predicated region
    $region42: #{tpu_custom_call.1} parent=1 // pred_check
      %p87 = pneg %p86
    $region43: #{tpu_custom_call.1} parent=1 // pred_check_branch
      %89 = sbr.rel (%p87) target = $region45
    $region44: #{tpu_custom_call.1} parent=1 // pred_region
      %90 = vst [vmem:[#allocation2] sm:$0xff] 0.0
      %91 = vst [vmem:[#allocation2 + $0x8] sm:$0xff] 0.0
      %92 = vst [vmem:[#allocation2 + $0x10] sm:$0xff] 0.0
      %93 = vst [vmem:[#allocation2 + $0x18] sm:$0xff] 0.0
      %94 = vst [vmem:[#allocation2 + $0x20] sm:$0xff] 0.0
      %95 = vst [vmem:[#allocation2 + $0x28] sm:$0xff] 0.0
    $region45: #{tpu_custom_call.1} parent=1 // pred_fallthru
      _
    %v96 = vld [vmem:[#allocation3] sm:$0xff]
    %v97 = vld [vmem:[#allocation3 + $0x8] sm:$0xff]
    %v98 = vld [vmem:[#allocation3 + $0x10] sm:$0xff]
    %v99 = vld [vmem:[#allocation3 + $0x18] sm:$0xff]
    %v100 = vld [vmem:[#allocation3 + $0x20] sm:$0xff]
    %v101 = vld [vmem:[#allocation3 + $0x28] sm:$0xff]
    %v102 = vpack.c.bf16 %v99, %v96
    %v103 = vpack.c.bf16 %v100, %v97
    %v104 = vpack.c.bf16 %v101, %v98
    %v105 = vld [vmem:[#allocation6] sm:$0xff]
    %v106 = vld [vmem:[#allocation6 + $0x8] sm:$0xff]
    %v107 = vld [vmem:[#allocation6 + $0x10] sm:$0xff]
    %v108 = vld [vmem:[#allocation6 + $0x18] sm:$0xff]
    %v109 = vld [vmem:[#allocation6 + $0x20] sm:$0xff]
    %v110 = vld [vmem:[#allocation6 + $0x28] sm:$0xff]
    %v111 = vld [vmem:[#allocation6 + $0x30] sm:$0xff]
    %v112 = vld [vmem:[#allocation6 + $0x38] sm:$0xff]
    %v113 = vld [vmem:[#allocation6 + $0x40] sm:$0xff]
    %v114 = vld [vmem:[#allocation6 + $0x48] sm:$0xff]
    %v115 = vld [vmem:[#allocation6 + $0x50] sm:$0xff]
    %v116 = vld [vmem:[#allocation6 + $0x58] sm:$0xff]
    %v117 = vld [vmem:[#allocation6 + $0x60] sm:$0xff]
    %v118 = vld [vmem:[#allocation6 + $0x68] sm:$0xff]
    %v119 = vld [vmem:[#allocation6 + $0x70] sm:$0xff]
    %v120 = vld [vmem:[#allocation6 + $0x78] sm:$0xff]
    %v121 = vld [vmem:[#allocation6 + $0x80] sm:$0xff]
    %v122 = vld [vmem:[#allocation6 + $0x88] sm:$0xff]
    %v123 = vld [vmem:[#allocation6 + $0x90] sm:$0xff]
    %v124 = vld [vmem:[#allocation6 + $0x98] sm:$0xff]
    %v125 = vld [vmem:[#allocation6 + $0xa0] sm:$0xff]
    %v126 = vld [vmem:[#allocation6 + $0xa8] sm:$0xff]
    %v127 = vld [vmem:[#allocation6 + $0xb0] sm:$0xff]
    %v128 = vld [vmem:[#allocation6 + $0xb8] sm:$0xff]
    %v129 = vld [vmem:[#allocation6 + $0xc0] sm:$0xff]
    %v130 = vld [vmem:[#allocation6 + $0xc8] sm:$0xff]
    %v131 = vld [vmem:[#allocation6 + $0xd0] sm:$0xff]
    %v132 = vld [vmem:[#allocation6 + $0xd8] sm:$0xff]
    %v133 = vld [vmem:[#allocation6 + $0xe0] sm:$0xff]
    %v134 = vld [vmem:[#allocation6 + $0xe8] sm:$0xff]
    %v135 = vld [vmem:[#allocation6 + $0xf0] sm:$0xff]
    %v136 = vld [vmem:[#allocation6 + $0xf8] sm:$0xff]
    %v137 = vld [vmem:[#allocation6 + $0x100] sm:$0xff]
    %v138 = vld [vmem:[#allocation6 + $0x108] sm:$0xff]
    %v139 = vld [vmem:[#allocation6 + $0x110] sm:$0xff]
    %v140 = vld [vmem:[#allocation6 + $0x118] sm:$0xff]
    %v141 = vld [vmem:[#allocation6 + $0x120] sm:$0xff]
    %v142 = vld [vmem:[#allocation6 + $0x128] sm:$0xff]
    %v143 = vld [vmem:[#allocation6 + $0x130] sm:$0xff]
    %v144 = vld [vmem:[#allocation6 + $0x138] sm:$0xff]
    %v145 = vld [vmem:[#allocation6 + $0x140] sm:$0xff]
    %v146 = vld [vmem:[#allocation6 + $0x148] sm:$0xff]
    %v147 = vld [vmem:[#allocation6 + $0x150] sm:$0xff]
    %v148 = vld [vmem:[#allocation6 + $0x158] sm:$0xff]
    %v149 = vld [vmem:[#allocation6 + $0x160] sm:$0xff]
    %v150 = vld [vmem:[#allocation6 + $0x168] sm:$0xff]
    %v151 = vld [vmem:[#allocation6 + $0x170] sm:$0xff]
    %v152 = vld [vmem:[#allocation6 + $0x178] sm:$0xff]
    %v153 = vld [vmem:[#allocation6 + $0x180] sm:$0xff]
    %v154 = vld [vmem:[#allocation6 + $0x188] sm:$0xff]
    %v155 = vld [vmem:[#allocation6 + $0x190] sm:$0xff]
    %v156 = vld [vmem:[#allocation6 + $0x198] sm:$0xff]
    %v157 = vld [vmem:[#allocation6 + $0x1a0] sm:$0xff]
    %v158 = vld [vmem:[#allocation6 + $0x1a8] sm:$0xff]
    %v159 = vld [vmem:[#allocation6 + $0x1b0] sm:$0xff]
    %v160 = vld [vmem:[#allocation6 + $0x1b8] sm:$0xff]
    %v161 = vld [vmem:[#allocation6 + $0x1c0] sm:$0xff]
    %v162 = vld [vmem:[#allocation6 + $0x1c8] sm:$0xff]
    %v163 = vld [vmem:[#allocation6 + $0x1d0] sm:$0xff]
    %v164 = vld [vmem:[#allocation6 + $0x1d8] sm:$0xff]
    %v165 = vld [vmem:[#allocation6 + $0x1e0] sm:$0xff]
    %v166 = vld [vmem:[#allocation6 + $0x1e8] sm:$0xff]
    %v167 = vld [vmem:[#allocation6 + $0x1f0] sm:$0xff]
    %v168 = vld [vmem:[#allocation6 + $0x1f8] sm:$0xff]
    %v169 = vld [vmem:[#allocation6 + $0x200] sm:$0xff]
    %v170 = vld [vmem:[#allocation6 + $0x208] sm:$0xff]
    %v171 = vld [vmem:[#allocation6 + $0x210] sm:$0xff]
    %v172 = vld [vmem:[#allocation6 + $0x218] sm:$0xff]
    %v173 = vld [vmem:[#allocation6 + $0x220] sm:$0xff]
    %v174 = vld [vmem:[#allocation6 + $0x228] sm:$0xff]
    %v175 = vld [vmem:[#allocation6 + $0x230] sm:$0xff]
    %v176 = vld [vmem:[#allocation6 + $0x238] sm:$0xff]
    %v177 = vld [vmem:[#allocation6 + $0x240] sm:$0xff]
    %v178 = vld [vmem:[#allocation6 + $0x248] sm:$0xff]
    %v179 = vld [vmem:[#allocation6 + $0x250] sm:$0xff]
    %v180 = vld [vmem:[#allocation6 + $0x258] sm:$0xff]
    %v181 = vld [vmem:[#allocation6 + $0x260] sm:$0xff]
    %v182 = vld [vmem:[#allocation6 + $0x268] sm:$0xff]
    %v183 = vld [vmem:[#allocation6 + $0x270] sm:$0xff]
    %v184 = vld [vmem:[#allocation6 + $0x278] sm:$0xff]
    %v185 = vld [vmem:[#allocation6 + $0x280] sm:$0xff]
    %v186 = vld [vmem:[#allocation6 + $0x288] sm:$0xff]
    %v187 = vld [vmem:[#allocation6 + $0x290] sm:$0xff]
    %v188 = vld [vmem:[#allocation6 + $0x298] sm:$0xff]
    %v189 = vld [vmem:[#allocation6 + $0x2a0] sm:$0xff]
    %v190 = vld [vmem:[#allocation6 + $0x2a8] sm:$0xff]
    %v191 = vld [vmem:[#allocation6 + $0x2b0] sm:$0xff]
    %v192 = vld [vmem:[#allocation6 + $0x2b8] sm:$0xff]
    %v193 = vld [vmem:[#allocation6 + $0x2c0] sm:$0xff]
    %v194 = vld [vmem:[#allocation6 + $0x2c8] sm:$0xff]
    %v195 = vld [vmem:[#allocation6 + $0x2d0] sm:$0xff]
    %v196 = vld [vmem:[#allocation6 + $0x2d8] sm:$0xff]
    %v197 = vld [vmem:[#allocation6 + $0x2e0] sm:$0xff]
    %v198 = vld [vmem:[#allocation6 + $0x2e8] sm:$0xff]
    %v199 = vld [vmem:[#allocation6 + $0x2f0] sm:$0xff]
    %v200 = vld [vmem:[#allocation6 + $0x2f8] sm:$0xff]
    %v201 = vld [vmem:[#allocation6 + $0x300] sm:$0xff]
    %v202 = vld [vmem:[#allocation6 + $0x308] sm:$0xff]
    %v203 = vld [vmem:[#allocation6 + $0x310] sm:$0xff]
    %v204 = vld [vmem:[#allocation6 + $0x318] sm:$0xff]
    %v205 = vld [vmem:[#allocation6 + $0x320] sm:$0xff]
    %v206 = vld [vmem:[#allocation6 + $0x328] sm:$0xff]
    %v207 = vld [vmem:[#allocation6 + $0x330] sm:$0xff]
    %v208 = vld [vmem:[#allocation6 + $0x338] sm:$0xff]
    %v209 = vld [vmem:[#allocation6 + $0x340] sm:$0xff]
    %v210 = vld [vmem:[#allocation6 + $0x348] sm:$0xff]
    %v211 = vld [vmem:[#allocation6 + $0x350] sm:$0xff]
    %v212 = vld [vmem:[#allocation6 + $0x358] sm:$0xff]
    %v213 = vld [vmem:[#allocation6 + $0x360] sm:$0xff]
    %v214 = vld [vmem:[#allocation6 + $0x368] sm:$0xff]
    %v215 = vld [vmem:[#allocation6 + $0x370] sm:$0xff]
    %v216 = vld [vmem:[#allocation6 + $0x378] sm:$0xff]
    %v217 = vld [vmem:[#allocation6 + $0x380] sm:$0xff]
    %v218 = vld [vmem:[#allocation6 + $0x388] sm:$0xff]
    %v219 = vld [vmem:[#allocation6 + $0x390] sm:$0xff]
    %v220 = vld [vmem:[#allocation6 + $0x398] sm:$0xff]
    %v221 = vld [vmem:[#allocation6 + $0x3a0] sm:$0xff]
    %v222 = vld [vmem:[#allocation6 + $0x3a8] sm:$0xff]
    %v223 = vld [vmem:[#allocation6 + $0x3b0] sm:$0xff]
    %v224 = vld [vmem:[#allocation6 + $0x3b8] sm:$0xff]
    %v225 = vld [vmem:[#allocation6 + $0x3c0] sm:$0xff]
    %v226 = vld [vmem:[#allocation6 + $0x3c8] sm:$0xff]
    %v227 = vld [vmem:[#allocation6 + $0x3d0] sm:$0xff]
    %v228 = vld [vmem:[#allocation6 + $0x3d8] sm:$0xff]
    %v229 = vld [vmem:[#allocation6 + $0x3e0] sm:$0xff]
    %v230 = vld [vmem:[#allocation6 + $0x3e8] sm:$0xff]
    %v231 = vld [vmem:[#allocation6 + $0x3f0] sm:$0xff]
    %v232 = vld [vmem:[#allocation6 + $0x3f8] sm:$0xff]
    %v233 = vld [vmem:[#allocation6 + $0x400] sm:$0xff]
    %v234 = vld [vmem:[#allocation6 + $0x408] sm:$0xff]
    %v235 = vld [vmem:[#allocation6 + $0x410] sm:$0xff]
    %v236 = vld [vmem:[#allocation6 + $0x418] sm:$0xff]
    %v237 = vld [vmem:[#allocation6 + $0x420] sm:$0xff]
    %v238 = vld [vmem:[#allocation6 + $0x428] sm:$0xff]
    %v239 = vld [vmem:[#allocation6 + $0x430] sm:$0xff]
    %v240 = vld [vmem:[#allocation6 + $0x438] sm:$0xff]
    %v241 = vld [vmem:[#allocation6 + $0x440] sm:$0xff]
    %v242 = vld [vmem:[#allocation6 + $0x448] sm:$0xff]
    %v243 = vld [vmem:[#allocation6 + $0x450] sm:$0xff]
    %v244 = vld [vmem:[#allocation6 + $0x458] sm:$0xff]
    %v245 = vld [vmem:[#allocation6 + $0x460] sm:$0xff]
    %v246 = vld [vmem:[#allocation6 + $0x468] sm:$0xff]
    %v247 = vld [vmem:[#allocation6 + $0x470] sm:$0xff]
    %v248 = vld [vmem:[#allocation6 + $0x478] sm:$0xff]
    %v249 = vld [vmem:[#allocation6 + $0x480] sm:$0xff]
    %v250 = vld [vmem:[#allocation6 + $0x488] sm:$0xff]
    %v251 = vld [vmem:[#allocation6 + $0x490] sm:$0xff]
    %v252 = vld [vmem:[#allocation6 + $0x498] sm:$0xff]
    %v253 = vld [vmem:[#allocation6 + $0x4a0] sm:$0xff]
    %v254 = vld [vmem:[#allocation6 + $0x4a8] sm:$0xff]
    %v255 = vld [vmem:[#allocation6 + $0x4b0] sm:$0xff]
    %v256 = vld [vmem:[#allocation6 + $0x4b8] sm:$0xff]
    %v257 = vld [vmem:[#allocation6 + $0x4c0] sm:$0xff]
    %v258 = vld [vmem:[#allocation6 + $0x4c8] sm:$0xff]
    %v259 = vld [vmem:[#allocation6 + $0x4d0] sm:$0xff]
    %v260 = vld [vmem:[#allocation6 + $0x4d8] sm:$0xff]
    %v261 = vld [vmem:[#allocation6 + $0x4e0] sm:$0xff]
    %v262 = vld [vmem:[#allocation6 + $0x4e8] sm:$0xff]
    %v263 = vld [vmem:[#allocation6 + $0x4f0] sm:$0xff]
    %v264 = vld [vmem:[#allocation6 + $0x4f8] sm:$0xff]
    %v265 = vld [vmem:[#allocation6 + $0x500] sm:$0xff]
    %v266 = vld [vmem:[#allocation6 + $0x508] sm:$0xff]
    %v267 = vld [vmem:[#allocation6 + $0x510] sm:$0xff]
    %v268 = vld [vmem:[#allocation6 + $0x518] sm:$0xff]
    %v269 = vld [vmem:[#allocation6 + $0x520] sm:$0xff]
    %v270 = vld [vmem:[#allocation6 + $0x528] sm:$0xff]
    %v271 = vld [vmem:[#allocation6 + $0x530] sm:$0xff]
    %v272 = vld [vmem:[#allocation6 + $0x538] sm:$0xff]
    %v273 = vld [vmem:[#allocation6 + $0x540] sm:$0xff]
    %v274 = vld [vmem:[#allocation6 + $0x548] sm:$0xff]
    %v275 = vld [vmem:[#allocation6 + $0x550] sm:$0xff]
    %v276 = vld [vmem:[#allocation6 + $0x558] sm:$0xff]
    %v277 = vld [vmem:[#allocation6 + $0x560] sm:$0xff]
    %v278 = vld [vmem:[#allocation6 + $0x568] sm:$0xff]
    %v279 = vld [vmem:[#allocation6 + $0x570] sm:$0xff]
    %v280 = vld [vmem:[#allocation6 + $0x578] sm:$0xff]
    %v281 = vld [vmem:[#allocation6 + $0x580] sm:$0xff]
    %v282 = vld [vmem:[#allocation6 + $0x588] sm:$0xff]
    %v283 = vld [vmem:[#allocation6 + $0x590] sm:$0xff]
    %v284 = vld [vmem:[#allocation6 + $0x598] sm:$0xff]
    %v285 = vld [vmem:[#allocation6 + $0x5a0] sm:$0xff]
    %v286 = vld [vmem:[#allocation6 + $0x5a8] sm:$0xff]
    %v287 = vld [vmem:[#allocation6 + $0x5b0] sm:$0xff]
    %v288 = vld [vmem:[#allocation6 + $0x5b8] sm:$0xff]
    %v289 = vld [vmem:[#allocation6 + $0x5c0] sm:$0xff]
    %v290 = vld [vmem:[#allocation6 + $0x5c8] sm:$0xff]
    %v291 = vld [vmem:[#allocation6 + $0x5d0] sm:$0xff]
    %v292 = vld [vmem:[#allocation6 + $0x5d8] sm:$0xff]
    %v293 = vld [vmem:[#allocation6 + $0x5e0] sm:$0xff]
    %v294 = vld [vmem:[#allocation6 + $0x5e8] sm:$0xff]
    %v295 = vld [vmem:[#allocation6 + $0x5f0] sm:$0xff]
    %v296 = vld [vmem:[#allocation6 + $0x5f8] sm:$0xff]
    %v297 = vld [vmem:[#allocation6 + $0x600] sm:$0xff]
    %v298 = vld [vmem:[#allocation6 + $0x608] sm:$0xff]
    %v299 = vld [vmem:[#allocation6 + $0x610] sm:$0xff]
    %v300 = vld [vmem:[#allocation6 + $0x618] sm:$0xff]
    %v301 = vld [vmem:[#allocation6 + $0x620] sm:$0xff]
    %v302 = vld [vmem:[#allocation6 + $0x628] sm:$0xff]
    %v303 = vld [vmem:[#allocation6 + $0x630] sm:$0xff]
    %v304 = vld [vmem:[#allocation6 + $0x638] sm:$0xff]
    %v305 = vld [vmem:[#allocation6 + $0x640] sm:$0xff]
    %v306 = vld [vmem:[#allocation6 + $0x648] sm:$0xff]
    %v307 = vld [vmem:[#allocation6 + $0x650] sm:$0xff]
    %v308 = vld [vmem:[#allocation6 + $0x658] sm:$0xff]
    %v309 = vld [vmem:[#allocation6 + $0x660] sm:$0xff]
    %v310 = vld [vmem:[#allocation6 + $0x668] sm:$0xff]
    %v311 = vld [vmem:[#allocation6 + $0x670] sm:$0xff]
    %v312 = vld [vmem:[#allocation6 + $0x678] sm:$0xff]
    %v313 = vld [vmem:[#allocation6 + $0x680] sm:$0xff]
    %v314 = vld [vmem:[#allocation6 + $0x688] sm:$0xff]
    %v315 = vld [vmem:[#allocation6 + $0x690] sm:$0xff]
    %v316 = vld [vmem:[#allocation6 + $0x698] sm:$0xff]
    %v317 = vld [vmem:[#allocation6 + $0x6a0] sm:$0xff]
    %v318 = vld [vmem:[#allocation6 + $0x6a8] sm:$0xff]
    %v319 = vld [vmem:[#allocation6 + $0x6b0] sm:$0xff]
    %v320 = vld [vmem:[#allocation6 + $0x6b8] sm:$0xff]
    %v321 = vld [vmem:[#allocation6 + $0x6c0] sm:$0xff]
    %v322 = vld [vmem:[#allocation6 + $0x6c8] sm:$0xff]
    %v323 = vld [vmem:[#allocation6 + $0x6d0] sm:$0xff]
    %v324 = vld [vmem:[#allocation6 + $0x6d8] sm:$0xff]
    %v325 = vld [vmem:[#allocation6 + $0x6e0] sm:$0xff]
    %v326 = vld [vmem:[#allocation6 + $0x6e8] sm:$0xff]
    %v327 = vld [vmem:[#allocation6 + $0x6f0] sm:$0xff]
    %v328 = vld [vmem:[#allocation6 + $0x6f8] sm:$0xff]
    %v329 = vld [vmem:[#allocation6 + $0x700] sm:$0xff]
    %v330 = vld [vmem:[#allocation6 + $0x708] sm:$0xff]
    %v331 = vld [vmem:[#allocation6 + $0x710] sm:$0xff]
    %v332 = vld [vmem:[#allocation6 + $0x718] sm:$0xff]
    %v333 = vld [vmem:[#allocation6 + $0x720] sm:$0xff]
    %v334 = vld [vmem:[#allocation6 + $0x728] sm:$0xff]
    %v335 = vld [vmem:[#allocation6 + $0x730] sm:$0xff]
    %v336 = vld [vmem:[#allocation6 + $0x738] sm:$0xff]
    %v337 = vld [vmem:[#allocation6 + $0x740] sm:$0xff]
    %v338 = vld [vmem:[#allocation6 + $0x748] sm:$0xff]
    %v339 = vld [vmem:[#allocation6 + $0x750] sm:$0xff]
    %v340 = vld [vmem:[#allocation6 + $0x758] sm:$0xff]
    %v341 = vld [vmem:[#allocation6 + $0x760] sm:$0xff]
    %v342 = vld [vmem:[#allocation6 + $0x768] sm:$0xff]
    %v343 = vld [vmem:[#allocation6 + $0x770] sm:$0xff]
    %v344 = vld [vmem:[#allocation6 + $0x778] sm:$0xff]
    %v345 = vld [vmem:[#allocation6 + $0x780] sm:$0xff]
    %v346 = vld [vmem:[#allocation6 + $0x788] sm:$0xff]
    %v347 = vld [vmem:[#allocation6 + $0x790] sm:$0xff]
    %v348 = vld [vmem:[#allocation6 + $0x798] sm:$0xff]
    %v349 = vld [vmem:[#allocation6 + $0x7a0] sm:$0xff]
    %v350 = vld [vmem:[#allocation6 + $0x7a8] sm:$0xff]
    %v351 = vld [vmem:[#allocation6 + $0x7b0] sm:$0xff]
    %v352 = vld [vmem:[#allocation6 + $0x7b8] sm:$0xff]
    %v353 = vld [vmem:[#allocation6 + $0x7c0] sm:$0xff]
    %v354 = vld [vmem:[#allocation6 + $0x7c8] sm:$0xff]
    %v355 = vld [vmem:[#allocation6 + $0x7d0] sm:$0xff]
    %v356 = vld [vmem:[#allocation6 + $0x7d8] sm:$0xff]
    %v357 = vld [vmem:[#allocation6 + $0x7e0] sm:$0xff]
    %v358 = vld [vmem:[#allocation6 + $0x7e8] sm:$0xff]
    %v359 = vld [vmem:[#allocation6 + $0x7f0] sm:$0xff]
    %v360 = vld [vmem:[#allocation6 + $0x7f8] sm:$0xff]
    %v361 = vld [vmem:[#allocation6 + $0x800] sm:$0xff]
    %v362 = vld [vmem:[#allocation6 + $0x808] sm:$0xff]
    %v363 = vld [vmem:[#allocation6 + $0x810] sm:$0xff]
    %v364 = vld [vmem:[#allocation6 + $0x818] sm:$0xff]
    %v365 = vld [vmem:[#allocation6 + $0x820] sm:$0xff]
    %v366 = vld [vmem:[#allocation6 + $0x828] sm:$0xff]
    %v367 = vld [vmem:[#allocation6 + $0x830] sm:$0xff]
    %v368 = vld [vmem:[#allocation6 + $0x838] sm:$0xff]
    %v369 = vld [vmem:[#allocation6 + $0x840] sm:$0xff]
    %v370 = vld [vmem:[#allocation6 + $0x848] sm:$0xff]
    %v371 = vld [vmem:[#allocation6 + $0x850] sm:$0xff]
    %v372 = vld [vmem:[#allocation6 + $0x858] sm:$0xff]
    %v373 = vld [vmem:[#allocation6 + $0x860] sm:$0xff]
    %v374 = vld [vmem:[#allocation6 + $0x868] sm:$0xff]
    %v375 = vld [vmem:[#allocation6 + $0x870] sm:$0xff]
    %v376 = vld [vmem:[#allocation6 + $0x878] sm:$0xff]
    %v377 = vld [vmem:[#allocation6 + $0x880] sm:$0xff]
    %v378 = vld [vmem:[#allocation6 + $0x888] sm:$0xff]
    %v379 = vld [vmem:[#allocation6 + $0x890] sm:$0xff]
    %v380 = vld [vmem:[#allocation6 + $0x898] sm:$0xff]
    %v381 = vld [vmem:[#allocation6 + $0x8a0] sm:$0xff]
    %v382 = vld [vmem:[#allocation6 + $0x8a8] sm:$0xff]
    %v383 = vld [vmem:[#allocation6 + $0x8b0] sm:$0xff]
    %v384 = vld [vmem:[#allocation6 + $0x8b8] sm:$0xff]
    %v385 = vld [vmem:[#allocation6 + $0x8c0] sm:$0xff]
    %v386 = vld [vmem:[#allocation6 + $0x8c8] sm:$0xff]
    %v387 = vld [vmem:[#allocation6 + $0x8d0] sm:$0xff]
    %v388 = vld [vmem:[#allocation6 + $0x8d8] sm:$0xff]
    %v389 = vld [vmem:[#allocation6 + $0x8e0] sm:$0xff]
    %v390 = vld [vmem:[#allocation6 + $0x8e8] sm:$0xff]
    %v391 = vld [vmem:[#allocation6 + $0x8f0] sm:$0xff]
    %v392 = vld [vmem:[#allocation6 + $0x8f8] sm:$0xff]
    %v393 = vld [vmem:[#allocation8] sm:$0xff]
    %v394 = vld [vmem:[#allocation8 + $0x8] sm:$0xf]
    %v397 = vlaneseq
    %v398 = vshrl.u32 %v397, 7
    %v399 = vsub.s32 0, %v398
    %v400 = vrot.slane %v393, %v399
    %v401 = vlaneseq
    %v402 = vshrl.u32 %v401, 7
    %v403 = vsub.s32 1, %v402
    %v404 = vrot.slane %v393, %v403
    %v405 = vlaneseq
    %v406 = vshrl.u32 %v405, 7
    %v407 = vsub.s32 2, %v406
    %v408 = vrot.slane %v393, %v407
    %v409 = vlaneseq
    %v410 = vshrl.u32 %v409, 7
    %v411 = vsub.s32 3, %v410
    %v412 = vrot.slane %v393, %v411
    %v413 = vlaneseq
    %v414 = vshrl.u32 %v413, 7
    %v415 = vsub.s32 4, %v414
    %v416 = vrot.slane %v393, %v415
    %v417 = vlaneseq
    %v418 = vshrl.u32 %v417, 7
    %v419 = vsub.s32 5, %v418
    %v420 = vrot.slane %v393, %v419
    %v421 = vlaneseq
    %v422 = vshrl.u32 %v421, 7
    %v423 = vsub.s32 6, %v422
    %v424 = vrot.slane %v393, %v423
    %v425 = vlaneseq
    %v426 = vshrl.u32 %v425, 7
    %v427 = vsub.s32 7, %v426
    %v428 = vrot.slane %v393, %v427
    %v429 = vlaneseq
    %v430 = vshrl.u32 %v429, 7
    %v431 = vsub.s32 0, %v430
    %v432 = vrot.slane %v394, %v431
    %v433 = vlaneseq
    %v434 = vshrl.u32 %v433, 7
    %v435 = vsub.s32 1, %v434
    %v436 = vrot.slane %v394, %v435
    %v437 = vlaneseq
    %v438 = vshrl.u32 %v437, 7
    %v439 = vsub.s32 2, %v438
    %v440 = vrot.slane %v394, %v439
    %v441 = vlaneseq
    %v442 = vshrl.u32 %v441, 7
    %v443 = vsub.s32 3, %v442
    %v444 = vrot.slane %v394, %v443
    %v745 = vunpack.c.l.b16 %v105
    %v746 = vunpack.c.h.b16 %v105
    %v747 = vunpack.c.l.b16 %v106
    %v748 = vunpack.c.h.b16 %v106
    %v749 = vunpack.c.l.b16 %v107
    %v750 = vunpack.c.h.b16 %v107
    %v751 = vunpack.c.l.b16 %v108
    %v752 = vunpack.c.h.b16 %v108
    %v753 = vunpack.c.l.b16 %v109
    %v754 = vunpack.c.h.b16 %v109
    %v755 = vunpack.c.l.b16 %v110
    %v756 = vunpack.c.h.b16 %v110
    %v757 = vunpack.c.l.b16 %v111
    %v758 = vunpack.c.h.b16 %v111
    %v759 = vunpack.c.l.b16 %v112
    %v760 = vunpack.c.h.b16 %v112
    %v761 = vunpack.c.l.b16 %v113
    %v762 = vunpack.c.h.b16 %v113
    %v763 = vunpack.c.l.b16 %v114
    %v764 = vunpack.c.h.b16 %v114
    %v765 = vunpack.c.l.b16 %v115
    %v766 = vunpack.c.h.b16 %v115
    %v767 = vunpack.c.l.b16 %v116
    %v768 = vunpack.c.h.b16 %v116
    %v769 = vunpack.c.l.b16 %v117
    %v770 = vunpack.c.h.b16 %v117
    %v771 = vunpack.c.l.b16 %v118
    %v772 = vunpack.c.h.b16 %v118
    %v773 = vunpack.c.l.b16 %v119
    %v774 = vunpack.c.h.b16 %v119
    %v775 = vunpack.c.l.b16 %v120
    %v776 = vunpack.c.h.b16 %v120
    %v777 = vunpack.c.l.b16 %v121
    %v778 = vunpack.c.h.b16 %v121
    %v779 = vunpack.c.l.b16 %v122
    %v780 = vunpack.c.h.b16 %v122
    %v781 = vunpack.c.l.b16 %v123
    %v782 = vunpack.c.h.b16 %v123
    %v783 = vunpack.c.l.b16 %v124
    %v784 = vunpack.c.h.b16 %v124
    %v785 = vunpack.c.l.b16 %v125
    %v786 = vunpack.c.h.b16 %v125
    %v787 = vunpack.c.l.b16 %v126
    %v788 = vunpack.c.h.b16 %v126
    %v789 = vunpack.c.l.b16 %v127
    %v790 = vunpack.c.h.b16 %v127
    %v791 = vunpack.c.l.b16 %v128
    %v792 = vunpack.c.h.b16 %v128
    %v793 = vunpack.c.l.b16 %v129
    %v794 = vunpack.c.h.b16 %v129
    %v795 = vunpack.c.l.b16 %v130
    %v796 = vunpack.c.h.b16 %v130
    %v797 = vunpack.c.l.b16 %v131
    %v798 = vunpack.c.h.b16 %v131
    %v799 = vunpack.c.l.b16 %v132
    %v800 = vunpack.c.h.b16 %v132
    %v801 = vunpack.c.l.b16 %v133
    %v802 = vunpack.c.h.b16 %v133
    %v803 = vunpack.c.l.b16 %v134
    %v804 = vunpack.c.h.b16 %v134
    %v805 = vunpack.c.l.b16 %v135
    %v806 = vunpack.c.h.b16 %v135
    %v807 = vunpack.c.l.b16 %v136
    %v808 = vunpack.c.h.b16 %v136
    %v809 = vunpack.c.l.b16 %v137
    %v810 = vunpack.c.h.b16 %v137
    %v811 = vunpack.c.l.b16 %v138
    %v812 = vunpack.c.h.b16 %v138
    %v813 = vunpack.c.l.b16 %v139
    %v814 = vunpack.c.h.b16 %v139
    %v815 = vunpack.c.l.b16 %v140
    %v816 = vunpack.c.h.b16 %v140
    %v817 = vunpack.c.l.b16 %v141
    %v818 = vunpack.c.h.b16 %v141
    %v819 = vunpack.c.l.b16 %v142
    %v820 = vunpack.c.h.b16 %v142
    %v821 = vunpack.c.l.b16 %v143
    %v822 = vunpack.c.h.b16 %v143
    %v823 = vunpack.c.l.b16 %v144
    %v824 = vunpack.c.h.b16 %v144
    %v825 = vunpack.c.l.b16 %v145
    %v826 = vunpack.c.h.b16 %v145
    %v827 = vunpack.c.l.b16 %v146
    %v828 = vunpack.c.h.b16 %v146
    %v829 = vunpack.c.l.b16 %v147
    %v830 = vunpack.c.h.b16 %v147
    %v831 = vunpack.c.l.b16 %v148
    %v832 = vunpack.c.h.b16 %v148
    %v833 = vunpack.c.l.b16 %v149
    %v834 = vunpack.c.h.b16 %v149
    %v835 = vunpack.c.l.b16 %v150
    %v836 = vunpack.c.h.b16 %v150
    %v837 = vunpack.c.l.b16 %v151
    %v838 = vunpack.c.h.b16 %v151
    %v839 = vunpack.c.l.b16 %v152
    %v840 = vunpack.c.h.b16 %v152
    %v841 = vunpack.c.l.b16 %v153
    %v842 = vunpack.c.h.b16 %v153
    %v843 = vunpack.c.l.b16 %v154
    %v844 = vunpack.c.h.b16 %v154
    %v845 = vunpack.c.l.b16 %v155
    %v846 = vunpack.c.h.b16 %v155
    %v847 = vunpack.c.l.b16 %v156
    %v848 = vunpack.c.h.b16 %v156
    %v849 = vunpack.c.l.b16 %v157
    %v850 = vunpack.c.h.b16 %v157
    %v851 = vunpack.c.l.b16 %v158
    %v852 = vunpack.c.h.b16 %v158
    %v853 = vunpack.c.l.b16 %v159
    %v854 = vunpack.c.h.b16 %v159
    %v855 = vunpack.c.l.b16 %v160
    %v856 = vunpack.c.h.b16 %v160
    %v857 = vunpack.c.l.b16 %v161
    %v858 = vunpack.c.h.b16 %v161
    %v859 = vunpack.c.l.b16 %v162
    %v860 = vunpack.c.h.b16 %v162
    %v861 = vunpack.c.l.b16 %v163
    %v862 = vunpack.c.h.b16 %v163
    %v863 = vunpack.c.l.b16 %v164
    %v864 = vunpack.c.h.b16 %v164
    %v865 = vunpack.c.l.b16 %v165
    %v866 = vunpack.c.h.b16 %v165
    %v867 = vunpack.c.l.b16 %v166
    %v868 = vunpack.c.h.b16 %v166
    %v869 = vunpack.c.l.b16 %v167
    %v870 = vunpack.c.h.b16 %v167
    %v871 = vunpack.c.l.b16 %v168
    %v872 = vunpack.c.h.b16 %v168
    %v873 = vunpack.c.l.b16 %v169
    %v874 = vunpack.c.h.b16 %v169
    %v875 = vunpack.c.l.b16 %v170
    %v876 = vunpack.c.h.b16 %v170
    %v877 = vunpack.c.l.b16 %v171
    %v878 = vunpack.c.h.b16 %v171
    %v879 = vunpack.c.l.b16 %v172
    %v880 = vunpack.c.h.b16 %v172
    %v881 = vunpack.c.l.b16 %v173
    %v882 = vunpack.c.h.b16 %v173
    %v883 = vunpack.c.l.b16 %v174
    %v884 = vunpack.c.h.b16 %v174
    %v885 = vunpack.c.l.b16 %v175
    %v886 = vunpack.c.h.b16 %v175
    %v887 = vunpack.c.l.b16 %v176
    %v888 = vunpack.c.h.b16 %v176
    %v889 = vunpack.c.l.b16 %v177
    %v890 = vunpack.c.h.b16 %v177
    %v891 = vunpack.c.l.b16 %v178
    %v892 = vunpack.c.h.b16 %v178
    %v893 = vunpack.c.l.b16 %v179
    %v894 = vunpack.c.h.b16 %v179
    %v895 = vunpack.c.l.b16 %v180
    %v896 = vunpack.c.h.b16 %v180
    %v897 = vunpack.c.l.b16 %v181
    %v898 = vunpack.c.h.b16 %v181
    %v899 = vunpack.c.l.b16 %v182
    %v900 = vunpack.c.h.b16 %v182
    %v901 = vunpack.c.l.b16 %v183
    %v902 = vunpack.c.h.b16 %v183
    %v903 = vunpack.c.l.b16 %v184
    %v904 = vunpack.c.h.b16 %v184
    %v905 = vunpack.c.l.b16 %v185
    %v906 = vunpack.c.h.b16 %v185
    %v907 = vunpack.c.l.b16 %v186
    %v908 = vunpack.c.h.b16 %v186
    %v909 = vunpack.c.l.b16 %v187
    %v910 = vunpack.c.h.b16 %v187
    %v911 = vunpack.c.l.b16 %v188
    %v912 = vunpack.c.h.b16 %v188
    %v913 = vunpack.c.l.b16 %v189
    %v914 = vunpack.c.h.b16 %v189
    %v915 = vunpack.c.l.b16 %v190
    %v916 = vunpack.c.h.b16 %v190
    %v917 = vunpack.c.l.b16 %v191
    %v918 = vunpack.c.h.b16 %v191
    %v919 = vunpack.c.l.b16 %v192
    %v920 = vunpack.c.h.b16 %v192
    %v921 = vunpack.c.l.b16 %v193
    %v922 = vunpack.c.h.b16 %v193
    %v923 = vunpack.c.l.b16 %v194
    %v924 = vunpack.c.h.b16 %v194
    %v925 = vunpack.c.l.b16 %v195
    %v926 = vunpack.c.h.b16 %v195
    %v927 = vunpack.c.l.b16 %v196
    %v928 = vunpack.c.h.b16 %v196
    %v929 = vunpack.c.l.b16 %v197
    %v930 = vunpack.c.h.b16 %v197
    %v931 = vunpack.c.l.b16 %v198
    %v932 = vunpack.c.h.b16 %v198
    %v933 = vunpack.c.l.b16 %v199
    %v934 = vunpack.c.h.b16 %v199
    %v935 = vunpack.c.l.b16 %v200
    %v936 = vunpack.c.h.b16 %v200
    %v937 = vunpack.c.l.b16 %v201
    %v938 = vunpack.c.h.b16 %v201
    %v939 = vunpack.c.l.b16 %v202
    %v940 = vunpack.c.h.b16 %v202
    %v941 = vunpack.c.l.b16 %v203
    %v942 = vunpack.c.h.b16 %v203
    %v943 = vunpack.c.l.b16 %v204
    %v944 = vunpack.c.h.b16 %v204
    %v945 = vunpack.c.l.b16 %v205
    %v946 = vunpack.c.h.b16 %v205
    %v947 = vunpack.c.l.b16 %v206
    %v948 = vunpack.c.h.b16 %v206
    %v949 = vunpack.c.l.b16 %v207
    %v950 = vunpack.c.h.b16 %v207
    %v951 = vunpack.c.l.b16 %v208
    %v952 = vunpack.c.h.b16 %v208
    %v953 = vunpack.c.l.b16 %v209
    %v954 = vunpack.c.h.b16 %v209
    %v955 = vunpack.c.l.b16 %v210
    %v956 = vunpack.c.h.b16 %v210
    %v957 = vunpack.c.l.b16 %v211
    %v958 = vunpack.c.h.b16 %v211
    %v959 = vunpack.c.l.b16 %v212
    %v960 = vunpack.c.h.b16 %v212
    %v961 = vunpack.c.l.b16 %v213
    %v962 = vunpack.c.h.b16 %v213
    %v963 = vunpack.c.l.b16 %v214
    %v964 = vunpack.c.h.b16 %v214
    %v965 = vunpack.c.l.b16 %v215
    %v966 = vunpack.c.h.b16 %v215
    %v967 = vunpack.c.l.b16 %v216
    %v968 = vunpack.c.h.b16 %v216
    %v969 = vunpack.c.l.b16 %v217
    %v970 = vunpack.c.h.b16 %v217
    %v971 = vunpack.c.l.b16 %v218
    %v972 = vunpack.c.h.b16 %v218
    %v973 = vunpack.c.l.b16 %v219
    %v974 = vunpack.c.h.b16 %v219
    %v975 = vunpack.c.l.b16 %v220
    %v976 = vunpack.c.h.b16 %v220
    %v977 = vunpack.c.l.b16 %v221
    %v978 = vunpack.c.h.b16 %v221
    %v979 = vunpack.c.l.b16 %v222
    %v980 = vunpack.c.h.b16 %v222
    %v981 = vunpack.c.l.b16 %v223
    %v982 = vunpack.c.h.b16 %v223
    %v983 = vunpack.c.l.b16 %v224
    %v984 = vunpack.c.h.b16 %v224
    %v985 = vunpack.c.l.b16 %v225
    %v986 = vunpack.c.h.b16 %v225
    %v987 = vunpack.c.l.b16 %v226
    %v988 = vunpack.c.h.b16 %v226
    %v989 = vunpack.c.l.b16 %v227
    %v990 = vunpack.c.h.b16 %v227
    %v991 = vunpack.c.l.b16 %v228
    %v992 = vunpack.c.h.b16 %v228
    %v993 = vunpack.c.l.b16 %v229
    %v994 = vunpack.c.h.b16 %v229
    %v995 = vunpack.c.l.b16 %v230
    %v996 = vunpack.c.h.b16 %v230
    %v997 = vunpack.c.l.b16 %v231
    %v998 = vunpack.c.h.b16 %v231
    %v999 = vunpack.c.l.b16 %v232
    %v1000 = vunpack.c.h.b16 %v232
    %v1001 = vunpack.c.l.b16 %v233
    %v1002 = vunpack.c.h.b16 %v233
    %v1003 = vunpack.c.l.b16 %v234
    %v1004 = vunpack.c.h.b16 %v234
    %v1005 = vunpack.c.l.b16 %v235
    %v1006 = vunpack.c.h.b16 %v235
    %v1007 = vunpack.c.l.b16 %v236
    %v1008 = vunpack.c.h.b16 %v236
    %v1009 = vunpack.c.l.b16 %v237
    %v1010 = vunpack.c.h.b16 %v237
    %v1011 = vunpack.c.l.b16 %v238
    %v1012 = vunpack.c.h.b16 %v238
    %v1013 = vunpack.c.l.b16 %v239
    %v1014 = vunpack.c.h.b16 %v239
    %v1015 = vunpack.c.l.b16 %v240
    %v1016 = vunpack.c.h.b16 %v240
    %v1017 = vunpack.c.l.b16 %v241
    %v1018 = vunpack.c.h.b16 %v241
    %v1019 = vunpack.c.l.b16 %v242
    %v1020 = vunpack.c.h.b16 %v242
    %v1021 = vunpack.c.l.b16 %v243
    %v1022 = vunpack.c.h.b16 %v243
    %v1023 = vunpack.c.l.b16 %v244
    %v1024 = vunpack.c.h.b16 %v244
    %v1025 = vunpack.c.l.b16 %v245
    %v1026 = vunpack.c.h.b16 %v245
    %v1027 = vunpack.c.l.b16 %v246
    %v1028 = vunpack.c.h.b16 %v246
    %v1029 = vunpack.c.l.b16 %v247
    %v1030 = vunpack.c.h.b16 %v247
    %v1031 = vunpack.c.l.b16 %v248
    %v1032 = vunpack.c.h.b16 %v248
    %v1033 = vunpack.c.l.b16 %v249
    %v1034 = vunpack.c.h.b16 %v249
    %v1035 = vunpack.c.l.b16 %v250
    %v1036 = vunpack.c.h.b16 %v250
    %v1037 = vunpack.c.l.b16 %v251
    %v1038 = vunpack.c.h.b16 %v251
    %v1039 = vunpack.c.l.b16 %v252
    %v1040 = vunpack.c.h.b16 %v252
    %v1041 = vunpack.c.l.b16 %v253
    %v1042 = vunpack.c.h.b16 %v253
    %v1043 = vunpack.c.l.b16 %v254
    %v1044 = vunpack.c.h.b16 %v254
    %v1045 = vunpack.c.l.b16 %v255
    %v1046 = vunpack.c.h.b16 %v255
    %v1047 = vunpack.c.l.b16 %v256
    %v1048 = vunpack.c.h.b16 %v256
    %v1049 = vunpack.c.l.b16 %v257
    %v1050 = vunpack.c.h.b16 %v257
    %v1051 = vunpack.c.l.b16 %v258
    %v1052 = vunpack.c.h.b16 %v258
    %v1053 = vunpack.c.l.b16 %v259
    %v1054 = vunpack.c.h.b16 %v259
    %v1055 = vunpack.c.l.b16 %v260
    %v1056 = vunpack.c.h.b16 %v260
    %v1057 = vunpack.c.l.b16 %v261
    %v1058 = vunpack.c.h.b16 %v261
    %v1059 = vunpack.c.l.b16 %v262
    %v1060 = vunpack.c.h.b16 %v262
    %v1061 = vunpack.c.l.b16 %v263
    %v1062 = vunpack.c.h.b16 %v263
    %v1063 = vunpack.c.l.b16 %v264
    %v1064 = vunpack.c.h.b16 %v264
    %v1065 = vunpack.c.l.b16 %v265
    %v1066 = vunpack.c.h.b16 %v265
    %v1067 = vunpack.c.l.b16 %v266
    %v1068 = vunpack.c.h.b16 %v266
    %v1069 = vunpack.c.l.b16 %v267
    %v1070 = vunpack.c.h.b16 %v267
    %v1071 = vunpack.c.l.b16 %v268
    %v1072 = vunpack.c.h.b16 %v268
    %v1073 = vunpack.c.l.b16 %v269
    %v1074 = vunpack.c.h.b16 %v269
    %v1075 = vunpack.c.l.b16 %v270
    %v1076 = vunpack.c.h.b16 %v270
    %v1077 = vunpack.c.l.b16 %v271
    %v1078 = vunpack.c.h.b16 %v271
    %v1079 = vunpack.c.l.b16 %v272
    %v1080 = vunpack.c.h.b16 %v272
    %v1081 = vunpack.c.l.b16 %v273
    %v1082 = vunpack.c.h.b16 %v273
    %v1083 = vunpack.c.l.b16 %v274
    %v1084 = vunpack.c.h.b16 %v274
    %v1085 = vunpack.c.l.b16 %v275
    %v1086 = vunpack.c.h.b16 %v275
    %v1087 = vunpack.c.l.b16 %v276
    %v1088 = vunpack.c.h.b16 %v276
    %v1089 = vunpack.c.l.b16 %v277
    %v1090 = vunpack.c.h.b16 %v277
    %v1091 = vunpack.c.l.b16 %v278
    %v1092 = vunpack.c.h.b16 %v278
    %v1093 = vunpack.c.l.b16 %v279
    %v1094 = vunpack.c.h.b16 %v279
    %v1095 = vunpack.c.l.b16 %v280
    %v1096 = vunpack.c.h.b16 %v280
    %v1097 = vunpack.c.l.b16 %v281
    %v1098 = vunpack.c.h.b16 %v281
    %v1099 = vunpack.c.l.b16 %v282
    %v1100 = vunpack.c.h.b16 %v282
    %v1101 = vunpack.c.l.b16 %v283
    %v1102 = vunpack.c.h.b16 %v283
    %v1103 = vunpack.c.l.b16 %v284
    %v1104 = vunpack.c.h.b16 %v284
    %v1105 = vunpack.c.l.b16 %v285
    %v1106 = vunpack.c.h.b16 %v285
    %v1107 = vunpack.c.l.b16 %v286
    %v1108 = vunpack.c.h.b16 %v286
    %v1109 = vunpack.c.l.b16 %v287
    %v1110 = vunpack.c.h.b16 %v287
    %v1111 = vunpack.c.l.b16 %v288
    %v1112 = vunpack.c.h.b16 %v288
    %v1113 = vunpack.c.l.b16 %v289
    %v1114 = vunpack.c.h.b16 %v289
    %v1115 = vunpack.c.l.b16 %v290
    %v1116 = vunpack.c.h.b16 %v290
    %v1117 = vunpack.c.l.b16 %v291
    %v1118 = vunpack.c.h.b16 %v291
    %v1119 = vunpack.c.l.b16 %v292
    %v1120 = vunpack.c.h.b16 %v292
    %v1121 = vunpack.c.l.b16 %v293
    %v1122 = vunpack.c.h.b16 %v293
    %v1123 = vunpack.c.l.b16 %v294
    %v1124 = vunpack.c.h.b16 %v294
    %v1125 = vunpack.c.l.b16 %v295
    %v1126 = vunpack.c.h.b16 %v295
    %v1127 = vunpack.c.l.b16 %v296
    %v1128 = vunpack.c.h.b16 %v296
    %v1129 = vunpack.c.l.b16 %v297
    %v1130 = vunpack.c.h.b16 %v297
    %v1131 = vunpack.c.l.b16 %v298
    %v1132 = vunpack.c.h.b16 %v298
    %v1133 = vunpack.c.l.b16 %v299
    %v1134 = vunpack.c.h.b16 %v299
    %v1135 = vunpack.c.l.b16 %v300
    %v1136 = vunpack.c.h.b16 %v300
    %v1137 = vunpack.c.l.b16 %v301
    %v1138 = vunpack.c.h.b16 %v301
    %v1139 = vunpack.c.l.b16 %v302
    %v1140 = vunpack.c.h.b16 %v302
    %v1141 = vunpack.c.l.b16 %v303
    %v1142 = vunpack.c.h.b16 %v303
    %v1143 = vunpack.c.l.b16 %v304
    %v1144 = vunpack.c.h.b16 %v304
    %v1145 = vunpack.c.l.b16 %v305
    %v1146 = vunpack.c.h.b16 %v305
    %v1147 = vunpack.c.l.b16 %v306
    %v1148 = vunpack.c.h.b16 %v306
    %v1149 = vunpack.c.l.b16 %v307
    %v1150 = vunpack.c.h.b16 %v307
    %v1151 = vunpack.c.l.b16 %v308
    %v1152 = vunpack.c.h.b16 %v308
    %v1153 = vunpack.c.l.b16 %v309
    %v1154 = vunpack.c.h.b16 %v309
    %v1155 = vunpack.c.l.b16 %v310
    %v1156 = vunpack.c.h.b16 %v310
    %v1157 = vunpack.c.l.b16 %v311
    %v1158 = vunpack.c.h.b16 %v311
    %v1159 = vunpack.c.l.b16 %v312
    %v1160 = vunpack.c.h.b16 %v312
    %v1161 = vunpack.c.l.b16 %v313
    %v1162 = vunpack.c.h.b16 %v313
    %v1163 = vunpack.c.l.b16 %v314
    %v1164 = vunpack.c.h.b16 %v314
    %v1165 = vunpack.c.l.b16 %v315
    %v1166 = vunpack.c.h.b16 %v315
    %v1167 = vunpack.c.l.b16 %v316
    %v1168 = vunpack.c.h.b16 %v316
    %v1169 = vunpack.c.l.b16 %v317
    %v1170 = vunpack.c.h.b16 %v317
    %v1171 = vunpack.c.l.b16 %v318
    %v1172 = vunpack.c.h.b16 %v318
    %v1173 = vunpack.c.l.b16 %v319
    %v1174 = vunpack.c.h.b16 %v319
    %v1175 = vunpack.c.l.b16 %v320
    %v1176 = vunpack.c.h.b16 %v320
    %v1177 = vunpack.c.l.b16 %v321
    %v1178 = vunpack.c.h.b16 %v321
    %v1179 = vunpack.c.l.b16 %v322
    %v1180 = vunpack.c.h.b16 %v322
    %v1181 = vunpack.c.l.b16 %v323
    %v1182 = vunpack.c.h.b16 %v323
    %v1183 = vunpack.c.l.b16 %v324
    %v1184 = vunpack.c.h.b16 %v324
    %v1185 = vunpack.c.l.b16 %v325
    %v1186 = vunpack.c.h.b16 %v325
    %v1187 = vunpack.c.l.b16 %v326
    %v1188 = vunpack.c.h.b16 %v326
    %v1189 = vunpack.c.l.b16 %v327
    %v1190 = vunpack.c.h.b16 %v327
    %v1191 = vunpack.c.l.b16 %v328
    %v1192 = vunpack.c.h.b16 %v328
    %v1193 = vunpack.c.l.b16 %v329
    %v1194 = vunpack.c.h.b16 %v329
    %v1195 = vunpack.c.l.b16 %v330
    %v1196 = vunpack.c.h.b16 %v330
    %v1197 = vunpack.c.l.b16 %v331
    %v1198 = vunpack.c.h.b16 %v331
    %v1199 = vunpack.c.l.b16 %v332
    %v1200 = vunpack.c.h.b16 %v332
    %v1201 = vunpack.c.l.b16 %v333
    %v1202 = vunpack.c.h.b16 %v333
    %v1203 = vunpack.c.l.b16 %v334
    %v1204 = vunpack.c.h.b16 %v334
    %v1205 = vunpack.c.l.b16 %v335
    %v1206 = vunpack.c.h.b16 %v335
    %v1207 = vunpack.c.l.b16 %v336
    %v1208 = vunpack.c.h.b16 %v336
    %v1209 = vunpack.c.l.b16 %v337
    %v1210 = vunpack.c.h.b16 %v337
    %v1211 = vunpack.c.l.b16 %v338
    %v1212 = vunpack.c.h.b16 %v338
    %v1213 = vunpack.c.l.b16 %v339
    %v1214 = vunpack.c.h.b16 %v339
    %v1215 = vunpack.c.l.b16 %v340
    %v1216 = vunpack.c.h.b16 %v340
    %v1217 = vunpack.c.l.b16 %v341
    %v1218 = vunpack.c.h.b16 %v341
    %v1219 = vunpack.c.l.b16 %v342
    %v1220 = vunpack.c.h.b16 %v342
    %v1221 = vunpack.c.l.b16 %v343
    %v1222 = vunpack.c.h.b16 %v343
    %v1223 = vunpack.c.l.b16 %v344
    %v1224 = vunpack.c.h.b16 %v344
    %v1225 = vunpack.c.l.b16 %v345
    %v1226 = vunpack.c.h.b16 %v345
    %v1227 = vunpack.c.l.b16 %v346
    %v1228 = vunpack.c.h.b16 %v346
    %v1229 = vunpack.c.l.b16 %v347
    %v1230 = vunpack.c.h.b16 %v347
    %v1231 = vunpack.c.l.b16 %v348
    %v1232 = vunpack.c.h.b16 %v348
    %v1233 = vunpack.c.l.b16 %v349
    %v1234 = vunpack.c.h.b16 %v349
    %v1235 = vunpack.c.l.b16 %v350
    %v1236 = vunpack.c.h.b16 %v350
    %v1237 = vunpack.c.l.b16 %v351
    %v1238 = vunpack.c.h.b16 %v351
    %v1239 = vunpack.c.l.b16 %v352
    %v1240 = vunpack.c.h.b16 %v352
    %v1241 = vunpack.c.l.b16 %v353
    %v1242 = vunpack.c.h.b16 %v353
    %v1243 = vunpack.c.l.b16 %v354
    %v1244 = vunpack.c.h.b16 %v354
    %v1245 = vunpack.c.l.b16 %v355
    %v1246 = vunpack.c.h.b16 %v355
    %v1247 = vunpack.c.l.b16 %v356
    %v1248 = vunpack.c.h.b16 %v356
    %v1249 = vunpack.c.l.b16 %v357
    %v1250 = vunpack.c.h.b16 %v357
    %v1251 = vunpack.c.l.b16 %v358
    %v1252 = vunpack.c.h.b16 %v358
    %v1253 = vunpack.c.l.b16 %v359
    %v1254 = vunpack.c.h.b16 %v359
    %v1255 = vunpack.c.l.b16 %v360
    %v1256 = vunpack.c.h.b16 %v360
    %v1257 = vunpack.c.l.b16 %v361
    %v1258 = vunpack.c.h.b16 %v361
    %v1259 = vunpack.c.l.b16 %v362
    %v1260 = vunpack.c.h.b16 %v362
    %v1261 = vunpack.c.l.b16 %v363
    %v1262 = vunpack.c.h.b16 %v363
    %v1263 = vunpack.c.l.b16 %v364
    %v1264 = vunpack.c.h.b16 %v364
    %v1265 = vunpack.c.l.b16 %v365
    %v1266 = vunpack.c.h.b16 %v365
    %v1267 = vunpack.c.l.b16 %v366
    %v1268 = vunpack.c.h.b16 %v366
    %v1269 = vunpack.c.l.b16 %v367
    %v1270 = vunpack.c.h.b16 %v367
    %v1271 = vunpack.c.l.b16 %v368
    %v1272 = vunpack.c.h.b16 %v368
    %v1273 = vunpack.c.l.b16 %v369
    %v1274 = vunpack.c.h.b16 %v369
    %v1275 = vunpack.c.l.b16 %v370
    %v1276 = vunpack.c.h.b16 %v370
    %v1277 = vunpack.c.l.b16 %v371
    %v1278 = vunpack.c.h.b16 %v371
    %v1279 = vunpack.c.l.b16 %v372
    %v1280 = vunpack.c.h.b16 %v372
    %v1281 = vunpack.c.l.b16 %v373
    %v1282 = vunpack.c.h.b16 %v373
    %v1283 = vunpack.c.l.b16 %v374
    %v1284 = vunpack.c.h.b16 %v374
    %v1285 = vunpack.c.l.b16 %v375
    %v1286 = vunpack.c.h.b16 %v375
    %v1287 = vunpack.c.l.b16 %v376
    %v1288 = vunpack.c.h.b16 %v376
    %v1289 = vunpack.c.l.b16 %v377
    %v1290 = vunpack.c.h.b16 %v377
    %v1291 = vunpack.c.l.b16 %v378
    %v1292 = vunpack.c.h.b16 %v378
    %v1293 = vunpack.c.l.b16 %v379
    %v1294 = vunpack.c.h.b16 %v379
    %v1295 = vunpack.c.l.b16 %v380
    %v1296 = vunpack.c.h.b16 %v380
    %v1297 = vunpack.c.l.b16 %v381
    %v1298 = vunpack.c.h.b16 %v381
    %v1299 = vunpack.c.l.b16 %v382
    %v1300 = vunpack.c.h.b16 %v382
    %v1301 = vunpack.c.l.b16 %v383
    %v1302 = vunpack.c.h.b16 %v383
    %v1303 = vunpack.c.l.b16 %v384
    %v1304 = vunpack.c.h.b16 %v384
    %v1305 = vunpack.c.l.b16 %v385
    %v1306 = vunpack.c.h.b16 %v385
    %v1307 = vunpack.c.l.b16 %v386
    %v1308 = vunpack.c.h.b16 %v386
    %v1309 = vunpack.c.l.b16 %v387
    %v1310 = vunpack.c.h.b16 %v387
    %v1311 = vunpack.c.l.b16 %v388
    %v1312 = vunpack.c.h.b16 %v388
    %v1313 = vunpack.c.l.b16 %v389
    %v1314 = vunpack.c.h.b16 %v389
    %v1315 = vunpack.c.l.b16 %v390
    %v1316 = vunpack.c.h.b16 %v390
    %v1317 = vunpack.c.l.b16 %v391
    %v1318 = vunpack.c.h.b16 %v391
    %v1319 = vunpack.c.l.b16 %v392
    %v1320 = vunpack.c.h.b16 %v392
    %v1321 = vpack.c.b16 %v757, %v745
    %v1322 = vpack.c.b16 %v758, %v746
    %v1323 = vpack.c.b16 %v759, %v747
    %v1324 = vpack.c.b16 %v760, %v748
    %v1325 = vpack.c.b16 %v761, %v749
    %v1326 = vpack.c.b16 %v762, %v750
    %v1327 = vpack.c.b16 %v763, %v751
    %v1328 = vpack.c.b16 %v764, %v752
    %v1329 = vpack.c.b16 %v765, %v753
    %v1330 = vpack.c.b16 %v766, %v754
    %v1331 = vpack.c.b16 %v767, %v755
    %v1332 = vpack.c.b16 %v768, %v756
    %v1333 = vpack.c.b16 %v781, %v769
    %v1334 = vpack.c.b16 %v782, %v770
    %v1335 = vpack.c.b16 %v783, %v771
    %v1336 = vpack.c.b16 %v784, %v772
    %v1337 = vpack.c.b16 %v785, %v773
    %v1338 = vpack.c.b16 %v786, %v774
    %v1339 = vpack.c.b16 %v787, %v775
    %v1340 = vpack.c.b16 %v788, %v776
    %v1341 = vpack.c.b16 %v789, %v777
    %v1342 = vpack.c.b16 %v790, %v778
    %v1343 = vpack.c.b16 %v791, %v779
    %v1344 = vpack.c.b16 %v792, %v780
    %v1345 = vpack.c.b16 %v805, %v793
    %v1346 = vpack.c.b16 %v806, %v794
    %v1347 = vpack.c.b16 %v807, %v795
    %v1348 = vpack.c.b16 %v808, %v796
    %v1349 = vpack.c.b16 %v809, %v797
    %v1350 = vpack.c.b16 %v810, %v798
    %v1351 = vpack.c.b16 %v811, %v799
    %v1352 = vpack.c.b16 %v812, %v800
    %v1353 = vpack.c.b16 %v813, %v801
    %v1354 = vpack.c.b16 %v814, %v802
    %v1355 = vpack.c.b16 %v815, %v803
    %v1356 = vpack.c.b16 %v816, %v804
    %v1357 = vpack.c.b16 %v829, %v817
    %v1358 = vpack.c.b16 %v830, %v818
    %v1359 = vpack.c.b16 %v831, %v819
    %v1360 = vpack.c.b16 %v832, %v820
    %v1361 = vpack.c.b16 %v833, %v821
    %v1362 = vpack.c.b16 %v834, %v822
    %v1363 = vpack.c.b16 %v835, %v823
    %v1364 = vpack.c.b16 %v836, %v824
    %v1365 = vpack.c.b16 %v837, %v825
    %v1366 = vpack.c.b16 %v838, %v826
    %v1367 = vpack.c.b16 %v839, %v827
    %v1368 = vpack.c.b16 %v840, %v828
    %v1369 = vpack.c.b16 %v853, %v841
    %v1370 = vpack.c.b16 %v854, %v842
    %v1371 = vpack.c.b16 %v855, %v843
    %v1372 = vpack.c.b16 %v856, %v844
    %v1373 = vpack.c.b16 %v857, %v845
    %v1374 = vpack.c.b16 %v858, %v846
    %v1375 = vpack.c.b16 %v859, %v847
    %v1376 = vpack.c.b16 %v860, %v848
    %v1377 = vpack.c.b16 %v861, %v849
    %v1378 = vpack.c.b16 %v862, %v850
    %v1379 = vpack.c.b16 %v863, %v851
    %v1380 = vpack.c.b16 %v864, %v852
    %v1381 = vpack.c.b16 %v877, %v865
    %v1382 = vpack.c.b16 %v878, %v866
    %v1383 = vpack.c.b16 %v879, %v867
    %v1384 = vpack.c.b16 %v880, %v868
    %v1385 = vpack.c.b16 %v881, %v869
    %v1386 = vpack.c.b16 %v882, %v870
    %v1387 = vpack.c.b16 %v883, %v871
    %v1388 = vpack.c.b16 %v884, %v872
    %v1389 = vpack.c.b16 %v885, %v873
    %v1390 = vpack.c.b16 %v886, %v874
    %v1391 = vpack.c.b16 %v887, %v875
    %v1392 = vpack.c.b16 %v888, %v876
    %v1393 = vpack.c.b16 %v901, %v889
    %v1394 = vpack.c.b16 %v902, %v890
    %v1395 = vpack.c.b16 %v903, %v891
    %v1396 = vpack.c.b16 %v904, %v892
    %v1397 = vpack.c.b16 %v905, %v893
    %v1398 = vpack.c.b16 %v906, %v894
    %v1399 = vpack.c.b16 %v907, %v895
    %v1400 = vpack.c.b16 %v908, %v896
    %v1401 = vpack.c.b16 %v909, %v897
    %v1402 = vpack.c.b16 %v910, %v898
    %v1403 = vpack.c.b16 %v911, %v899
    %v1404 = vpack.c.b16 %v912, %v900
    %v1405 = vpack.c.b16 %v925, %v913
    %v1406 = vpack.c.b16 %v926, %v914
    %v1407 = vpack.c.b16 %v927, %v915
    %v1408 = vpack.c.b16 %v928, %v916
    %v1409 = vpack.c.b16 %v929, %v917
    %v1410 = vpack.c.b16 %v930, %v918
    %v1411 = vpack.c.b16 %v931, %v919
    %v1412 = vpack.c.b16 %v932, %v920
    %v1413 = vpack.c.b16 %v933, %v921
    %v1414 = vpack.c.b16 %v934, %v922
    %v1415 = vpack.c.b16 %v935, %v923
    %v1416 = vpack.c.b16 %v936, %v924
    %v1417 = vpack.c.b16 %v949, %v937
    %v1418 = vpack.c.b16 %v950, %v938
    %v1419 = vpack.c.b16 %v951, %v939
    %v1420 = vpack.c.b16 %v952, %v940
    %v1421 = vpack.c.b16 %v953, %v941
    %v1422 = vpack.c.b16 %v954, %v942
    %v1423 = vpack.c.b16 %v955, %v943
    %v1424 = vpack.c.b16 %v956, %v944
    %v1425 = vpack.c.b16 %v957, %v945
    %v1426 = vpack.c.b16 %v958, %v946
    %v1427 = vpack.c.b16 %v959, %v947
    %v1428 = vpack.c.b16 %v960, %v948
    %v1429 = vpack.c.b16 %v973, %v961
    %v1430 = vpack.c.b16 %v974, %v962
    %v1431 = vpack.c.b16 %v975, %v963
    %v1432 = vpack.c.b16 %v976, %v964
    %v1433 = vpack.c.b16 %v977, %v965
    %v1434 = vpack.c.b16 %v978, %v966
    %v1435 = vpack.c.b16 %v979, %v967
    %v1436 = vpack.c.b16 %v980, %v968
    %v1437 = vpack.c.b16 %v981, %v969
    %v1438 = vpack.c.b16 %v982, %v970
    %v1439 = vpack.c.b16 %v983, %v971
    %v1440 = vpack.c.b16 %v984, %v972
    %v1441 = vpack.c.b16 %v997, %v985
    %v1442 = vpack.c.b16 %v998, %v986
    %v1443 = vpack.c.b16 %v999, %v987
    %v1444 = vpack.c.b16 %v1000, %v988
    %v1445 = vpack.c.b16 %v1001, %v989
    %v1446 = vpack.c.b16 %v1002, %v990
    %v1447 = vpack.c.b16 %v1003, %v991
    %v1448 = vpack.c.b16 %v1004, %v992
    %v1449 = vpack.c.b16 %v1005, %v993
    %v1450 = vpack.c.b16 %v1006, %v994
    %v1451 = vpack.c.b16 %v1007, %v995
    %v1452 = vpack.c.b16 %v1008, %v996
    %v1453 = vpack.c.b16 %v1021, %v1009
    %v1454 = vpack.c.b16 %v1022, %v1010
    %v1455 = vpack.c.b16 %v1023, %v1011
    %v1456 = vpack.c.b16 %v1024, %v1012
    %v1457 = vpack.c.b16 %v1025, %v1013
    %v1458 = vpack.c.b16 %v1026, %v1014
    %v1459 = vpack.c.b16 %v1027, %v1015
    %v1460 = vpack.c.b16 %v1028, %v1016
    %v1461 = vpack.c.b16 %v1029, %v1017
    %v1462 = vpack.c.b16 %v1030, %v1018
    %v1463 = vpack.c.b16 %v1031, %v1019
    %v1464 = vpack.c.b16 %v1032, %v1020
    %v1465 = vpack.c.b16 %v1045, %v1033
    %v1466 = vpack.c.b16 %v1046, %v1034
    %v1467 = vpack.c.b16 %v1047, %v1035
    %v1468 = vpack.c.b16 %v1048, %v1036
    %v1469 = vpack.c.b16 %v1049, %v1037
    %v1470 = vpack.c.b16 %v1050, %v1038
    %v1471 = vpack.c.b16 %v1051, %v1039
    %v1472 = vpack.c.b16 %v1052, %v1040
    %v1473 = vpack.c.b16 %v1053, %v1041
    %v1474 = vpack.c.b16 %v1054, %v1042
    %v1475 = vpack.c.b16 %v1055, %v1043
    %v1476 = vpack.c.b16 %v1056, %v1044
    %v1477 = vpack.c.b16 %v1069, %v1057
    %v1478 = vpack.c.b16 %v1070, %v1058
    %v1479 = vpack.c.b16 %v1071, %v1059
    %v1480 = vpack.c.b16 %v1072, %v1060
    %v1481 = vpack.c.b16 %v1073, %v1061
    %v1482 = vpack.c.b16 %v1074, %v1062
    %v1483 = vpack.c.b16 %v1075, %v1063
    %v1484 = vpack.c.b16 %v1076, %v1064
    %v1485 = vpack.c.b16 %v1077, %v1065
    %v1486 = vpack.c.b16 %v1078, %v1066
    %v1487 = vpack.c.b16 %v1079, %v1067
    %v1488 = vpack.c.b16 %v1080, %v1068
    %v1489 = vpack.c.b16 %v1093, %v1081
    %v1490 = vpack.c.b16 %v1094, %v1082
    %v1491 = vpack.c.b16 %v1095, %v1083
    %v1492 = vpack.c.b16 %v1096, %v1084
    %v1493 = vpack.c.b16 %v1097, %v1085
    %v1494 = vpack.c.b16 %v1098, %v1086
    %v1495 = vpack.c.b16 %v1099, %v1087
    %v1496 = vpack.c.b16 %v1100, %v1088
    %v1497 = vpack.c.b16 %v1101, %v1089
    %v1498 = vpack.c.b16 %v1102, %v1090
    %v1499 = vpack.c.b16 %v1103, %v1091
    %v1500 = vpack.c.b16 %v1104, %v1092
    %v1501 = vpack.c.b16 %v1117, %v1105
    %v1502 = vpack.c.b16 %v1118, %v1106
    %v1503 = vpack.c.b16 %v1119, %v1107
    %v1504 = vpack.c.b16 %v1120, %v1108
    %v1505 = vpack.c.b16 %v1121, %v1109
    %v1506 = vpack.c.b16 %v1122, %v1110
    %v1507 = vpack.c.b16 %v1123, %v1111
    %v1508 = vpack.c.b16 %v1124, %v1112
    %v1509 = vpack.c.b16 %v1125, %v1113
    %v1510 = vpack.c.b16 %v1126, %v1114
    %v1511 = vpack.c.b16 %v1127, %v1115
    %v1512 = vpack.c.b16 %v1128, %v1116
    %v1513 = vpack.c.b16 %v1141, %v1129
    %v1514 = vpack.c.b16 %v1142, %v1130
    %v1515 = vpack.c.b16 %v1143, %v1131
    %v1516 = vpack.c.b16 %v1144, %v1132
    %v1517 = vpack.c.b16 %v1145, %v1133
    %v1518 = vpack.c.b16 %v1146, %v1134
    %v1519 = vpack.c.b16 %v1147, %v1135
    %v1520 = vpack.c.b16 %v1148, %v1136
    %v1521 = vpack.c.b16 %v1149, %v1137
    %v1522 = vpack.c.b16 %v1150, %v1138
    %v1523 = vpack.c.b16 %v1151, %v1139
    %v1524 = vpack.c.b16 %v1152, %v1140
    %v1525 = vpack.c.b16 %v1165, %v1153
    %v1526 = vpack.c.b16 %v1166, %v1154
    %v1527 = vpack.c.b16 %v1167, %v1155
    %v1528 = vpack.c.b16 %v1168, %v1156
    %v1529 = vpack.c.b16 %v1169, %v1157
    %v1530 = vpack.c.b16 %v1170, %v1158
    %v1531 = vpack.c.b16 %v1171, %v1159
    %v1532 = vpack.c.b16 %v1172, %v1160
    %v1533 = vpack.c.b16 %v1173, %v1161
    %v1534 = vpack.c.b16 %v1174, %v1162
    %v1535 = vpack.c.b16 %v1175, %v1163
    %v1536 = vpack.c.b16 %v1176, %v1164
    %v1537 = vpack.c.b16 %v1189, %v1177
    %v1538 = vpack.c.b16 %v1190, %v1178
    %v1539 = vpack.c.b16 %v1191, %v1179
    %v1540 = vpack.c.b16 %v1192, %v1180
    %v1541 = vpack.c.b16 %v1193, %v1181
    %v1542 = vpack.c.b16 %v1194, %v1182
    %v1543 = vpack.c.b16 %v1195, %v1183
    %v1544 = vpack.c.b16 %v1196, %v1184
    %v1545 = vpack.c.b16 %v1197, %v1185
    %v1546 = vpack.c.b16 %v1198, %v1186
    %v1547 = vpack.c.b16 %v1199, %v1187
    %v1548 = vpack.c.b16 %v1200, %v1188
    %v1549 = vpack.c.b16 %v1213, %v1201
    %v1550 = vpack.c.b16 %v1214, %v1202
    %v1551 = vpack.c.b16 %v1215, %v1203
    %v1552 = vpack.c.b16 %v1216, %v1204
    %v1553 = vpack.c.b16 %v1217, %v1205
    %v1554 = vpack.c.b16 %v1218, %v1206
    %v1555 = vpack.c.b16 %v1219, %v1207
    %v1556 = vpack.c.b16 %v1220, %v1208
    %v1557 = vpack.c.b16 %v1221, %v1209
    %v1558 = vpack.c.b16 %v1222, %v1210
    %v1559 = vpack.c.b16 %v1223, %v1211
    %v1560 = vpack.c.b16 %v1224, %v1212
    %v1561 = vpack.c.b16 %v1237, %v1225
    %v1562 = vpack.c.b16 %v1238, %v1226
    %v1563 = vpack.c.b16 %v1239, %v1227
    %v1564 = vpack.c.b16 %v1240, %v1228
    %v1565 = vpack.c.b16 %v1241, %v1229
    %v1566 = vpack.c.b16 %v1242, %v1230
    %v1567 = vpack.c.b16 %v1243, %v1231
    %v1568 = vpack.c.b16 %v1244, %v1232
    %v1569 = vpack.c.b16 %v1245, %v1233
    %v1570 = vpack.c.b16 %v1246, %v1234
    %v1571 = vpack.c.b16 %v1247, %v1235
    %v1572 = vpack.c.b16 %v1248, %v1236
    %v1573 = vpack.c.b16 %v1261, %v1249
    %v1574 = vpack.c.b16 %v1262, %v1250
    %v1575 = vpack.c.b16 %v1263, %v1251
    %v1576 = vpack.c.b16 %v1264, %v1252
    %v1577 = vpack.c.b16 %v1265, %v1253
    %v1578 = vpack.c.b16 %v1266, %v1254
    %v1579 = vpack.c.b16 %v1267, %v1255
    %v1580 = vpack.c.b16 %v1268, %v1256
    %v1581 = vpack.c.b16 %v1269, %v1257
    %v1582 = vpack.c.b16 %v1270, %v1258
    %v1583 = vpack.c.b16 %v1271, %v1259
    %v1584 = vpack.c.b16 %v1272, %v1260
    %v1585 = vpack.c.b16 %v1285, %v1273
    %v1586 = vpack.c.b16 %v1286, %v1274
    %v1587 = vpack.c.b16 %v1287, %v1275
    %v1588 = vpack.c.b16 %v1288, %v1276
    %v1589 = vpack.c.b16 %v1289, %v1277
    %v1590 = vpack.c.b16 %v1290, %v1278
    %v1591 = vpack.c.b16 %v1291, %v1279
    %v1592 = vpack.c.b16 %v1292, %v1280
    %v1593 = vpack.c.b16 %v1293, %v1281
    %v1594 = vpack.c.b16 %v1294, %v1282
    %v1595 = vpack.c.b16 %v1295, %v1283
    %v1596 = vpack.c.b16 %v1296, %v1284
    %v1597 = vpack.c.b16 %v1309, %v1297
    %v1598 = vpack.c.b16 %v1310, %v1298
    %v1599 = vpack.c.b16 %v1311, %v1299
    %v1600 = vpack.c.b16 %v1312, %v1300
    %v1601 = vpack.c.b16 %v1313, %v1301
    %v1602 = vpack.c.b16 %v1314, %v1302
    %v1603 = vpack.c.b16 %v1315, %v1303
    %v1604 = vpack.c.b16 %v1316, %v1304
    %v1605 = vpack.c.b16 %v1317, %v1305
    %v1606 = vpack.c.b16 %v1318, %v1306
    %v1607 = vpack.c.b16 %v1319, %v1307
    %v1608 = vpack.c.b16 %v1320, %v1308
    %1897 = vmatprep.subr.bf16.mxu0 %v1322
    %1898 = vmatpush1.bf16.msra.mxu0 %v1321
    %1899 = vmatprep.subr.bf16.mxu0 %v1334
    %1900 = vmatpush1.bf16.msra.mxu0 %v1333
    %1901 = vmatprep.subr.bf16.mxu0 %v1346
    %1902 = vmatpush1.bf16.msra.mxu0 %v1345
    %1903 = vmatprep.subr.bf16.mxu0 %v1358
    %1904 = vmatpush1.bf16.msra.mxu0 %v1357
    %1905 = vmatprep.subr.bf16.mxu0 %v1370
    %1906 = vmatpush1.bf16.msra.mxu0 %v1369
    %1907 = vmatprep.subr.bf16.mxu0 %v1382
    %1908 = vmatpush1.bf16.msra.mxu0 %v1381
    %1909 = vmatprep.subr.bf16.mxu0 %v1394
    %1910 = vmatpush1.bf16.msra.mxu0 %v1393
    %1911 = vmatprep.subr.bf16.mxu0 %v1406
    %1912 = vmatpush1.bf16.msra.mxu0 %v1405
    %1913 = vmatprep.subr.bf16.mxu0 %v1418
    %1914 = vmatpush1.bf16.msra.mxu0 %v1417
    %1915 = vmatprep.subr.bf16.mxu0 %v1430
    %1916 = vmatpush1.bf16.msra.mxu0 %v1429
    %1917 = vmatprep.subr.bf16.mxu0 %v1442
    %1918 = vmatpush1.bf16.msra.mxu0 %v1441
    %1919 = vmatprep.subr.bf16.mxu0 %v1454
    %1920 = vmatpush1.bf16.msra.mxu0 %v1453
    %1921 = vmatprep.subr.bf16.mxu0 %v1466
    %1922 = vmatpush1.bf16.msra.mxu0 %v1465
    %1923 = vmatprep.subr.bf16.mxu0 %v1478
    %1924 = vmatpush1.bf16.msra.mxu0 %v1477
    %1925 = vmatprep.subr.bf16.mxu0 %v1490
    %1926 = vmatpush1.bf16.msra.mxu0 %v1489
    %1927 = vmatprep.subr.bf16.mxu0 %v1502
    %1928 = vmatpush1.bf16.msra.mxu0 %v1501
    %1929 = vmatprep.mubr.bf16.mxu0 %v103
    %1930 = vmatmul.mubr.bf16.gmra.mrb[0].mxu0 %v102
    %v1931 = vpop.f32.mrb[0].mxu0
    %v1932 = vadd.f32 %v400, %v1931
    %v1933 = vpop.f32.mrb[0].mxu0
    %v1934 = vadd.f32 %v404, %v1933
    %v1935 = vpop.f32.mrb[0].mxu0
    %v1936 = vadd.f32 %v400, %v1935
    %v1937 = vpop.f32.mrb[0].mxu0
    %v1938 = vadd.f32 %v404, %v1937
    %1939 = vdwg.mxu0
    %1940 = vmatprep.subr.bf16.mxu0 %v1514
    %1941 = vmatpush1.bf16.msra.mxu0 %v1513
    %1942 = vmatprep.subr.bf16.mxu0 %v1526
    %1943 = vmatpush1.bf16.msra.mxu0 %v1525
    %1944 = vmatprep.subr.bf16.mxu0 %v1538
    %1945 = vmatpush1.bf16.msra.mxu0 %v1537
    %1946 = vmatprep.subr.bf16.mxu0 %v1550
    %1947 = vmatpush1.bf16.msra.mxu0 %v1549
    %1948 = vmatprep.subr.bf16.mxu0 %v1562
    %1949 = vmatpush1.bf16.msra.mxu0 %v1561
    %1950 = vmatprep.subr.bf16.mxu0 %v1574
    %1951 = vmatpush1.bf16.msra.mxu0 %v1573
    %1952 = vmatprep.subr.bf16.mxu0 %v1586
    %1953 = vmatpush1.bf16.msra.mxu0 %v1585
    %1954 = vmatprep.subr.bf16.mxu0 %v1598
    %1955 = vmatpush1.bf16.msra.mxu0 %v1597
    %1956 = vmatprep.subr.bf16.mxu0 0
    %1957 = vmatpush1.bf16.msra.mxu0 0
    %1958 = vmatprep.subr.bf16.mxu0 0
    %1959 = vmatpush1.bf16.msra.mxu0 0
    %1960 = vmatprep.subr.bf16.mxu0 0
    %1961 = vmatpush1.bf16.msra.mxu0 0
    %1962 = vmatprep.subr.bf16.mxu0 0
    %1963 = vmatpush1.bf16.msra.mxu0 0
    %1964 = vmatprep.subr.bf16.mxu0 0
    %1965 = vmatpush1.bf16.msra.mxu0 0
    %1966 = vmatprep.subr.bf16.mxu0 0
    %1967 = vmatpush1.bf16.msra.mxu0 0
    %1968 = vmatprep.subr.bf16.mxu0 0
    %1969 = vmatpush1.bf16.msra.mxu0 0
    %1970 = vmatprep.subr.bf16.mxu0 0
    %1971 = vmatpush1.bf16.msra.mxu0 0
    %1972 = vmatprep.mubr.bf16.mxu0 0
    %1973 = vmatmul.mubr.bf16.gmra.mrb[0].mxu0 %v104
    %v1974 = vpop.f32.mrb[0].mxu0
    %v1975 = vadd.f32 %v1932, %v1974
    %v1976 = vpop.f32.mrb[0].mxu0
    %v1977 = vadd.f32 %v1934, %v1976
    %v1978 = vpop.f32.mrb[0].mxu0
    %v1979 = vadd.f32 %v1936, %v1978
    %v1980 = vpop.f32.mrb[0].mxu0
    %v1981 = vadd.f32 %v1938, %v1980
    %1982 = vdwg.mxu0
    %1983 = vmatprep.subr.bf16.mxu0 %v1324
    %1984 = vmatpush1.bf16.msra.mxu0 %v1323
    %1985 = vmatprep.subr.bf16.mxu0 %v1336
    %1986 = vmatpush1.bf16.msra.mxu0 %v1335
    %1987 = vmatprep.subr.bf16.mxu0 %v1348
    %1988 = vmatpush1.bf16.msra.mxu0 %v1347
    %1989 = vmatprep.subr.bf16.mxu0 %v1360
    %1990 = vmatpush1.bf16.msra.mxu0 %v1359
    %1991 = vmatprep.subr.bf16.mxu0 %v1372
    %1992 = vmatpush1.bf16.msra.mxu0 %v1371
    %1993 = vmatprep.subr.bf16.mxu0 %v1384
    %1994 = vmatpush1.bf16.msra.mxu0 %v1383
    %1995 = vmatprep.subr.bf16.mxu0 %v1396
    %1996 = vmatpush1.bf16.msra.mxu0 %v1395
    %1997 = vmatprep.subr.bf16.mxu0 %v1408
    %1998 = vmatpush1.bf16.msra.mxu0 %v1407
    %1999 = vmatprep.subr.bf16.mxu0 %v1420
    %2000 = vmatpush1.bf16.msra.mxu0 %v1419
    %2001 = vmatprep.subr.bf16.mxu0 %v1432
    %2002 = vmatpush1.bf16.msra.mxu0 %v1431
    %2003 = vmatprep.subr.bf16.mxu0 %v1444
    %2004 = vmatpush1.bf16.msra.mxu0 %v1443
    %2005 = vmatprep.subr.bf16.mxu0 %v1456
    %2006 = vmatpush1.bf16.msra.mxu0 %v1455
    %2007 = vmatprep.subr.bf16.mxu0 %v1468
    %2008 = vmatpush1.bf16.msra.mxu0 %v1467
    %2009 = vmatprep.subr.bf16.mxu0 %v1480
    %2010 = vmatpush1.bf16.msra.mxu0 %v1479
    %2011 = vmatprep.subr.bf16.mxu0 %v1492
    %2012 = vmatpush1.bf16.msra.mxu0 %v1491
    %2013 = vmatprep.subr.bf16.mxu0 %v1504
    %2014 = vmatpush1.bf16.msra.mxu0 %v1503
    %2015 = vmatprep.mubr.bf16.mxu0 %v103
    %2016 = vmatmul.mubr.bf16.gmra.mrb[0].mxu0 %v102
    %v2017 = vpop.f32.mrb[0].mxu0
    %v2018 = vadd.f32 %v408, %v2017
    %v2019 = vpop.f32.mrb[0].mxu0
    %v2020 = vadd.f32 %v412, %v2019
    %v2021 = vpop.f32.mrb[0].mxu0
    %v2022 = vadd.f32 %v408, %v2021
    %v2023 = vpop.f32.mrb[0].mxu0
    %v2024 = vadd.f32 %v412, %v2023
    %2025 = vdwg.mxu0
    %2026 = vmatprep.subr.bf16.mxu0 %v1516
    %2027 = vmatpush1.bf16.msra.mxu0 %v1515
    %2028 = vmatprep.subr.bf16.mxu0 %v1528
    %2029 = vmatpush1.bf16.msra.mxu0 %v1527
    %2030 = vmatprep.subr.bf16.mxu0 %v1540
    %2031 = vmatpush1.bf16.msra.mxu0 %v1539
    %2032 = vmatprep.subr.bf16.mxu0 %v1552
    %2033 = vmatpush1.bf16.msra.mxu0 %v1551
    %2034 = vmatprep.subr.bf16.mxu0 %v1564
    %2035 = vmatpush1.bf16.msra.mxu0 %v1563
    %2036 = vmatprep.subr.bf16.mxu0 %v1576
    %2037 = vmatpush1.bf16.msra.mxu0 %v1575
    %2038 = vmatprep.subr.bf16.mxu0 %v1588
    %2039 = vmatpush1.bf16.msra.mxu0 %v1587
    %2040 = vmatprep.subr.bf16.mxu0 %v1600
    %2041 = vmatpush1.bf16.msra.mxu0 %v1599
    %2042 = vmatprep.subr.bf16.mxu0 0
    %2043 = vmatpush1.bf16.msra.mxu0 0
    %2044 = vmatprep.subr.bf16.mxu0 0
    %2045 = vmatpush1.bf16.msra.mxu0 0
    %2046 = vmatprep.subr.bf16.mxu0 0
    %2047 = vmatpush1.bf16.msra.mxu0 0
    %2048 = vmatprep.subr.bf16.mxu0 0
    %2049 = vmatpush1.bf16.msra.mxu0 0
    %2050 = vmatprep.subr.bf16.mxu0 0
    %2051 = vmatpush1.bf16.msra.mxu0 0
    %2052 = vmatprep.subr.bf16.mxu0 0
    %2053 = vmatpush1.bf16.msra.mxu0 0
    %2054 = vmatprep.subr.bf16.mxu0 0
    %2055 = vmatpush1.bf16.msra.mxu0 0
    %2056 = vmatprep.subr.bf16.mxu0 0
    %2057 = vmatpush1.bf16.msra.mxu0 0
    %2058 = vmatprep.mubr.bf16.mxu0 0
    %2059 = vmatmul.mubr.bf16.gmra.mrb[0].mxu0 %v104
    %v2060 = vpop.f32.mrb[0].mxu0
    %v2061 = vadd.f32 %v2018, %v2060
    %v2062 = vpop.f32.mrb[0].mxu0
    %v2063 = vadd.f32 %v2020, %v2062
    %v2064 = vpop.f32.mrb[0].mxu0
    %v2065 = vadd.f32 %v2022, %v2064
    %v2066 = vpop.f32.mrb[0].mxu0
    %v2067 = vadd.f32 %v2024, %v2066
    %2068 = vdwg.mxu0
    %2069 = vmatprep.subr.bf16.mxu0 %v1326
    %2070 = vmatpush1.bf16.msra.mxu0 %v1325
    %2071 = vmatprep.subr.bf16.mxu0 %v1338
    %2072 = vmatpush1.bf16.msra.mxu0 %v1337
    %2073 = vmatprep.subr.bf16.mxu0 %v1350
    %2074 = vmatpush1.bf16.msra.mxu0 %v1349
    %2075 = vmatprep.subr.bf16.mxu0 %v1362
    %2076 = vmatpush1.bf16.msra.mxu0 %v1361
    %2077 = vmatprep.subr.bf16.mxu0 %v1374
    %2078 = vmatpush1.bf16.msra.mxu0 %v1373
    %2079 = vmatprep.subr.bf16.mxu0 %v1386
    %2080 = vmatpush1.bf16.msra.mxu0 %v1385
    %2081 = vmatprep.subr.bf16.mxu0 %v1398
    %2082 = vmatpush1.bf16.msra.mxu0 %v1397
    %2083 = vmatprep.subr.bf16.mxu0 %v1410
    %2084 = vmatpush1.bf16.msra.mxu0 %v1409
    %2085 = vmatprep.subr.bf16.mxu0 %v1422
    %2086 = vmatpush1.bf16.msra.mxu0 %v1421
    %2087 = vmatprep.subr.bf16.mxu0 %v1434
    %2088 = vmatpush1.bf16.msra.mxu0 %v1433
    %2089 = vmatprep.subr.bf16.mxu0 %v1446
    %2090 = vmatpush1.bf16.msra.mxu0 %v1445
    %2091 = vmatprep.subr.bf16.mxu0 %v1458
    %2092 = vmatpush1.bf16.msra.mxu0 %v1457
    %2093 = vmatprep.subr.bf16.mxu0 %v1470
    %2094 = vmatpush1.bf16.msra.mxu0 %v1469
    %2095 = vmatprep.subr.bf16.mxu0 %v1482
    %2096 = vmatpush1.bf16.msra.mxu0 %v1481
    %2097 = vmatprep.subr.bf16.mxu0 %v1494
    %2098 = vmatpush1.bf16.msra.mxu0 %v1493
    %2099 = vmatprep.subr.bf16.mxu0 %v1506
    %2100 = vmatpush1.bf16.msra.mxu0 %v1505
    %2101 = vmatprep.mubr.bf16.mxu0 %v103
    %2102 = vmatmul.mubr.bf16.gmra.mrb[0].mxu0 %v102
    %v2103 = vpop.f32.mrb[0].mxu0
    %v2104 = vadd.f32 %v416, %v2103
    %v2105 = vpop.f32.mrb[0].mxu0
    %v2106 = vadd.f32 %v420, %v2105
    %v2107 = vpop.f32.mrb[0].mxu0
    %v2108 = vadd.f32 %v416, %v2107
    %v2109 = vpop.f32.mrb[0].mxu0
    %v2110 = vadd.f32 %v420, %v2109
    %2111 = vdwg.mxu0
    %2112 = vmatprep.subr.bf16.mxu0 %v1518
    %2113 = vmatpush1.bf16.msra.mxu0 %v1517
    %2114 = vmatprep.subr.bf16.mxu0 %v1530
    %2115 = vmatpush1.bf16.msra.mxu0 %v1529
    %2116 = vmatprep.subr.bf16.mxu0 %v1542
    %2117 = vmatpush1.bf16.msra.mxu0 %v1541
    %2118 = vmatprep.subr.bf16.mxu0 %v1554
    %2119 = vmatpush1.bf16.msra.mxu0 %v1553
    %2120 = vmatprep.subr.bf16.mxu0 %v1566
    %2121 = vmatpush1.bf16.msra.mxu0 %v1565
    %2122 = vmatprep.subr.bf16.mxu0 %v1578
    %2123 = vmatpush1.bf16.msra.mxu0 %v1577
    %2124 = vmatprep.subr.bf16.mxu0 %v1590
    %2125 = vmatpush1.bf16.msra.mxu0 %v1589
    %2126 = vmatprep.subr.bf16.mxu0 %v1602
    %2127 = vmatpush1.bf16.msra.mxu0 %v1601
    %2128 = vmatprep.subr.bf16.mxu0 0
    %2129 = vmatpush1.bf16.msra.mxu0 0
    %2130 = vmatprep.subr.bf16.mxu0 0
    %2131 = vmatpush1.bf16.msra.mxu0 0
    %2132 = vmatprep.subr.bf16.mxu0 0
    %2133 = vmatpush1.bf16.msra.mxu0 0
    %2134 = vmatprep.subr.bf16.mxu0 0
    %2135 = vmatpush1.bf16.msra.mxu0 0
    %2136 = vmatprep.subr.bf16.mxu0 0
    %2137 = vmatpush1.bf16.msra.mxu0 0
    %2138 = vmatprep.subr.bf16.mxu0 0
    %2139 = vmatpush1.bf16.msra.mxu0 0
    %2140 = vmatprep.subr.bf16.mxu0 0
    %2141 = vmatpush1.bf16.msra.mxu0 0
    %2142 = vmatprep.subr.bf16.mxu0 0
    %2143 = vmatpush1.bf16.msra.mxu0 0
    %2144 = vmatprep.mubr.bf16.mxu0 0
    %2145 = vmatmul.mubr.bf16.gmra.mrb[0].mxu0 %v104
    %v2146 = vpop.f32.mrb[0].mxu0
    %v2147 = vadd.f32 %v2104, %v2146
    %v2148 = vpop.f32.mrb[0].mxu0
    %v2149 = vadd.f32 %v2106, %v2148
    %v2150 = vpop.f32.mrb[0].mxu0
    %v2151 = vadd.f32 %v2108, %v2150
    %v2152 = vpop.f32.mrb[0].mxu0
    %v2153 = vadd.f32 %v2110, %v2152
    %2154 = vdwg.mxu0
    %2155 = vmatprep.subr.bf16.mxu0 %v1328
    %2156 = vmatpush1.bf16.msra.mxu0 %v1327
    %2157 = vmatprep.subr.bf16.mxu0 %v1340
    %2158 = vmatpush1.bf16.msra.mxu0 %v1339
    %2159 = vmatprep.subr.bf16.mxu0 %v1352
    %2160 = vmatpush1.bf16.msra.mxu0 %v1351
    %2161 = vmatprep.subr.bf16.mxu0 %v1364
    %2162 = vmatpush1.bf16.msra.mxu0 %v1363
    %2163 = vmatprep.subr.bf16.mxu0 %v1376
    %2164 = vmatpush1.bf16.msra.mxu0 %v1375
    %2165 = vmatprep.subr.bf16.mxu0 %v1388
    %2166 = vmatpush1.bf16.msra.mxu0 %v1387
    %2167 = vmatprep.subr.bf16.mxu0 %v1400
    %2168 = vmatpush1.bf16.msra.mxu0 %v1399
    %2169 = vmatprep.subr.bf16.mxu0 %v1412
    %2170 = vmatpush1.bf16.msra.mxu0 %v1411
    %2171 = vmatprep.subr.bf16.mxu0 %v1424
    %2172 = vmatpush1.bf16.msra.mxu0 %v1423
    %2173 = vmatprep.subr.bf16.mxu0 %v1436
    %2174 = vmatpush1.bf16.msra.mxu0 %v1435
    %2175 = vmatprep.subr.bf16.mxu0 %v1448
    %2176 = vmatpush1.bf16.msra.mxu0 %v1447
    %2177 = vmatprep.subr.bf16.mxu0 %v1460
    %2178 = vmatpush1.bf16.msra.mxu0 %v1459
    %2179 = vmatprep.subr.bf16.mxu0 %v1472
    %2180 = vmatpush1.bf16.msra.mxu0 %v1471
    %2181 = vmatprep.subr.bf16.mxu0 %v1484
    %2182 = vmatpush1.bf16.msra.mxu0 %v1483
    %2183 = vmatprep.subr.bf16.mxu0 %v1496
    %2184 = vmatpush1.bf16.msra.mxu0 %v1495
    %2185 = vmatprep.subr.bf16.mxu0 %v1508
    %2186 = vmatpush1.bf16.msra.mxu0 %v1507
    %2187 = vmatprep.mubr.bf16.mxu0 %v103
    %2188 = vmatmul.mubr.bf16.gmra.mrb[0].mxu0 %v102
    %v2189 = vpop.f32.mrb[0].mxu0
    %v2190 = vadd.f32 %v424, %v2189
    %v2191 = vpop.f32.mrb[0].mxu0
    %v2192 = vadd.f32 %v428, %v2191
    %v2193 = vpop.f32.mrb[0].mxu0
    %v2194 = vadd.f32 %v424, %v2193
    %v2195 = vpop.f32.mrb[0].mxu0
    %v2196 = vadd.f32 %v428, %v2195
    %2197 = vdwg.mxu0
    %2198 = vmatprep.subr.bf16.mxu0 %v1520
    %2199 = vmatpush1.bf16.msra.mxu0 %v1519
    %2200 = vmatprep.subr.bf16.mxu0 %v1532
    %2201 = vmatpush1.bf16.msra.mxu0 %v1531
    %2202 = vmatprep.subr.bf16.mxu0 %v1544
    %2203 = vmatpush1.bf16.msra.mxu0 %v1543
    %2204 = vmatprep.subr.bf16.mxu0 %v1556
    %2205 = vmatpush1.bf16.msra.mxu0 %v1555
    %2206 = vmatprep.subr.bf16.mxu0 %v1568
    %2207 = vmatpush1.bf16.msra.mxu0 %v1567
    %2208 = vmatprep.subr.bf16.mxu0 %v1580
    %2209 = vmatpush1.bf16.msra.mxu0 %v1579
    %2210 = vmatprep.subr.bf16.mxu0 %v1592
    %2211 = vmatpush1.bf16.msra.mxu0 %v1591
    %2212 = vmatprep.subr.bf16.mxu0 %v1604
    %2213 = vmatpush1.bf16.msra.mxu0 %v1603
    %2214 = vmatprep.subr.bf16.mxu0 0
    %2215 = vmatpush1.bf16.msra.mxu0 0
    %2216 = vmatprep.subr.bf16.mxu0 0
    %2217 = vmatpush1.bf16.msra.mxu0 0
    %2218 = vmatprep.subr.bf16.mxu0 0
    %2219 = vmatpush1.bf16.msra.mxu0 0
    %2220 = vmatprep.subr.bf16.mxu0 0
    %2221 = vmatpush1.bf16.msra.mxu0 0
    %2222 = vmatprep.subr.bf16.mxu0 0
    %2223 = vmatpush1.bf16.msra.mxu0 0
    %2224 = vmatprep.subr.bf16.mxu0 0
    %2225 = vmatpush1.bf16.msra.mxu0 0
    %2226 = vmatprep.subr.bf16.mxu0 0
    %2227 = vmatpush1.bf16.msra.mxu0 0
    %2228 = vmatprep.subr.bf16.mxu0 0
    %2229 = vmatpush1.bf16.msra.mxu0 0
    %2230 = vmatprep.mubr.bf16.mxu0 0
    %2231 = vmatmul.mubr.bf16.gmra.mrb[0].mxu0 %v104
    %v2232 = vpop.f32.mrb[0].mxu0
    %v2233 = vadd.f32 %v2190, %v2232
    %v2234 = vpop.f32.mrb[0].mxu0
    %v2235 = vadd.f32 %v2192, %v2234
    %v2236 = vpop.f32.mrb[0].mxu0
    %v2237 = vadd.f32 %v2194, %v2236
    %v2238 = vpop.f32.mrb[0].mxu0
    %v2239 = vadd.f32 %v2196, %v2238
    %2240 = vdwg.mxu0
    %2241 = vmatprep.subr.bf16.mxu0 %v1330
    %2242 = vmatpush1.bf16.msra.mxu0 %v1329
    %2243 = vmatprep.subr.bf16.mxu0 %v1342
    %2244 = vmatpush1.bf16.msra.mxu0 %v1341
    %2245 = vmatprep.subr.bf16.mxu0 %v1354
    %2246 = vmatpush1.bf16.msra.mxu0 %v1353
    %2247 = vmatprep.subr.bf16.mxu0 %v1366
    %2248 = vmatpush1.bf16.msra.mxu0 %v1365
    %2249 = vmatprep.subr.bf16.mxu0 %v1378
    %2250 = vmatpush1.bf16.msra.mxu0 %v1377
    %2251 = vmatprep.subr.bf16.mxu0 %v1390
    %2252 = vmatpush1.bf16.msra.mxu0 %v1389
    %2253 = vmatprep.subr.bf16.mxu0 %v1402
    %2254 = vmatpush1.bf16.msra.mxu0 %v1401
    %2255 = vmatprep.subr.bf16.mxu0 %v1414
    %2256 = vmatpush1.bf16.msra.mxu0 %v1413
    %2257 = vmatprep.subr.bf16.mxu0 %v1426
    %2258 = vmatpush1.bf16.msra.mxu0 %v1425
    %2259 = vmatprep.subr.bf16.mxu0 %v1438
    %2260 = vmatpush1.bf16.msra.mxu0 %v1437
    %2261 = vmatprep.subr.bf16.mxu0 %v1450
    %2262 = vmatpush1.bf16.msra.mxu0 %v1449
    %2263 = vmatprep.subr.bf16.mxu0 %v1462
    %2264 = vmatpush1.bf16.msra.mxu0 %v1461
    %2265 = vmatprep.subr.bf16.mxu0 %v1474
    %2266 = vmatpush1.bf16.msra.mxu0 %v1473
    %2267 = vmatprep.subr.bf16.mxu0 %v1486
    %2268 = vmatpush1.bf16.msra.mxu0 %v1485
    %2269 = vmatprep.subr.bf16.mxu0 %v1498
    %2270 = vmatpush1.bf16.msra.mxu0 %v1497
    %2271 = vmatprep.subr.bf16.mxu0 %v1510
    %2272 = vmatpush1.bf16.msra.mxu0 %v1509
    %2273 = vmatprep.mubr.bf16.mxu0 %v103
    %2274 = vmatmul.mubr.bf16.gmra.mrb[0].mxu0 %v102
    %v2275 = vpop.f32.mrb[0].mxu0
    %v2276 = vadd.f32 %v432, %v2275
    %v2277 = vpop.f32.mrb[0].mxu0
    %v2278 = vadd.f32 %v436, %v2277
    %v2279 = vpop.f32.mrb[0].mxu0
    %v2280 = vadd.f32 %v432, %v2279
    %v2281 = vpop.f32.mrb[0].mxu0
    %v2282 = vadd.f32 %v436, %v2281
    %2283 = vdwg.mxu0
    %2284 = vmatprep.subr.bf16.mxu0 %v1522
    %2285 = vmatpush1.bf16.msra.mxu0 %v1521
    %2286 = vmatprep.subr.bf16.mxu0 %v1534
    %2287 = vmatpush1.bf16.msra.mxu0 %v1533
    %2288 = vmatprep.subr.bf16.mxu0 %v1546
    %2289 = vmatpush1.bf16.msra.mxu0 %v1545
    %2290 = vmatprep.subr.bf16.mxu0 %v1558
    %2291 = vmatpush1.bf16.msra.mxu0 %v1557
    %2292 = vmatprep.subr.bf16.mxu0 %v1570
    %2293 = vmatpush1.bf16.msra.mxu0 %v1569
    %2294 = vmatprep.subr.bf16.mxu0 %v1582
    %2295 = vmatpush1.bf16.msra.mxu0 %v1581
    %2296 = vmatprep.subr.bf16.mxu0 %v1594
    %2297 = vmatpush1.bf16.msra.mxu0 %v1593
    %2298 = vmatprep.subr.bf16.mxu0 %v1606
    %2299 = vmatpush1.bf16.msra.mxu0 %v1605
    %2300 = vmatprep.subr.bf16.mxu0 0
    %2301 = vmatpush1.bf16.msra.mxu0 0
    %2302 = vmatprep.subr.bf16.mxu0 0
    %2303 = vmatpush1.bf16.msra.mxu0 0
    %2304 = vmatprep.subr.bf16.mxu0 0
    %2305 = vmatpush1.bf16.msra.mxu0 0
    %2306 = vmatprep.subr.bf16.mxu0 0
    %2307 = vmatpush1.bf16.msra.mxu0 0
    %2308 = vmatprep.subr.bf16.mxu0 0
    %2309 = vmatpush1.bf16.msra.mxu0 0
    %2310 = vmatprep.subr.bf16.mxu0 0
    %2311 = vmatpush1.bf16.msra.mxu0 0
    %2312 = vmatprep.subr.bf16.mxu0 0
    %2313 = vmatpush1.bf16.msra.mxu0 0
    %2314 = vmatprep.subr.bf16.mxu0 0
    %2315 = vmatpush1.bf16.msra.mxu0 0
    %2316 = vmatprep.mubr.bf16.mxu0 0
    %2317 = vmatmul.mubr.bf16.gmra.mrb[0].mxu0 %v104
    %v2318 = vpop.f32.mrb[0].mxu0
    %v2319 = vadd.f32 %v2276, %v2318
    %v2320 = vpop.f32.mrb[0].mxu0
    %v2321 = vadd.f32 %v2278, %v2320
    %v2322 = vpop.f32.mrb[0].mxu0
    %v2323 = vadd.f32 %v2280, %v2322
    %v2324 = vpop.f32.mrb[0].mxu0
    %v2325 = vadd.f32 %v2282, %v2324
    %2326 = vdwg.mxu0
    %2327 = vmatprep.subr.bf16.mxu0 %v1332
    %2328 = vmatpush1.bf16.msra.mxu0 %v1331
    %2329 = vmatprep.subr.bf16.mxu0 %v1344
    %2330 = vmatpush1.bf16.msra.mxu0 %v1343
    %2331 = vmatprep.subr.bf16.mxu0 %v1356
    %2332 = vmatpush1.bf16.msra.mxu0 %v1355
    %2333 = vmatprep.subr.bf16.mxu0 %v1368
    %2334 = vmatpush1.bf16.msra.mxu0 %v1367
    %2335 = vmatprep.subr.bf16.mxu0 %v1380
    %2336 = vmatpush1.bf16.msra.mxu0 %v1379
    %2337 = vmatprep.subr.bf16.mxu0 %v1392
    %2338 = vmatpush1.bf16.msra.mxu0 %v1391
    %2339 = vmatprep.subr.bf16.mxu0 %v1404
    %2340 = vmatpush1.bf16.msra.mxu0 %v1403
    %2341 = vmatprep.subr.bf16.mxu0 %v1416
    %2342 = vmatpush1.bf16.msra.mxu0 %v1415
    %2343 = vmatprep.subr.bf16.mxu0 %v1428
    %2344 = vmatpush1.bf16.msra.mxu0 %v1427
    %2345 = vmatprep.subr.bf16.mxu0 %v1440
    %2346 = vmatpush1.bf16.msra.mxu0 %v1439
    %2347 = vmatprep.subr.bf16.mxu0 %v1452
    %2348 = vmatpush1.bf16.msra.mxu0 %v1451
    %2349 = vmatprep.subr.bf16.mxu0 %v1464
    %2350 = vmatpush1.bf16.msra.mxu0 %v1463
    %2351 = vmatprep.subr.bf16.mxu0 %v1476
    %2352 = vmatpush1.bf16.msra.mxu0 %v1475
    %2353 = vmatprep.subr.bf16.mxu0 %v1488
    %2354 = vmatpush1.bf16.msra.mxu0 %v1487
    %2355 = vmatprep.subr.bf16.mxu0 %v1500
    %2356 = vmatpush1.bf16.msra.mxu0 %v1499
    %2357 = vmatprep.subr.bf16.mxu0 %v1512
    %2358 = vmatpush1.bf16.msra.mxu0 %v1511
    %2359 = vmatprep.mubr.bf16.mxu0 %v103
    %2360 = vmatmul.mubr.bf16.gmra.mrb[0].mxu0 %v102
    %v2361 = vpop.f32.mrb[0].mxu0
    %v2362 = vadd.f32 %v440, %v2361
    %v2363 = vpop.f32.mrb[0].mxu0
    %v2364 = vadd.f32 %v444, %v2363
    %v2365 = vpop.f32.mrb[0].mxu0
    %v2366 = vadd.f32 %v440, %v2365
    %v2367 = vpop.f32.mrb[0].mxu0
    %v2368 = vadd.f32 %v444, %v2367
    %2369 = vdwg.mxu0
    %2370 = vmatprep.subr.bf16.mxu0 %v1524
    %2371 = vmatpush1.bf16.msra.mxu0 %v1523
    %2372 = vmatprep.subr.bf16.mxu0 %v1536
    %2373 = vmatpush1.bf16.msra.mxu0 %v1535
    %2374 = vmatprep.subr.bf16.mxu0 %v1548
    %2375 = vmatpush1.bf16.msra.mxu0 %v1547
    %2376 = vmatprep.subr.bf16.mxu0 %v1560
    %2377 = vmatpush1.bf16.msra.mxu0 %v1559
    %2378 = vmatprep.subr.bf16.mxu0 %v1572
    %2379 = vmatpush1.bf16.msra.mxu0 %v1571
    %2380 = vmatprep.subr.bf16.mxu0 %v1584
    %2381 = vmatpush1.bf16.msra.mxu0 %v1583
    %2382 = vmatprep.subr.bf16.mxu0 %v1596
    %2383 = vmatpush1.bf16.msra.mxu0 %v1595
    %2384 = vmatprep.subr.bf16.mxu0 %v1608
    %2385 = vmatpush1.bf16.msra.mxu0 %v1607
    %2386 = vmatprep.subr.bf16.mxu0 0
    %2387 = vmatpush1.bf16.msra.mxu0 0
    %2388 = vmatprep.subr.bf16.mxu0 0
    %2389 = vmatpush1.bf16.msra.mxu0 0
    %2390 = vmatprep.subr.bf16.mxu0 0
    %2391 = vmatpush1.bf16.msra.mxu0 0
    %2392 = vmatprep.subr.bf16.mxu0 0
    %2393 = vmatpush1.bf16.msra.mxu0 0
    %2394 = vmatprep.subr.bf16.mxu0 0
    %2395 = vmatpush1.bf16.msra.mxu0 0
    %2396 = vmatprep.subr.bf16.mxu0 0
    %2397 = vmatpush1.bf16.msra.mxu0 0
    %2398 = vmatprep.subr.bf16.mxu0 0
    %2399 = vmatpush1.bf16.msra.mxu0 0
    %2400 = vmatprep.subr.bf16.mxu0 0
    %2401 = vmatpush1.bf16.msra.mxu0 0
    %2402 = vmatprep.mubr.bf16.mxu0 0
    %2403 = vmatmul.mubr.bf16.gmra.mrb[0].mxu0 %v104
    %v2404 = vpop.f32.mrb[0].mxu0
    %v2405 = vadd.f32 %v2362, %v2404
    %v2406 = vpop.f32.mrb[0].mxu0
    %v2407 = vadd.f32 %v2364, %v2406
    %v2408 = vpop.f32.mrb[0].mxu0
    %v2409 = vadd.f32 %v2366, %v2408
    %v2410 = vpop.f32.mrb[0].mxu0
    %v2411 = vadd.f32 %v2368, %v2410
    %2412 = vdwg.mxu0
    %v2413 = vmax.f32 %v1975, 0.0
    %v2414 = vmax.f32 %v1977, 0.0
    %v2415 = vmax.f32 %v2061, 0.0
    %v2416 = vmax.f32 %v2063, 0.0
    %v2417 = vmax.f32 %v2147, 0.0
    %v2418 = vmax.f32 %v2149, 0.0
    %v2419 = vmax.f32 %v2233, 0.0
    %v2420 = vmax.f32 %v2235, 0.0
    %v2421 = vmax.f32 %v2319, 0.0
    %v2422 = vmax.f32 %v2321, 0.0
    %v2423 = vmax.f32 %v2405, 0.0
    %v2424 = vmax.f32 %v2407, 0.0
    %v2425 = vmax.f32 %v1979, 0.0
    %v2426 = vmax.f32 %v1981, 0.0
    %v2427 = vmax.f32 %v2065, 0.0
    %v2428 = vmax.f32 %v2067, 0.0
    %v2429 = vmax.f32 %v2151, 0.0
    %v2430 = vmax.f32 %v2153, 0.0
    %v2431 = vmax.f32 %v2237, 0.0
    %v2432 = vmax.f32 %v2239, 0.0
    %v2433 = vmax.f32 %v2323, 0.0
    %v2434 = vmax.f32 %v2325, 0.0
    %v2435 = vmax.f32 %v2409, 0.0
    %v2436 = vmax.f32 %v2411, 0.0
    %v2437 = vld [vmem:[#allocation2] sm:$0xff]
    %v2438 = vld [vmem:[#allocation2 + $0x8] sm:$0xff]
    %v2439 = vld [vmem:[#allocation2 + $0x10] sm:$0xff]
    %v2440 = vld [vmem:[#allocation2 + $0x18] sm:$0xff]
    %v2441 = vld [vmem:[#allocation2 + $0x20] sm:$0xff]
    %v2442 = vld [vmem:[#allocation2 + $0x28] sm:$0xff]
    %v2443 = vpack.c.bf16 %v2425, %v2413
    %v2444 = vpack.c.bf16 %v2426, %v2414
    %v2445 = vpack.c.bf16 %v2427, %v2415
    %v2446 = vpack.c.bf16 %v2428, %v2416
    %v2447 = vpack.c.bf16 %v2429, %v2417
    %v2448 = vpack.c.bf16 %v2430, %v2418
    %v2449 = vpack.c.bf16 %v2431, %v2419
    %v2450 = vpack.c.bf16 %v2432, %v2420
    %v2451 = vpack.c.bf16 %v2433, %v2421
    %v2452 = vpack.c.bf16 %v2434, %v2422
    %v2453 = vpack.c.bf16 %v2435, %v2423
    %v2454 = vpack.c.bf16 %v2436, %v2424
    %v2455 = vld [vmem:[#allocation9] sm:$0xff]
    %v2456 = vld [vmem:[#allocation9 + $0x8] sm:$0xf]
    %v2457 = vld [vmem:[#allocation9 + $0xc] sm:$0xff]
    %v2458 = vld [vmem:[#allocation9 + $0x14] sm:$0xf]
    %v2459 = vld [vmem:[#allocation9 + $0x18] sm:$0xff]
    %v2460 = vld [vmem:[#allocation9 + $0x20] sm:$0xf]
    %v2461 = vld [vmem:[#allocation9 + $0x24] sm:$0xff]
    %v2462 = vld [vmem:[#allocation9 + $0x2c] sm:$0xf]
    %v2463 = vld [vmem:[#allocation9 + $0x30] sm:$0xff]
    %v2464 = vld [vmem:[#allocation9 + $0x38] sm:$0xf]
    %v2465 = vld [vmem:[#allocation9 + $0x3c] sm:$0xff]
    %v2466 = vld [vmem:[#allocation9 + $0x44] sm:$0xf]
    %v2467 = vld [vmem:[#allocation9 + $0x48] sm:$0xff]
    %v2468 = vld [vmem:[#allocation9 + $0x50] sm:$0xf]
    %v2469 = vld [vmem:[#allocation9 + $0x54] sm:$0xff]
    %v2470 = vld [vmem:[#allocation9 + $0x5c] sm:$0xf]
    %v2471 = vld [vmem:[#allocation9 + $0x60] sm:$0xff]
    %v2472 = vld [vmem:[#allocation9 + $0x68] sm:$0xf]
    %v2473 = vld [vmem:[#allocation9 + $0x6c] sm:$0xff]
    %v2474 = vld [vmem:[#allocation9 + $0x74] sm:$0xf]
    %v2475 = vld [vmem:[#allocation9 + $0x78] sm:$0xff]
    %v2476 = vld [vmem:[#allocation9 + $0x80] sm:$0xf]
    %v2477 = vld [vmem:[#allocation9 + $0x84] sm:$0xff]
    %v2478 = vld [vmem:[#allocation9 + $0x8c] sm:$0xf]
    %v2479 = vld [vmem:[#allocation9 + $0x90] sm:$0xff]
    %v2480 = vld [vmem:[#allocation9 + $0x98] sm:$0xf]
    %v2481 = vld [vmem:[#allocation9 + $0x9c] sm:$0xff]
    %v2482 = vld [vmem:[#allocation9 + $0xa4] sm:$0xf]
    %v2483 = vld [vmem:[#allocation9 + $0xa8] sm:$0xff]
    %v2484 = vld [vmem:[#allocation9 + $0xb0] sm:$0xf]
    %v2485 = vld [vmem:[#allocation9 + $0xb4] sm:$0xff]
    %v2486 = vld [vmem:[#allocation9 + $0xbc] sm:$0xf]
    %v2487 = vld [vmem:[#allocation9 + $0xc0] sm:$0xff]
    %v2488 = vld [vmem:[#allocation9 + $0xc8] sm:$0xf]
    %v2489 = vld [vmem:[#allocation9 + $0xcc] sm:$0xff]
    %v2490 = vld [vmem:[#allocation9 + $0xd4] sm:$0xf]
    %v2491 = vld [vmem:[#allocation9 + $0xd8] sm:$0xff]
    %v2492 = vld [vmem:[#allocation9 + $0xe0] sm:$0xf]
    %v2493 = vld [vmem:[#allocation9 + $0xe4] sm:$0xff]
    %v2494 = vld [vmem:[#allocation9 + $0xec] sm:$0xf]
    %v2495 = vld [vmem:[#allocation9 + $0xf0] sm:$0xff]
    %v2496 = vld [vmem:[#allocation9 + $0xf8] sm:$0xf]
    %v2497 = vld [vmem:[#allocation9 + $0xfc] sm:$0xff]
    %v2498 = vld [vmem:[#allocation9 + $0x104] sm:$0xf]
    %v2499 = vld [vmem:[#allocation9 + $0x108] sm:$0xff]
    %v2500 = vld [vmem:[#allocation9 + $0x110] sm:$0xf]
    %v2501 = vld [vmem:[#allocation9 + $0x114] sm:$0xff]
    %v2502 = vld [vmem:[#allocation9 + $0x11c] sm:$0xf]
    %v2503 = vld [vmem:[#allocation9 + $0x120] sm:$0xff]
    %v2504 = vld [vmem:[#allocation9 + $0x128] sm:$0xf]
    %v2505 = vld [vmem:[#allocation9 + $0x12c] sm:$0xff]
    %v2506 = vld [vmem:[#allocation9 + $0x134] sm:$0xf]
    %v2507 = vld [vmem:[#allocation9 + $0x138] sm:$0xff]
    %v2508 = vld [vmem:[#allocation9 + $0x140] sm:$0xf]
    %v2509 = vld [vmem:[#allocation9 + $0x144] sm:$0xff]
    %v2510 = vld [vmem:[#allocation9 + $0x14c] sm:$0xf]
    %v2511 = vld [vmem:[#allocation9 + $0x150] sm:$0xff]
    %v2512 = vld [vmem:[#allocation9 + $0x158] sm:$0xf]
    %v2513 = vld [vmem:[#allocation9 + $0x15c] sm:$0xff]
    %v2514 = vld [vmem:[#allocation9 + $0x164] sm:$0xf]
    %v2515 = vld [vmem:[#allocation9 + $0x168] sm:$0xff]
    %v2516 = vld [vmem:[#allocation9 + $0x170] sm:$0xf]
    %v2517 = vld [vmem:[#allocation9 + $0x174] sm:$0xff]
    %v2518 = vld [vmem:[#allocation9 + $0x17c] sm:$0xf]
    %v2519 = vld [vmem:[#allocation9 + $0x180] sm:$0xff]
    %v2520 = vld [vmem:[#allocation9 + $0x188] sm:$0xf]
    %v2521 = vld [vmem:[#allocation9 + $0x18c] sm:$0xff]
    %v2522 = vld [vmem:[#allocation9 + $0x194] sm:$0xf]
    %v2523 = vld [vmem:[#allocation9 + $0x198] sm:$0xff]
    %v2524 = vld [vmem:[#allocation9 + $0x1a0] sm:$0xf]
    %v2525 = vld [vmem:[#allocation9 + $0x1a4] sm:$0xff]
    %v2526 = vld [vmem:[#allocation9 + $0x1ac] sm:$0xf]
    %v2527 = vld [vmem:[#allocation9 + $0x1b0] sm:$0xff]
    %v2528 = vld [vmem:[#allocation9 + $0x1b8] sm:$0xf]
    %v2529 = vld [vmem:[#allocation9 + $0x1bc] sm:$0xff]
    %v2530 = vld [vmem:[#allocation9 + $0x1c4] sm:$0xf]
    %v2531 = vld [vmem:[#allocation9 + $0x1c8] sm:$0xff]
    %v2532 = vld [vmem:[#allocation9 + $0x1d0] sm:$0xf]
    %v2533 = vld [vmem:[#allocation9 + $0x1d4] sm:$0xff]
    %v2534 = vld [vmem:[#allocation9 + $0x1dc] sm:$0xf]
    %v2535 = vld [vmem:[#allocation9 + $0x1e0] sm:$0xff]
    %v2536 = vld [vmem:[#allocation9 + $0x1e8] sm:$0xf]
    %v2537 = vld [vmem:[#allocation9 + $0x1ec] sm:$0xff]
    %v2538 = vld [vmem:[#allocation9 + $0x1f4] sm:$0xf]
    %v2539 = vld [vmem:[#allocation9 + $0x1f8] sm:$0xff]
    %v2540 = vld [vmem:[#allocation9 + $0x200] sm:$0xf]
    %v2541 = vld [vmem:[#allocation9 + $0x204] sm:$0xff]
    %v2542 = vld [vmem:[#allocation9 + $0x20c] sm:$0xf]
    %v2543 = vld [vmem:[#allocation9 + $0x210] sm:$0xff]
    %v2544 = vld [vmem:[#allocation9 + $0x218] sm:$0xf]
    %v2545 = vld [vmem:[#allocation9 + $0x21c] sm:$0xff]
    %v2546 = vld [vmem:[#allocation9 + $0x224] sm:$0xf]
    %v2547 = vld [vmem:[#allocation9 + $0x228] sm:$0xff]
    %v2548 = vld [vmem:[#allocation9 + $0x230] sm:$0xf]
    %v2549 = vld [vmem:[#allocation9 + $0x234] sm:$0xff]
    %v2550 = vld [vmem:[#allocation9 + $0x23c] sm:$0xf]
    %v2551 = vld [vmem:[#allocation9 + $0x240] sm:$0xff]
    %v2552 = vld [vmem:[#allocation9 + $0x248] sm:$0xf]
    %v2553 = vld [vmem:[#allocation9 + $0x24c] sm:$0xff]
    %v2554 = vld [vmem:[#allocation9 + $0x254] sm:$0xf]
    %v2555 = vld [vmem:[#allocation9 + $0x258] sm:$0xff]
    %v2556 = vld [vmem:[#allocation9 + $0x260] sm:$0xf]
    %v2557 = vld [vmem:[#allocation9 + $0x264] sm:$0xff]
    %v2558 = vld [vmem:[#allocation9 + $0x26c] sm:$0xf]
    %v2559 = vld [vmem:[#allocation9 + $0x270] sm:$0xff]
    %v2560 = vld [vmem:[#allocation9 + $0x278] sm:$0xf]
    %v2561 = vld [vmem:[#allocation9 + $0x27c] sm:$0xff]
    %v2562 = vld [vmem:[#allocation9 + $0x284] sm:$0xf]
    %v2563 = vld [vmem:[#allocation9 + $0x288] sm:$0xff]
    %v2564 = vld [vmem:[#allocation9 + $0x290] sm:$0xf]
    %v2565 = vld [vmem:[#allocation9 + $0x294] sm:$0xff]
    %v2566 = vld [vmem:[#allocation9 + $0x29c] sm:$0xf]
    %v2567 = vld [vmem:[#allocation9 + $0x2a0] sm:$0xff]
    %v2568 = vld [vmem:[#allocation9 + $0x2a8] sm:$0xf]
    %v2569 = vld [vmem:[#allocation9 + $0x2ac] sm:$0xff]
    %v2570 = vld [vmem:[#allocation9 + $0x2b4] sm:$0xf]
    %v2571 = vld [vmem:[#allocation9 + $0x2b8] sm:$0xff]
    %v2572 = vld [vmem:[#allocation9 + $0x2c0] sm:$0xf]
    %v2573 = vld [vmem:[#allocation9 + $0x2c4] sm:$0xff]
    %v2574 = vld [vmem:[#allocation9 + $0x2cc] sm:$0xf]
    %v2575 = vld [vmem:[#allocation9 + $0x2d0] sm:$0xff]
    %v2576 = vld [vmem:[#allocation9 + $0x2d8] sm:$0xf]
    %v2577 = vld [vmem:[#allocation9 + $0x2dc] sm:$0xff]
    %v2578 = vld [vmem:[#allocation9 + $0x2e4] sm:$0xf]
    %v2579 = vld [vmem:[#allocation9 + $0x2e8] sm:$0xff]
    %v2580 = vld [vmem:[#allocation9 + $0x2f0] sm:$0xf]
    %v2581 = vld [vmem:[#allocation9 + $0x2f4] sm:$0xff]
    %v2582 = vld [vmem:[#allocation9 + $0x2fc] sm:$0xf]
    %v2583 = vld [vmem:[#allocation9 + $0x300] sm:$0xff]
    %v2584 = vld [vmem:[#allocation9 + $0x308] sm:$0xf]
    %v2585 = vld [vmem:[#allocation9 + $0x30c] sm:$0xff]
    %v2586 = vld [vmem:[#allocation9 + $0x314] sm:$0xf]
    %v2587 = vld [vmem:[#allocation9 + $0x318] sm:$0xff]
    %v2588 = vld [vmem:[#allocation9 + $0x320] sm:$0xf]
    %v2589 = vld [vmem:[#allocation9 + $0x324] sm:$0xff]
    %v2590 = vld [vmem:[#allocation9 + $0x32c] sm:$0xf]
    %v2591 = vld [vmem:[#allocation9 + $0x330] sm:$0xff]
    %v2592 = vld [vmem:[#allocation9 + $0x338] sm:$0xf]
    %v2593 = vld [vmem:[#allocation9 + $0x33c] sm:$0xff]
    %v2594 = vld [vmem:[#allocation9 + $0x344] sm:$0xf]
    %v2595 = vld [vmem:[#allocation9 + $0x348] sm:$0xff]
    %v2596 = vld [vmem:[#allocation9 + $0x350] sm:$0xf]
    %v2597 = vld [vmem:[#allocation9 + $0x354] sm:$0xff]
    %v2598 = vld [vmem:[#allocation9 + $0x35c] sm:$0xf]
    %v2599 = vld [vmem:[#allocation9 + $0x360] sm:$0xff]
    %v2600 = vld [vmem:[#allocation9 + $0x368] sm:$0xf]
    %v2601 = vld [vmem:[#allocation9 + $0x36c] sm:$0xff]
    %v2602 = vld [vmem:[#allocation9 + $0x374] sm:$0xf]
    %v2603 = vld [vmem:[#allocation9 + $0x378] sm:$0xff]
    %v2604 = vld [vmem:[#allocation9 + $0x380] sm:$0xf]
    %v2605 = vld [vmem:[#allocation9 + $0x384] sm:$0xff]
    %v2606 = vld [vmem:[#allocation9 + $0x38c] sm:$0xf]
    %v2607 = vld [vmem:[#allocation9 + $0x390] sm:$0xff]
    %v2608 = vld [vmem:[#allocation9 + $0x398] sm:$0xf]
    %v2609 = vld [vmem:[#allocation9 + $0x39c] sm:$0xff]
    %v2610 = vld [vmem:[#allocation9 + $0x3a4] sm:$0xf]
    %v2611 = vld [vmem:[#allocation9 + $0x3a8] sm:$0xff]
    %v2612 = vld [vmem:[#allocation9 + $0x3b0] sm:$0xf]
    %v2613 = vld [vmem:[#allocation9 + $0x3b4] sm:$0xff]
    %v2614 = vld [vmem:[#allocation9 + $0x3bc] sm:$0xf]
    %v2615 = vld [vmem:[#allocation9 + $0x3c0] sm:$0xff]
    %v2616 = vld [vmem:[#allocation9 + $0x3c8] sm:$0xf]
    %v2617 = vld [vmem:[#allocation9 + $0x3cc] sm:$0xff]
    %v2618 = vld [vmem:[#allocation9 + $0x3d4] sm:$0xf]
    %v2619 = vld [vmem:[#allocation9 + $0x3d8] sm:$0xff]
    %v2620 = vld [vmem:[#allocation9 + $0x3e0] sm:$0xf]
    %v2621 = vld [vmem:[#allocation9 + $0x3e4] sm:$0xff]
    %v2622 = vld [vmem:[#allocation9 + $0x3ec] sm:$0xf]
    %v2623 = vld [vmem:[#allocation9 + $0x3f0] sm:$0xff]
    %v2624 = vld [vmem:[#allocation9 + $0x3f8] sm:$0xf]
    %v2625 = vld [vmem:[#allocation9 + $0x3fc] sm:$0xff]
    %v2626 = vld [vmem:[#allocation9 + $0x404] sm:$0xf]
    %v2627 = vld [vmem:[#allocation9 + $0x408] sm:$0xff]
    %v2628 = vld [vmem:[#allocation9 + $0x410] sm:$0xf]
    %v2629 = vld [vmem:[#allocation9 + $0x414] sm:$0xff]
    %v2630 = vld [vmem:[#allocation9 + $0x41c] sm:$0xf]
    %v2631 = vld [vmem:[#allocation9 + $0x420] sm:$0xff]
    %v2632 = vld [vmem:[#allocation9 + $0x428] sm:$0xf]
    %v2633 = vld [vmem:[#allocation9 + $0x42c] sm:$0xff]
    %v2634 = vld [vmem:[#allocation9 + $0x434] sm:$0xf]
    %v2635 = vld [vmem:[#allocation9 + $0x438] sm:$0xff]
    %v2636 = vld [vmem:[#allocation9 + $0x440] sm:$0xf]
    %v2637 = vld [vmem:[#allocation9 + $0x444] sm:$0xff]
    %v2638 = vld [vmem:[#allocation9 + $0x44c] sm:$0xf]
    %v2639 = vld [vmem:[#allocation9 + $0x450] sm:$0xff]
    %v2640 = vld [vmem:[#allocation9 + $0x458] sm:$0xf]
    %v2641 = vld [vmem:[#allocation9 + $0x45c] sm:$0xff]
    %v2642 = vld [vmem:[#allocation9 + $0x464] sm:$0xf]
    %v2643 = vld [vmem:[#allocation9 + $0x468] sm:$0xff]
    %v2644 = vld [vmem:[#allocation9 + $0x470] sm:$0xf]
    %v2645 = vld [vmem:[#allocation9 + $0x474] sm:$0xff]
    %v2646 = vld [vmem:[#allocation9 + $0x47c] sm:$0xf]
    %v2647 = vld [vmem:[#allocation9 + $0x480] sm:$0xff]
    %v2648 = vld [vmem:[#allocation9 + $0x488] sm:$0xf]
    %v2649 = vld [vmem:[#allocation9 + $0x48c] sm:$0xff]
    %v2650 = vld [vmem:[#allocation9 + $0x494] sm:$0xf]
    %v2651 = vld [vmem:[#allocation9 + $0x498] sm:$0xff]
    %v2652 = vld [vmem:[#allocation9 + $0x4a0] sm:$0xf]
    %v2653 = vld [vmem:[#allocation9 + $0x4a4] sm:$0xff]
    %v2654 = vld [vmem:[#allocation9 + $0x4ac] sm:$0xf]
    %v2655 = vld [vmem:[#allocation9 + $0x4b0] sm:$0xff]
    %v2656 = vld [vmem:[#allocation9 + $0x4b8] sm:$0xf]
    %v2657 = vld [vmem:[#allocation9 + $0x4bc] sm:$0xff]
    %v2658 = vld [vmem:[#allocation9 + $0x4c4] sm:$0xf]
    %v2659 = vld [vmem:[#allocation9 + $0x4c8] sm:$0xff]
    %v2660 = vld [vmem:[#allocation9 + $0x4d0] sm:$0xf]
    %v2661 = vld [vmem:[#allocation9 + $0x4d4] sm:$0xff]
    %v2662 = vld [vmem:[#allocation9 + $0x4dc] sm:$0xf]
    %v2663 = vld [vmem:[#allocation9 + $0x4e0] sm:$0xff]
    %v2664 = vld [vmem:[#allocation9 + $0x4e8] sm:$0xf]
    %v2665 = vld [vmem:[#allocation9 + $0x4ec] sm:$0xff]
    %v2666 = vld [vmem:[#allocation9 + $0x4f4] sm:$0xf]
    %v2667 = vld [vmem:[#allocation9 + $0x4f8] sm:$0xff]
    %v2668 = vld [vmem:[#allocation9 + $0x500] sm:$0xf]
    %v2669 = vld [vmem:[#allocation9 + $0x504] sm:$0xff]
    %v2670 = vld [vmem:[#allocation9 + $0x50c] sm:$0xf]
    %v2671 = vld [vmem:[#allocation9 + $0x510] sm:$0xff]
    %v2672 = vld [vmem:[#allocation9 + $0x518] sm:$0xf]
    %v2673 = vld [vmem:[#allocation9 + $0x51c] sm:$0xff]
    %v2674 = vld [vmem:[#allocation9 + $0x524] sm:$0xf]
    %v2675 = vld [vmem:[#allocation9 + $0x528] sm:$0xff]
    %v2676 = vld [vmem:[#allocation9 + $0x530] sm:$0xf]
    %v2677 = vld [vmem:[#allocation9 + $0x534] sm:$0xff]
    %v2678 = vld [vmem:[#allocation9 + $0x53c] sm:$0xf]
    %v2679 = vld [vmem:[#allocation9 + $0x540] sm:$0xff]
    %v2680 = vld [vmem:[#allocation9 + $0x548] sm:$0xf]
    %v2681 = vld [vmem:[#allocation9 + $0x54c] sm:$0xff]
    %v2682 = vld [vmem:[#allocation9 + $0x554] sm:$0xf]
    %v2683 = vld [vmem:[#allocation9 + $0x558] sm:$0xff]
    %v2684 = vld [vmem:[#allocation9 + $0x560] sm:$0xf]
    %v2685 = vld [vmem:[#allocation9 + $0x564] sm:$0xff]
    %v2686 = vld [vmem:[#allocation9 + $0x56c] sm:$0xf]
    %v2687 = vld [vmem:[#allocation9 + $0x570] sm:$0xff]
    %v2688 = vld [vmem:[#allocation9 + $0x578] sm:$0xf]
    %v2689 = vld [vmem:[#allocation9 + $0x57c] sm:$0xff]
    %v2690 = vld [vmem:[#allocation9 + $0x584] sm:$0xf]
    %v2691 = vld [vmem:[#allocation9 + $0x588] sm:$0xff]
    %v2692 = vld [vmem:[#allocation9 + $0x590] sm:$0xf]
    %v2693 = vld [vmem:[#allocation9 + $0x594] sm:$0xff]
    %v2694 = vld [vmem:[#allocation9 + $0x59c] sm:$0xf]
    %v2695 = vld [vmem:[#allocation9 + $0x5a0] sm:$0xff]
    %v2696 = vld [vmem:[#allocation9 + $0x5a8] sm:$0xf]
    %v2697 = vld [vmem:[#allocation9 + $0x5ac] sm:$0xff]
    %v2698 = vld [vmem:[#allocation9 + $0x5b4] sm:$0xf]
    %v2699 = vld [vmem:[#allocation9 + $0x5b8] sm:$0xff]
    %v2700 = vld [vmem:[#allocation9 + $0x5c0] sm:$0xf]
    %v2701 = vld [vmem:[#allocation9 + $0x5c4] sm:$0xff]
    %v2702 = vld [vmem:[#allocation9 + $0x5cc] sm:$0xf]
    %v2703 = vld [vmem:[#allocation9 + $0x5d0] sm:$0xff]
    %v2704 = vld [vmem:[#allocation9 + $0x5d8] sm:$0xf]
    %v2705 = vld [vmem:[#allocation9 + $0x5dc] sm:$0xff]
    %v2706 = vld [vmem:[#allocation9 + $0x5e4] sm:$0xf]
    %v2707 = vld [vmem:[#allocation9 + $0x5e8] sm:$0xff]
    %v2708 = vld [vmem:[#allocation9 + $0x5f0] sm:$0xf]
    %v2709 = vld [vmem:[#allocation9 + $0x5f4] sm:$0xff]
    %v2710 = vld [vmem:[#allocation9 + $0x5fc] sm:$0xf]
    %v2711 = vld [vmem:[#allocation9 + $0x600] sm:$0xff]
    %v2712 = vld [vmem:[#allocation9 + $0x608] sm:$0xf]
    %v2713 = vld [vmem:[#allocation9 + $0x60c] sm:$0xff]
    %v2714 = vld [vmem:[#allocation9 + $0x614] sm:$0xf]
    %v2715 = vld [vmem:[#allocation9 + $0x618] sm:$0xff]
    %v2716 = vld [vmem:[#allocation9 + $0x620] sm:$0xf]
    %v2717 = vld [vmem:[#allocation9 + $0x624] sm:$0xff]
    %v2718 = vld [vmem:[#allocation9 + $0x62c] sm:$0xf]
    %v2719 = vld [vmem:[#allocation9 + $0x630] sm:$0xff]
    %v2720 = vld [vmem:[#allocation9 + $0x638] sm:$0xf]
    %v2721 = vld [vmem:[#allocation9 + $0x63c] sm:$0xff]
    %v2722 = vld [vmem:[#allocation9 + $0x644] sm:$0xf]
    %v2723 = vld [vmem:[#allocation9 + $0x648] sm:$0xff]
    %v2724 = vld [vmem:[#allocation9 + $0x650] sm:$0xf]
    %v2725 = vld [vmem:[#allocation9 + $0x654] sm:$0xff]
    %v2726 = vld [vmem:[#allocation9 + $0x65c] sm:$0xf]
    %v2727 = vld [vmem:[#allocation9 + $0x660] sm:$0xff]
    %v2728 = vld [vmem:[#allocation9 + $0x668] sm:$0xf]
    %v2729 = vld [vmem:[#allocation9 + $0x66c] sm:$0xff]
    %v2730 = vld [vmem:[#allocation9 + $0x674] sm:$0xf]
    %v2731 = vld [vmem:[#allocation9 + $0x678] sm:$0xff]
    %v2732 = vld [vmem:[#allocation9 + $0x680] sm:$0xf]
    %v2733 = vld [vmem:[#allocation9 + $0x684] sm:$0xff]
    %v2734 = vld [vmem:[#allocation9 + $0x68c] sm:$0xf]
    %v2735 = vld [vmem:[#allocation9 + $0x690] sm:$0xff]
    %v2736 = vld [vmem:[#allocation9 + $0x698] sm:$0xf]
    %v2737 = vld [vmem:[#allocation9 + $0x69c] sm:$0xff]
    %v2738 = vld [vmem:[#allocation9 + $0x6a4] sm:$0xf]
    %v2739 = vld [vmem:[#allocation9 + $0x6a8] sm:$0xff]
    %v2740 = vld [vmem:[#allocation9 + $0x6b0] sm:$0xf]
    %v2741 = vld [vmem:[#allocation9 + $0x6b4] sm:$0xff]
    %v2742 = vld [vmem:[#allocation9 + $0x6bc] sm:$0xf]
    %v2743 = vld [vmem:[#allocation9 + $0x6c0] sm:$0xff]
    %v2744 = vld [vmem:[#allocation9 + $0x6c8] sm:$0xf]
    %v2745 = vld [vmem:[#allocation9 + $0x6cc] sm:$0xff]
    %v2746 = vld [vmem:[#allocation9 + $0x6d4] sm:$0xf]
    %v2747 = vld [vmem:[#allocation9 + $0x6d8] sm:$0xff]
    %v2748 = vld [vmem:[#allocation9 + $0x6e0] sm:$0xf]
    %v2749 = vld [vmem:[#allocation9 + $0x6e4] sm:$0xff]
    %v2750 = vld [vmem:[#allocation9 + $0x6ec] sm:$0xf]
    %v2751 = vld [vmem:[#allocation9 + $0x6f0] sm:$0xff]
    %v2752 = vld [vmem:[#allocation9 + $0x6f8] sm:$0xf]
    %v2753 = vld [vmem:[#allocation9 + $0x6fc] sm:$0xff]
    %v2754 = vld [vmem:[#allocation9 + $0x704] sm:$0xf]
    %v2755 = vld [vmem:[#allocation9 + $0x708] sm:$0xff]
    %v2756 = vld [vmem:[#allocation9 + $0x710] sm:$0xf]
    %v2757 = vld [vmem:[#allocation9 + $0x714] sm:$0xff]
    %v2758 = vld [vmem:[#allocation9 + $0x71c] sm:$0xf]
    %v2759 = vld [vmem:[#allocation9 + $0x720] sm:$0xff]
    %v2760 = vld [vmem:[#allocation9 + $0x728] sm:$0xf]
    %v2761 = vld [vmem:[#allocation9 + $0x72c] sm:$0xff]
    %v2762 = vld [vmem:[#allocation9 + $0x734] sm:$0xf]
    %v2763 = vld [vmem:[#allocation9 + $0x738] sm:$0xff]
    %v2764 = vld [vmem:[#allocation9 + $0x740] sm:$0xf]
    %v2765 = vld [vmem:[#allocation9 + $0x744] sm:$0xff]
    %v2766 = vld [vmem:[#allocation9 + $0x74c] sm:$0xf]
    %v2767 = vld [vmem:[#allocation9 + $0x750] sm:$0xff]
    %v2768 = vld [vmem:[#allocation9 + $0x758] sm:$0xf]
    %v2769 = vld [vmem:[#allocation9 + $0x75c] sm:$0xff]
    %v2770 = vld [vmem:[#allocation9 + $0x764] sm:$0xf]
    %v2771 = vld [vmem:[#allocation9 + $0x768] sm:$0xff]
    %v2772 = vld [vmem:[#allocation9 + $0x770] sm:$0xf]
    %v2773 = vld [vmem:[#allocation9 + $0x774] sm:$0xff]
    %v2774 = vld [vmem:[#allocation9 + $0x77c] sm:$0xf]
    %v2775 = vld [vmem:[#allocation9 + $0x780] sm:$0xff]
    %v2776 = vld [vmem:[#allocation9 + $0x788] sm:$0xf]
    %v2777 = vld [vmem:[#allocation9 + $0x78c] sm:$0xff]
    %v2778 = vld [vmem:[#allocation9 + $0x794] sm:$0xf]
    %v2779 = vld [vmem:[#allocation9 + $0x798] sm:$0xff]
    %v2780 = vld [vmem:[#allocation9 + $0x7a0] sm:$0xf]
    %v2781 = vld [vmem:[#allocation9 + $0x7a4] sm:$0xff]
    %v2782 = vld [vmem:[#allocation9 + $0x7ac] sm:$0xf]
    %v2783 = vld [vmem:[#allocation9 + $0x7b0] sm:$0xff]
    %v2784 = vld [vmem:[#allocation9 + $0x7b8] sm:$0xf]
    %v2785 = vld [vmem:[#allocation9 + $0x7bc] sm:$0xff]
    %v2786 = vld [vmem:[#allocation9 + $0x7c4] sm:$0xf]
    %v2787 = vld [vmem:[#allocation9 + $0x7c8] sm:$0xff]
    %v2788 = vld [vmem:[#allocation9 + $0x7d0] sm:$0xf]
    %v2789 = vld [vmem:[#allocation9 + $0x7d4] sm:$0xff]
    %v2790 = vld [vmem:[#allocation9 + $0x7dc] sm:$0xf]
    %v2791 = vld [vmem:[#allocation9 + $0x7e0] sm:$0xff]
    %v2792 = vld [vmem:[#allocation9 + $0x7e8] sm:$0xf]
    %v2793 = vld [vmem:[#allocation9 + $0x7ec] sm:$0xff]
    %v2794 = vld [vmem:[#allocation9 + $0x7f4] sm:$0xf]
    %v2795 = vld [vmem:[#allocation9 + $0x7f8] sm:$0xff]
    %v2796 = vld [vmem:[#allocation9 + $0x800] sm:$0xf]
    %v2797 = vld [vmem:[#allocation9 + $0x804] sm:$0xff]
    %v2798 = vld [vmem:[#allocation9 + $0x80c] sm:$0xf]
    %v2799 = vld [vmem:[#allocation9 + $0x810] sm:$0xff]
    %v2800 = vld [vmem:[#allocation9 + $0x818] sm:$0xf]
    %v2801 = vld [vmem:[#allocation9 + $0x81c] sm:$0xff]
    %v2802 = vld [vmem:[#allocation9 + $0x824] sm:$0xf]
    %v2803 = vld [vmem:[#allocation9 + $0x828] sm:$0xff]
    %v2804 = vld [vmem:[#allocation9 + $0x830] sm:$0xf]
    %v2805 = vld [vmem:[#allocation9 + $0x834] sm:$0xff]
    %v2806 = vld [vmem:[#allocation9 + $0x83c] sm:$0xf]
    %v2807 = vld [vmem:[#allocation9 + $0x840] sm:$0xff]
    %v2808 = vld [vmem:[#allocation9 + $0x848] sm:$0xf]
    %v2809 = vld [vmem:[#allocation9 + $0x84c] sm:$0xff]
    %v2810 = vld [vmem:[#allocation9 + $0x854] sm:$0xf]
    %v2811 = vld [vmem:[#allocation9 + $0x858] sm:$0xff]
    %v2812 = vld [vmem:[#allocation9 + $0x860] sm:$0xf]
    %v2813 = vld [vmem:[#allocation9 + $0x864] sm:$0xff]
    %v2814 = vld [vmem:[#allocation9 + $0x86c] sm:$0xf]
    %v2815 = vld [vmem:[#allocation9 + $0x870] sm:$0xff]
    %v2816 = vld [vmem:[#allocation9 + $0x878] sm:$0xf]
    %v2817 = vld [vmem:[#allocation9 + $0x87c] sm:$0xff]
    %v2818 = vld [vmem:[#allocation9 + $0x884] sm:$0xf]
    %v2819 = vld [vmem:[#allocation9 + $0x888] sm:$0xff]
    %v2820 = vld [vmem:[#allocation9 + $0x890] sm:$0xf]
    %v2821 = vld [vmem:[#allocation9 + $0x894] sm:$0xff]
    %v2822 = vld [vmem:[#allocation9 + $0x89c] sm:$0xf]
    %v2823 = vld [vmem:[#allocation9 + $0x8a0] sm:$0xff]
    %v2824 = vld [vmem:[#allocation9 + $0x8a8] sm:$0xf]
    %v2825 = vld [vmem:[#allocation9 + $0x8ac] sm:$0xff]
    %v2826 = vld [vmem:[#allocation9 + $0x8b4] sm:$0xf]
    %v2827 = vld [vmem:[#allocation9 + $0x8b8] sm:$0xff]
    %v2828 = vld [vmem:[#allocation9 + $0x8c0] sm:$0xf]
    %v2829 = vld [vmem:[#allocation9 + $0x8c4] sm:$0xff]
    %v2830 = vld [vmem:[#allocation9 + $0x8cc] sm:$0xf]
    %v2831 = vld [vmem:[#allocation9 + $0x8d0] sm:$0xff]
    %v2832 = vld [vmem:[#allocation9 + $0x8d8] sm:$0xf]
    %v2833 = vld [vmem:[#allocation9 + $0x8dc] sm:$0xff]
    %v2834 = vld [vmem:[#allocation9 + $0x8e4] sm:$0xf]
    %v2835 = vld [vmem:[#allocation9 + $0x8e8] sm:$0xff]
    %v2836 = vld [vmem:[#allocation9 + $0x8f0] sm:$0xf]
    %v2837 = vld [vmem:[#allocation9 + $0x8f4] sm:$0xff]
    %v2838 = vld [vmem:[#allocation9 + $0x8fc] sm:$0xf]
    %v3223 = vunpack.c.l.b16 %v2455
    %v3224 = vunpack.c.h.b16 %v2455
    %v3225 = vunpack.c.l.b16 %v2456
    %v3226 = vunpack.c.l.b16 %v2457
    %v3227 = vunpack.c.h.b16 %v2457
    %v3228 = vunpack.c.l.b16 %v2458
    %v3229 = vunpack.c.l.b16 %v2459
    %v3230 = vunpack.c.h.b16 %v2459
    %v3231 = vunpack.c.l.b16 %v2460
    %v3232 = vunpack.c.l.b16 %v2461
    %v3233 = vunpack.c.h.b16 %v2461
    %v3234 = vunpack.c.l.b16 %v2462
    %v3235 = vunpack.c.l.b16 %v2463
    %v3236 = vunpack.c.h.b16 %v2463
    %v3237 = vunpack.c.l.b16 %v2464
    %v3238 = vunpack.c.l.b16 %v2465
    %v3239 = vunpack.c.h.b16 %v2465
    %v3240 = vunpack.c.l.b16 %v2466
    %v3241 = vunpack.c.l.b16 %v2467
    %v3242 = vunpack.c.h.b16 %v2467
    %v3243 = vunpack.c.l.b16 %v2468
    %v3244 = vunpack.c.l.b16 %v2469
    %v3245 = vunpack.c.h.b16 %v2469
    %v3246 = vunpack.c.l.b16 %v2470
    %v3247 = vunpack.c.l.b16 %v2471
    %v3248 = vunpack.c.h.b16 %v2471
    %v3249 = vunpack.c.l.b16 %v2472
    %v3250 = vunpack.c.l.b16 %v2473
    %v3251 = vunpack.c.h.b16 %v2473
    %v3252 = vunpack.c.l.b16 %v2474
    %v3253 = vunpack.c.l.b16 %v2475
    %v3254 = vunpack.c.h.b16 %v2475
    %v3255 = vunpack.c.l.b16 %v2476
    %v3256 = vunpack.c.l.b16 %v2477
    %v3257 = vunpack.c.h.b16 %v2477
    %v3258 = vunpack.c.l.b16 %v2478
    %v3259 = vunpack.c.l.b16 %v2479
    %v3260 = vunpack.c.h.b16 %v2479
    %v3261 = vunpack.c.l.b16 %v2480
    %v3262 = vunpack.c.l.b16 %v2481
    %v3263 = vunpack.c.h.b16 %v2481
    %v3264 = vunpack.c.l.b16 %v2482
    %v3265 = vunpack.c.l.b16 %v2483
    %v3266 = vunpack.c.h.b16 %v2483
    %v3267 = vunpack.c.l.b16 %v2484
    %v3268 = vunpack.c.l.b16 %v2485
    %v3269 = vunpack.c.h.b16 %v2485
    %v3270 = vunpack.c.l.b16 %v2486
    %v3271 = vunpack.c.l.b16 %v2487
    %v3272 = vunpack.c.h.b16 %v2487
    %v3273 = vunpack.c.l.b16 %v2488
    %v3274 = vunpack.c.l.b16 %v2489
    %v3275 = vunpack.c.h.b16 %v2489
    %v3276 = vunpack.c.l.b16 %v2490
    %v3277 = vunpack.c.l.b16 %v2491
    %v3278 = vunpack.c.h.b16 %v2491
    %v3279 = vunpack.c.l.b16 %v2492
    %v3280 = vunpack.c.l.b16 %v2493
    %v3281 = vunpack.c.h.b16 %v2493
    %v3282 = vunpack.c.l.b16 %v2494
    %v3283 = vunpack.c.l.b16 %v2495
    %v3284 = vunpack.c.h.b16 %v2495
    %v3285 = vunpack.c.l.b16 %v2496
    %v3286 = vunpack.c.l.b16 %v2497
    %v3287 = vunpack.c.h.b16 %v2497
    %v3288 = vunpack.c.l.b16 %v2498
    %v3289 = vunpack.c.l.b16 %v2499
    %v3290 = vunpack.c.h.b16 %v2499
    %v3291 = vunpack.c.l.b16 %v2500
    %v3292 = vunpack.c.l.b16 %v2501
    %v3293 = vunpack.c.h.b16 %v2501
    %v3294 = vunpack.c.l.b16 %v2502
    %v3295 = vunpack.c.l.b16 %v2503
    %v3296 = vunpack.c.h.b16 %v2503
    %v3297 = vunpack.c.l.b16 %v2504
    %v3298 = vunpack.c.l.b16 %v2505
    %v3299 = vunpack.c.h.b16 %v2505
    %v3300 = vunpack.c.l.b16 %v2506
    %v3301 = vunpack.c.l.b16 %v2507
    %v3302 = vunpack.c.h.b16 %v2507
    %v3303 = vunpack.c.l.b16 %v2508
    %v3304 = vunpack.c.l.b16 %v2509
    %v3305 = vunpack.c.h.b16 %v2509
    %v3306 = vunpack.c.l.b16 %v2510
    %v3307 = vunpack.c.l.b16 %v2511
    %v3308 = vunpack.c.h.b16 %v2511
    %v3309 = vunpack.c.l.b16 %v2512
    %v3310 = vunpack.c.l.b16 %v2513
    %v3311 = vunpack.c.h.b16 %v2513
    %v3312 = vunpack.c.l.b16 %v2514
    %v3313 = vunpack.c.l.b16 %v2515
    %v3314 = vunpack.c.h.b16 %v2515
    %v3315 = vunpack.c.l.b16 %v2516
    %v3316 = vunpack.c.l.b16 %v2517
    %v3317 = vunpack.c.h.b16 %v2517
    %v3318 = vunpack.c.l.b16 %v2518
    %v3319 = vunpack.c.l.b16 %v2519
    %v3320 = vunpack.c.h.b16 %v2519
    %v3321 = vunpack.c.l.b16 %v2520
    %v3322 = vunpack.c.l.b16 %v2521
    %v3323 = vunpack.c.h.b16 %v2521
    %v3324 = vunpack.c.l.b16 %v2522
    %v3325 = vunpack.c.l.b16 %v2523
    %v3326 = vunpack.c.h.b16 %v2523
    %v3327 = vunpack.c.l.b16 %v2524
    %v3328 = vunpack.c.l.b16 %v2525
    %v3329 = vunpack.c.h.b16 %v2525
    %v3330 = vunpack.c.l.b16 %v2526
    %v3331 = vunpack.c.l.b16 %v2527
    %v3332 = vunpack.c.h.b16 %v2527
    %v3333 = vunpack.c.l.b16 %v2528
    %v3334 = vunpack.c.l.b16 %v2529
    %v3335 = vunpack.c.h.b16 %v2529
    %v3336 = vunpack.c.l.b16 %v2530
    %v3337 = vunpack.c.l.b16 %v2531
    %v3338 = vunpack.c.h.b16 %v2531
    %v3339 = vunpack.c.l.b16 %v2532
    %v3340 = vunpack.c.l.b16 %v2533
    %v3341 = vunpack.c.h.b16 %v2533
    %v3342 = vunpack.c.l.b16 %v2534
    %v3343 = vunpack.c.l.b16 %v2535
    %v3344 = vunpack.c.h.b16 %v2535
    %v3345 = vunpack.c.l.b16 %v2536
    %v3346 = vunpack.c.l.b16 %v2537
    %v3347 = vunpack.c.h.b16 %v2537
    %v3348 = vunpack.c.l.b16 %v2538
    %v3349 = vunpack.c.l.b16 %v2539
    %v3350 = vunpack.c.h.b16 %v2539
    %v3351 = vunpack.c.l.b16 %v2540
    %v3352 = vunpack.c.l.b16 %v2541
    %v3353 = vunpack.c.h.b16 %v2541
    %v3354 = vunpack.c.l.b16 %v2542
    %v3355 = vunpack.c.l.b16 %v2543
    %v3356 = vunpack.c.h.b16 %v2543
    %v3357 = vunpack.c.l.b16 %v2544
    %v3358 = vunpack.c.l.b16 %v2545
    %v3359 = vunpack.c.h.b16 %v2545
    %v3360 = vunpack.c.l.b16 %v2546
    %v3361 = vunpack.c.l.b16 %v2547
    %v3362 = vunpack.c.h.b16 %v2547
    %v3363 = vunpack.c.l.b16 %v2548
    %v3364 = vunpack.c.l.b16 %v2549
    %v3365 = vunpack.c.h.b16 %v2549
    %v3366 = vunpack.c.l.b16 %v2550
    %v3367 = vunpack.c.l.b16 %v2551
    %v3368 = vunpack.c.h.b16 %v2551
    %v3369 = vunpack.c.l.b16 %v2552
    %v3370 = vunpack.c.l.b16 %v2553
    %v3371 = vunpack.c.h.b16 %v2553
    %v3372 = vunpack.c.l.b16 %v2554
    %v3373 = vunpack.c.l.b16 %v2555
    %v3374 = vunpack.c.h.b16 %v2555
    %v3375 = vunpack.c.l.b16 %v2556
    %v3376 = vunpack.c.l.b16 %v2557
    %v3377 = vunpack.c.h.b16 %v2557
    %v3378 = vunpack.c.l.b16 %v2558
    %v3379 = vunpack.c.l.b16 %v2559
    %v3380 = vunpack.c.h.b16 %v2559
    %v3381 = vunpack.c.l.b16 %v2560
    %v3382 = vunpack.c.l.b16 %v2561
    %v3383 = vunpack.c.h.b16 %v2561
    %v3384 = vunpack.c.l.b16 %v2562
    %v3385 = vunpack.c.l.b16 %v2563
    %v3386 = vunpack.c.h.b16 %v2563
    %v3387 = vunpack.c.l.b16 %v2564
    %v3388 = vunpack.c.l.b16 %v2565
    %v3389 = vunpack.c.h.b16 %v2565
    %v3390 = vunpack.c.l.b16 %v2566
    %v3391 = vunpack.c.l.b16 %v2567
    %v3392 = vunpack.c.h.b16 %v2567
    %v3393 = vunpack.c.l.b16 %v2568
    %v3394 = vunpack.c.l.b16 %v2569
    %v3395 = vunpack.c.h.b16 %v2569
    %v3396 = vunpack.c.l.b16 %v2570
    %v3397 = vunpack.c.l.b16 %v2571
    %v3398 = vunpack.c.h.b16 %v2571
    %v3399 = vunpack.c.l.b16 %v2572
    %v3400 = vunpack.c.l.b16 %v2573
    %v3401 = vunpack.c.h.b16 %v2573
    %v3402 = vunpack.c.l.b16 %v2574
    %v3403 = vunpack.c.l.b16 %v2575
    %v3404 = vunpack.c.h.b16 %v2575
    %v3405 = vunpack.c.l.b16 %v2576
    %v3406 = vunpack.c.l.b16 %v2577
    %v3407 = vunpack.c.h.b16 %v2577
    %v3408 = vunpack.c.l.b16 %v2578
    %v3409 = vunpack.c.l.b16 %v2579
    %v3410 = vunpack.c.h.b16 %v2579
    %v3411 = vunpack.c.l.b16 %v2580
    %v3412 = vunpack.c.l.b16 %v2581
    %v3413 = vunpack.c.h.b16 %v2581
    %v3414 = vunpack.c.l.b16 %v2582
    %v3415 = vunpack.c.l.b16 %v2583
    %v3416 = vunpack.c.h.b16 %v2583
    %v3417 = vunpack.c.l.b16 %v2584
    %v3418 = vunpack.c.l.b16 %v2585
    %v3419 = vunpack.c.h.b16 %v2585
    %v3420 = vunpack.c.l.b16 %v2586
    %v3421 = vunpack.c.l.b16 %v2587
    %v3422 = vunpack.c.h.b16 %v2587
    %v3423 = vunpack.c.l.b16 %v2588
    %v3424 = vunpack.c.l.b16 %v2589
    %v3425 = vunpack.c.h.b16 %v2589
    %v3426 = vunpack.c.l.b16 %v2590
    %v3427 = vunpack.c.l.b16 %v2591
    %v3428 = vunpack.c.h.b16 %v2591
    %v3429 = vunpack.c.l.b16 %v2592
    %v3430 = vunpack.c.l.b16 %v2593
    %v3431 = vunpack.c.h.b16 %v2593
    %v3432 = vunpack.c.l.b16 %v2594
    %v3433 = vunpack.c.l.b16 %v2595
    %v3434 = vunpack.c.h.b16 %v2595
    %v3435 = vunpack.c.l.b16 %v2596
    %v3436 = vunpack.c.l.b16 %v2597
    %v3437 = vunpack.c.h.b16 %v2597
    %v3438 = vunpack.c.l.b16 %v2598
    %v3439 = vunpack.c.l.b16 %v2599
    %v3440 = vunpack.c.h.b16 %v2599
    %v3441 = vunpack.c.l.b16 %v2600
    %v3442 = vunpack.c.l.b16 %v2601
    %v3443 = vunpack.c.h.b16 %v2601
    %v3444 = vunpack.c.l.b16 %v2602
    %v3445 = vunpack.c.l.b16 %v2603
    %v3446 = vunpack.c.h.b16 %v2603
    %v3447 = vunpack.c.l.b16 %v2604
    %v3448 = vunpack.c.l.b16 %v2605
    %v3449 = vunpack.c.h.b16 %v2605
    %v3450 = vunpack.c.l.b16 %v2606
    %v3451 = vunpack.c.l.b16 %v2607
    %v3452 = vunpack.c.h.b16 %v2607
    %v3453 = vunpack.c.l.b16 %v2608
    %v3454 = vunpack.c.l.b16 %v2609
    %v3455 = vunpack.c.h.b16 %v2609
    %v3456 = vunpack.c.l.b16 %v2610
    %v3457 = vunpack.c.l.b16 %v2611
    %v3458 = vunpack.c.h.b16 %v2611
    %v3459 = vunpack.c.l.b16 %v2612
    %v3460 = vunpack.c.l.b16 %v2613
    %v3461 = vunpack.c.h.b16 %v2613
    %v3462 = vunpack.c.l.b16 %v2614
    %v3463 = vunpack.c.l.b16 %v2615
    %v3464 = vunpack.c.h.b16 %v2615
    %v3465 = vunpack.c.l.b16 %v2616
    %v3466 = vunpack.c.l.b16 %v2617
    %v3467 = vunpack.c.h.b16 %v2617
    %v3468 = vunpack.c.l.b16 %v2618
    %v3469 = vunpack.c.l.b16 %v2619
    %v3470 = vunpack.c.h.b16 %v2619
    %v3471 = vunpack.c.l.b16 %v2620
    %v3472 = vunpack.c.l.b16 %v2621
    %v3473 = vunpack.c.h.b16 %v2621
    %v3474 = vunpack.c.l.b16 %v2622
    %v3475 = vunpack.c.l.b16 %v2623
    %v3476 = vunpack.c.h.b16 %v2623
    %v3477 = vunpack.c.l.b16 %v2624
    %v3478 = vunpack.c.l.b16 %v2625
    %v3479 = vunpack.c.h.b16 %v2625
    %v3480 = vunpack.c.l.b16 %v2626
    %v3481 = vunpack.c.l.b16 %v2627
    %v3482 = vunpack.c.h.b16 %v2627
    %v3483 = vunpack.c.l.b16 %v2628
    %v3484 = vunpack.c.l.b16 %v2629
    %v3485 = vunpack.c.h.b16 %v2629
    %v3486 = vunpack.c.l.b16 %v2630
    %v3487 = vunpack.c.l.b16 %v2631
    %v3488 = vunpack.c.h.b16 %v2631
    %v3489 = vunpack.c.l.b16 %v2632
    %v3490 = vunpack.c.l.b16 %v2633
    %v3491 = vunpack.c.h.b16 %v2633
    %v3492 = vunpack.c.l.b16 %v2634
    %v3493 = vunpack.c.l.b16 %v2635
    %v3494 = vunpack.c.h.b16 %v2635
    %v3495 = vunpack.c.l.b16 %v2636
    %v3496 = vunpack.c.l.b16 %v2637
    %v3497 = vunpack.c.h.b16 %v2637
    %v3498 = vunpack.c.l.b16 %v2638
    %v3499 = vunpack.c.l.b16 %v2639
    %v3500 = vunpack.c.h.b16 %v2639
    %v3501 = vunpack.c.l.b16 %v2640
    %v3502 = vunpack.c.l.b16 %v2641
    %v3503 = vunpack.c.h.b16 %v2641
    %v3504 = vunpack.c.l.b16 %v2642
    %v3505 = vunpack.c.l.b16 %v2643
    %v3506 = vunpack.c.h.b16 %v2643
    %v3507 = vunpack.c.l.b16 %v2644
    %v3508 = vunpack.c.l.b16 %v2645
    %v3509 = vunpack.c.h.b16 %v2645
    %v3510 = vunpack.c.l.b16 %v2646
    %v3511 = vunpack.c.l.b16 %v2647
    %v3512 = vunpack.c.h.b16 %v2647
    %v3513 = vunpack.c.l.b16 %v2648
    %v3514 = vunpack.c.l.b16 %v2649
    %v3515 = vunpack.c.h.b16 %v2649
    %v3516 = vunpack.c.l.b16 %v2650
    %v3517 = vunpack.c.l.b16 %v2651
    %v3518 = vunpack.c.h.b16 %v2651
    %v3519 = vunpack.c.l.b16 %v2652
    %v3520 = vunpack.c.l.b16 %v2653
    %v3521 = vunpack.c.h.b16 %v2653
    %v3522 = vunpack.c.l.b16 %v2654
    %v3523 = vunpack.c.l.b16 %v2655
    %v3524 = vunpack.c.h.b16 %v2655
    %v3525 = vunpack.c.l.b16 %v2656
    %v3526 = vunpack.c.l.b16 %v2657
    %v3527 = vunpack.c.h.b16 %v2657
    %v3528 = vunpack.c.l.b16 %v2658
    %v3529 = vunpack.c.l.b16 %v2659
    %v3530 = vunpack.c.h.b16 %v2659
    %v3531 = vunpack.c.l.b16 %v2660
    %v3532 = vunpack.c.l.b16 %v2661
    %v3533 = vunpack.c.h.b16 %v2661
    %v3534 = vunpack.c.l.b16 %v2662
    %v3535 = vunpack.c.l.b16 %v2663
    %v3536 = vunpack.c.h.b16 %v2663
    %v3537 = vunpack.c.l.b16 %v2664
    %v3538 = vunpack.c.l.b16 %v2665
    %v3539 = vunpack.c.h.b16 %v2665
    %v3540 = vunpack.c.l.b16 %v2666
    %v3541 = vunpack.c.l.b16 %v2667
    %v3542 = vunpack.c.h.b16 %v2667
    %v3543 = vunpack.c.l.b16 %v2668
    %v3544 = vunpack.c.l.b16 %v2669
    %v3545 = vunpack.c.h.b16 %v2669
    %v3546 = vunpack.c.l.b16 %v2670
    %v3547 = vunpack.c.l.b16 %v2671
    %v3548 = vunpack.c.h.b16 %v2671
    %v3549 = vunpack.c.l.b16 %v2672
    %v3550 = vunpack.c.l.b16 %v2673
    %v3551 = vunpack.c.h.b16 %v2673
    %v3552 = vunpack.c.l.b16 %v2674
    %v3553 = vunpack.c.l.b16 %v2675
    %v3554 = vunpack.c.h.b16 %v2675
    %v3555 = vunpack.c.l.b16 %v2676
    %v3556 = vunpack.c.l.b16 %v2677
    %v3557 = vunpack.c.h.b16 %v2677
    %v3558 = vunpack.c.l.b16 %v2678
    %v3559 = vunpack.c.l.b16 %v2679
    %v3560 = vunpack.c.h.b16 %v2679
    %v3561 = vunpack.c.l.b16 %v2680
    %v3562 = vunpack.c.l.b16 %v2681
    %v3563 = vunpack.c.h.b16 %v2681
    %v3564 = vunpack.c.l.b16 %v2682
    %v3565 = vunpack.c.l.b16 %v2683
    %v3566 = vunpack.c.h.b16 %v2683
    %v3567 = vunpack.c.l.b16 %v2684
    %v3568 = vunpack.c.l.b16 %v2685
    %v3569 = vunpack.c.h.b16 %v2685
    %v3570 = vunpack.c.l.b16 %v2686
    %v3571 = vunpack.c.l.b16 %v2687
    %v3572 = vunpack.c.h.b16 %v2687
    %v3573 = vunpack.c.l.b16 %v2688
    %v3574 = vunpack.c.l.b16 %v2689
    %v3575 = vunpack.c.h.b16 %v2689
    %v3576 = vunpack.c.l.b16 %v2690
    %v3577 = vunpack.c.l.b16 %v2691
    %v3578 = vunpack.c.h.b16 %v2691
    %v3579 = vunpack.c.l.b16 %v2692
    %v3580 = vunpack.c.l.b16 %v2693
    %v3581 = vunpack.c.h.b16 %v2693
    %v3582 = vunpack.c.l.b16 %v2694
    %v3583 = vunpack.c.l.b16 %v2695
    %v3584 = vunpack.c.h.b16 %v2695
    %v3585 = vunpack.c.l.b16 %v2696
    %v3586 = vunpack.c.l.b16 %v2697
    %v3587 = vunpack.c.h.b16 %v2697
    %v3588 = vunpack.c.l.b16 %v2698
    %v3589 = vunpack.c.l.b16 %v2699
    %v3590 = vunpack.c.h.b16 %v2699
    %v3591 = vunpack.c.l.b16 %v2700
    %v3592 = vunpack.c.l.b16 %v2701
    %v3593 = vunpack.c.h.b16 %v2701
    %v3594 = vunpack.c.l.b16 %v2702
    %v3595 = vunpack.c.l.b16 %v2703
    %v3596 = vunpack.c.h.b16 %v2703
    %v3597 = vunpack.c.l.b16 %v2704
    %v3598 = vunpack.c.l.b16 %v2705
    %v3599 = vunpack.c.h.b16 %v2705
    %v3600 = vunpack.c.l.b16 %v2706
    %v3601 = vunpack.c.l.b16 %v2707
    %v3602 = vunpack.c.h.b16 %v2707
    %v3603 = vunpack.c.l.b16 %v2708
    %v3604 = vunpack.c.l.b16 %v2709
    %v3605 = vunpack.c.h.b16 %v2709
    %v3606 = vunpack.c.l.b16 %v2710
    %v3607 = vunpack.c.l.b16 %v2711
    %v3608 = vunpack.c.h.b16 %v2711
    %v3609 = vunpack.c.l.b16 %v2712
    %v3610 = vunpack.c.l.b16 %v2713
    %v3611 = vunpack.c.h.b16 %v2713
    %v3612 = vunpack.c.l.b16 %v2714
    %v3613 = vunpack.c.l.b16 %v2715
    %v3614 = vunpack.c.h.b16 %v2715
    %v3615 = vunpack.c.l.b16 %v2716
    %v3616 = vunpack.c.l.b16 %v2717
    %v3617 = vunpack.c.h.b16 %v2717
    %v3618 = vunpack.c.l.b16 %v2718
    %v3619 = vunpack.c.l.b16 %v2719
    %v3620 = vunpack.c.h.b16 %v2719
    %v3621 = vunpack.c.l.b16 %v2720
    %v3622 = vunpack.c.l.b16 %v2721
    %v3623 = vunpack.c.h.b16 %v2721
    %v3624 = vunpack.c.l.b16 %v2722
    %v3625 = vunpack.c.l.b16 %v2723
    %v3626 = vunpack.c.h.b16 %v2723
    %v3627 = vunpack.c.l.b16 %v2724
    %v3628 = vunpack.c.l.b16 %v2725
    %v3629 = vunpack.c.h.b16 %v2725
    %v3630 = vunpack.c.l.b16 %v2726
    %v3631 = vunpack.c.l.b16 %v2727
    %v3632 = vunpack.c.h.b16 %v2727
    %v3633 = vunpack.c.l.b16 %v2728
    %v3634 = vunpack.c.l.b16 %v2729
    %v3635 = vunpack.c.h.b16 %v2729
    %v3636 = vunpack.c.l.b16 %v2730
    %v3637 = vunpack.c.l.b16 %v2731
    %v3638 = vunpack.c.h.b16 %v2731
    %v3639 = vunpack.c.l.b16 %v2732
    %v3640 = vunpack.c.l.b16 %v2733
    %v3641 = vunpack.c.h.b16 %v2733
    %v3642 = vunpack.c.l.b16 %v2734
    %v3643 = vunpack.c.l.b16 %v2735
    %v3644 = vunpack.c.h.b16 %v2735
    %v3645 = vunpack.c.l.b16 %v2736
    %v3646 = vunpack.c.l.b16 %v2737
    %v3647 = vunpack.c.h.b16 %v2737
    %v3648 = vunpack.c.l.b16 %v2738
    %v3649 = vunpack.c.l.b16 %v2739
    %v3650 = vunpack.c.h.b16 %v2739
    %v3651 = vunpack.c.l.b16 %v2740
    %v3652 = vunpack.c.l.b16 %v2741
    %v3653 = vunpack.c.h.b16 %v2741
    %v3654 = vunpack.c.l.b16 %v2742
    %v3655 = vunpack.c.l.b16 %v2743
    %v3656 = vunpack.c.h.b16 %v2743
    %v3657 = vunpack.c.l.b16 %v2744
    %v3658 = vunpack.c.l.b16 %v2745
    %v3659 = vunpack.c.h.b16 %v2745
    %v3660 = vunpack.c.l.b16 %v2746
    %v3661 = vunpack.c.l.b16 %v2747
    %v3662 = vunpack.c.h.b16 %v2747
    %v3663 = vunpack.c.l.b16 %v2748
    %v3664 = vunpack.c.l.b16 %v2749
    %v3665 = vunpack.c.h.b16 %v2749
    %v3666 = vunpack.c.l.b16 %v2750
    %v3667 = vunpack.c.l.b16 %v2751
    %v3668 = vunpack.c.h.b16 %v2751
    %v3669 = vunpack.c.l.b16 %v2752
    %v3670 = vunpack.c.l.b16 %v2753
    %v3671 = vunpack.c.h.b16 %v2753
    %v3672 = vunpack.c.l.b16 %v2754
    %v3673 = vunpack.c.l.b16 %v2755
    %v3674 = vunpack.c.h.b16 %v2755
    %v3675 = vunpack.c.l.b16 %v2756
    %v3676 = vunpack.c.l.b16 %v2757
    %v3677 = vunpack.c.h.b16 %v2757
    %v3678 = vunpack.c.l.b16 %v2758
    %v3679 = vunpack.c.l.b16 %v2759
    %v3680 = vunpack.c.h.b16 %v2759
    %v3681 = vunpack.c.l.b16 %v2760
    %v3682 = vunpack.c.l.b16 %v2761
    %v3683 = vunpack.c.h.b16 %v2761
    %v3684 = vunpack.c.l.b16 %v2762
    %v3685 = vunpack.c.l.b16 %v2763
    %v3686 = vunpack.c.h.b16 %v2763
    %v3687 = vunpack.c.l.b16 %v2764
    %v3688 = vunpack.c.l.b16 %v2765
    %v3689 = vunpack.c.h.b16 %v2765
    %v3690 = vunpack.c.l.b16 %v2766
    %v3691 = vunpack.c.l.b16 %v2767
    %v3692 = vunpack.c.h.b16 %v2767
    %v3693 = vunpack.c.l.b16 %v2768
    %v3694 = vunpack.c.l.b16 %v2769
    %v3695 = vunpack.c.h.b16 %v2769
    %v3696 = vunpack.c.l.b16 %v2770
    %v3697 = vunpack.c.l.b16 %v2771
    %v3698 = vunpack.c.h.b16 %v2771
    %v3699 = vunpack.c.l.b16 %v2772
    %v3700 = vunpack.c.l.b16 %v2773
    %v3701 = vunpack.c.h.b16 %v2773
    %v3702 = vunpack.c.l.b16 %v2774
    %v3703 = vunpack.c.l.b16 %v2775
    %v3704 = vunpack.c.h.b16 %v2775
    %v3705 = vunpack.c.l.b16 %v2776
    %v3706 = vunpack.c.l.b16 %v2777
    %v3707 = vunpack.c.h.b16 %v2777
    %v3708 = vunpack.c.l.b16 %v2778
    %v3709 = vunpack.c.l.b16 %v2779
    %v3710 = vunpack.c.h.b16 %v2779
    %v3711 = vunpack.c.l.b16 %v2780
    %v3712 = vunpack.c.l.b16 %v2781
    %v3713 = vunpack.c.h.b16 %v2781
    %v3714 = vunpack.c.l.b16 %v2782
    %v3715 = vunpack.c.l.b16 %v2783
    %v3716 = vunpack.c.h.b16 %v2783
    %v3717 = vunpack.c.l.b16 %v2784
    %v3718 = vunpack.c.l.b16 %v2785
    %v3719 = vunpack.c.h.b16 %v2785
    %v3720 = vunpack.c.l.b16 %v2786
    %v3721 = vunpack.c.l.b16 %v2787
    %v3722 = vunpack.c.h.b16 %v2787
    %v3723 = vunpack.c.l.b16 %v2788
    %v3724 = vunpack.c.l.b16 %v2789
    %v3725 = vunpack.c.h.b16 %v2789
    %v3726 = vunpack.c.l.b16 %v2790
    %v3727 = vunpack.c.l.b16 %v2791
    %v3728 = vunpack.c.h.b16 %v2791
    %v3729 = vunpack.c.l.b16 %v2792
    %v3730 = vunpack.c.l.b16 %v2793
    %v3731 = vunpack.c.h.b16 %v2793
    %v3732 = vunpack.c.l.b16 %v2794
    %v3733 = vunpack.c.l.b16 %v2795
    %v3734 = vunpack.c.h.b16 %v2795
    %v3735 = vunpack.c.l.b16 %v2796
    %v3736 = vunpack.c.l.b16 %v2797
    %v3737 = vunpack.c.h.b16 %v2797
    %v3738 = vunpack.c.l.b16 %v2798
    %v3739 = vunpack.c.l.b16 %v2799
    %v3740 = vunpack.c.h.b16 %v2799
    %v3741 = vunpack.c.l.b16 %v2800
    %v3742 = vunpack.c.l.b16 %v2801
    %v3743 = vunpack.c.h.b16 %v2801
    %v3744 = vunpack.c.l.b16 %v2802
    %v3745 = vunpack.c.l.b16 %v2803
    %v3746 = vunpack.c.h.b16 %v2803
    %v3747 = vunpack.c.l.b16 %v2804
    %v3748 = vunpack.c.l.b16 %v2805
    %v3749 = vunpack.c.h.b16 %v2805
    %v3750 = vunpack.c.l.b16 %v2806
    %v3751 = vunpack.c.l.b16 %v2807
    %v3752 = vunpack.c.h.b16 %v2807
    %v3753 = vunpack.c.l.b16 %v2808
    %v3754 = vunpack.c.l.b16 %v2809
    %v3755 = vunpack.c.h.b16 %v2809
    %v3756 = vunpack.c.l.b16 %v2810
    %v3757 = vunpack.c.l.b16 %v2811
    %v3758 = vunpack.c.h.b16 %v2811
    %v3759 = vunpack.c.l.b16 %v2812
    %v3760 = vunpack.c.l.b16 %v2813
    %v3761 = vunpack.c.h.b16 %v2813
    %v3762 = vunpack.c.l.b16 %v2814
    %v3763 = vunpack.c.l.b16 %v2815
    %v3764 = vunpack.c.h.b16 %v2815
    %v3765 = vunpack.c.l.b16 %v2816
    %v3766 = vunpack.c.l.b16 %v2817
    %v3767 = vunpack.c.h.b16 %v2817
    %v3768 = vunpack.c.l.b16 %v2818
    %v3769 = vunpack.c.l.b16 %v2819
    %v3770 = vunpack.c.h.b16 %v2819
    %v3771 = vunpack.c.l.b16 %v2820
    %v3772 = vunpack.c.l.b16 %v2821
    %v3773 = vunpack.c.h.b16 %v2821
    %v3774 = vunpack.c.l.b16 %v2822
    %v3775 = vunpack.c.l.b16 %v2823
    %v3776 = vunpack.c.h.b16 %v2823
    %v3777 = vunpack.c.l.b16 %v2824
    %v3778 = vunpack.c.l.b16 %v2825
    %v3779 = vunpack.c.h.b16 %v2825
    %v3780 = vunpack.c.l.b16 %v2826
    %v3781 = vunpack.c.l.b16 %v2827
    %v3782 = vunpack.c.h.b16 %v2827
    %v3783 = vunpack.c.l.b16 %v2828
    %v3784 = vunpack.c.l.b16 %v2829
    %v3785 = vunpack.c.h.b16 %v2829
    %v3786 = vunpack.c.l.b16 %v2830
    %v3787 = vunpack.c.l.b16 %v2831
    %v3788 = vunpack.c.h.b16 %v2831
    %v3789 = vunpack.c.l.b16 %v2832
    %v3790 = vunpack.c.l.b16 %v2833
    %v3791 = vunpack.c.h.b16 %v2833
    %v3792 = vunpack.c.l.b16 %v2834
    %v3793 = vunpack.c.l.b16 %v2835
    %v3794 = vunpack.c.h.b16 %v2835
    %v3795 = vunpack.c.l.b16 %v2836
    %v3796 = vunpack.c.l.b16 %v2837
    %v3797 = vunpack.c.h.b16 %v2837
    %v3798 = vunpack.c.l.b16 %v2838
    %v3799 = vpack.c.b16 %v3226, %v3223
    %v3800 = vpack.c.b16 %v3227, %v3224
    %v3801 = vpack.c.b16 %v3228, %v3225
    %v3802 = vpack.c.b16 %v3232, %v3229
    %v3803 = vpack.c.b16 %v3233, %v3230
    %v3804 = vpack.c.b16 %v3234, %v3231
    %v3805 = vpack.c.b16 %v3238, %v3235
    %v3806 = vpack.c.b16 %v3239, %v3236
    %v3807 = vpack.c.b16 %v3240, %v3237
    %v3808 = vpack.c.b16 %v3244, %v3241
    %v3809 = vpack.c.b16 %v3245, %v3242
    %v3810 = vpack.c.b16 %v3246, %v3243
    %v3811 = vpack.c.b16 %v3250, %v3247
    %v3812 = vpack.c.b16 %v3251, %v3248
    %v3813 = vpack.c.b16 %v3252, %v3249
    %v3814 = vpack.c.b16 %v3256, %v3253
    %v3815 = vpack.c.b16 %v3257, %v3254
    %v3816 = vpack.c.b16 %v3258, %v3255
    %v3817 = vpack.c.b16 %v3262, %v3259
    %v3818 = vpack.c.b16 %v3263, %v3260
    %v3819 = vpack.c.b16 %v3264, %v3261
    %v3820 = vpack.c.b16 %v3268, %v3265
    %v3821 = vpack.c.b16 %v3269, %v3266
    %v3822 = vpack.c.b16 %v3270, %v3267
    %v3823 = vpack.c.b16 %v3274, %v3271
    %v3824 = vpack.c.b16 %v3275, %v3272
    %v3825 = vpack.c.b16 %v3276, %v3273
    %v3826 = vpack.c.b16 %v3280, %v3277
    %v3827 = vpack.c.b16 %v3281, %v3278
    %v3828 = vpack.c.b16 %v3282, %v3279
    %v3829 = vpack.c.b16 %v3286, %v3283
    %v3830 = vpack.c.b16 %v3287, %v3284
    %v3831 = vpack.c.b16 %v3288, %v3285
    %v3832 = vpack.c.b16 %v3292, %v3289
    %v3833 = vpack.c.b16 %v3293, %v3290
    %v3834 = vpack.c.b16 %v3294, %v3291
    %v3835 = vpack.c.b16 %v3298, %v3295
    %v3836 = vpack.c.b16 %v3299, %v3296
    %v3837 = vpack.c.b16 %v3300, %v3297
    %v3838 = vpack.c.b16 %v3304, %v3301
    %v3839 = vpack.c.b16 %v3305, %v3302
    %v3840 = vpack.c.b16 %v3306, %v3303
    %v3841 = vpack.c.b16 %v3310, %v3307
    %v3842 = vpack.c.b16 %v3311, %v3308
    %v3843 = vpack.c.b16 %v3312, %v3309
    %v3844 = vpack.c.b16 %v3316, %v3313
    %v3845 = vpack.c.b16 %v3317, %v3314
    %v3846 = vpack.c.b16 %v3318, %v3315
    %v3847 = vpack.c.b16 %v3322, %v3319
    %v3848 = vpack.c.b16 %v3323, %v3320
    %v3849 = vpack.c.b16 %v3324, %v3321
    %v3850 = vpack.c.b16 %v3328, %v3325
    %v3851 = vpack.c.b16 %v3329, %v3326
    %v3852 = vpack.c.b16 %v3330, %v3327
    %v3853 = vpack.c.b16 %v3334, %v3331
    %v3854 = vpack.c.b16 %v3335, %v3332
    %v3855 = vpack.c.b16 %v3336, %v3333
    %v3856 = vpack.c.b16 %v3340, %v3337
    %v3857 = vpack.c.b16 %v3341, %v3338
    %v3858 = vpack.c.b16 %v3342, %v3339
    %v3859 = vpack.c.b16 %v3346, %v3343
    %v3860 = vpack.c.b16 %v3347, %v3344
    %v3861 = vpack.c.b16 %v3348, %v3345
    %v3862 = vpack.c.b16 %v3352, %v3349
    %v3863 = vpack.c.b16 %v3353, %v3350
    %v3864 = vpack.c.b16 %v3354, %v3351
    %v3865 = vpack.c.b16 %v3358, %v3355
    %v3866 = vpack.c.b16 %v3359, %v3356
    %v3867 = vpack.c.b16 %v3360, %v3357
    %v3868 = vpack.c.b16 %v3364, %v3361
    %v3869 = vpack.c.b16 %v3365, %v3362
    %v3870 = vpack.c.b16 %v3366, %v3363
    %v3871 = vpack.c.b16 %v3370, %v3367
    %v3872 = vpack.c.b16 %v3371, %v3368
    %v3873 = vpack.c.b16 %v3372, %v3369
    %v3874 = vpack.c.b16 %v3376, %v3373
    %v3875 = vpack.c.b16 %v3377, %v3374
    %v3876 = vpack.c.b16 %v3378, %v3375
    %v3877 = vpack.c.b16 %v3382, %v3379
    %v3878 = vpack.c.b16 %v3383, %v3380
    %v3879 = vpack.c.b16 %v3384, %v3381
    %v3880 = vpack.c.b16 %v3388, %v3385
    %v3881 = vpack.c.b16 %v3389, %v3386
    %v3882 = vpack.c.b16 %v3390, %v3387
    %v3883 = vpack.c.b16 %v3394, %v3391
    %v3884 = vpack.c.b16 %v3395, %v3392
    %v3885 = vpack.c.b16 %v3396, %v3393
    %v3886 = vpack.c.b16 %v3400, %v3397
    %v3887 = vpack.c.b16 %v3401, %v3398
    %v3888 = vpack.c.b16 %v3402, %v3399
    %v3889 = vpack.c.b16 %v3406, %v3403
    %v3890 = vpack.c.b16 %v3407, %v3404
    %v3891 = vpack.c.b16 %v3408, %v3405
    %v3892 = vpack.c.b16 %v3412, %v3409
    %v3893 = vpack.c.b16 %v3413, %v3410
    %v3894 = vpack.c.b16 %v3414, %v3411
    %v3895 = vpack.c.b16 %v3418, %v3415
    %v3896 = vpack.c.b16 %v3419, %v3416
    %v3897 = vpack.c.b16 %v3420, %v3417
    %v3898 = vpack.c.b16 %v3424, %v3421
    %v3899 = vpack.c.b16 %v3425, %v3422
    %v3900 = vpack.c.b16 %v3426, %v3423
    %v3901 = vpack.c.b16 %v3430, %v3427
    %v3902 = vpack.c.b16 %v3431, %v3428
    %v3903 = vpack.c.b16 %v3432, %v3429
    %v3904 = vpack.c.b16 %v3436, %v3433
    %v3905 = vpack.c.b16 %v3437, %v3434
    %v3906 = vpack.c.b16 %v3438, %v3435
    %v3907 = vpack.c.b16 %v3442, %v3439
    %v3908 = vpack.c.b16 %v3443, %v3440
    %v3909 = vpack.c.b16 %v3444, %v3441
    %v3910 = vpack.c.b16 %v3448, %v3445
    %v3911 = vpack.c.b16 %v3449, %v3446
    %v3912 = vpack.c.b16 %v3450, %v3447
    %v3913 = vpack.c.b16 %v3454, %v3451
    %v3914 = vpack.c.b16 %v3455, %v3452
    %v3915 = vpack.c.b16 %v3456, %v3453
    %v3916 = vpack.c.b16 %v3460, %v3457
    %v3917 = vpack.c.b16 %v3461, %v3458
    %v3918 = vpack.c.b16 %v3462, %v3459
    %v3919 = vpack.c.b16 %v3466, %v3463
    %v3920 = vpack.c.b16 %v3467, %v3464
    %v3921 = vpack.c.b16 %v3468, %v3465
    %v3922 = vpack.c.b16 %v3472, %v3469
    %v3923 = vpack.c.b16 %v3473, %v3470
    %v3924 = vpack.c.b16 %v3474, %v3471
    %v3925 = vpack.c.b16 %v3478, %v3475
    %v3926 = vpack.c.b16 %v3479, %v3476
    %v3927 = vpack.c.b16 %v3480, %v3477
    %v3928 = vpack.c.b16 %v3484, %v3481
    %v3929 = vpack.c.b16 %v3485, %v3482
    %v3930 = vpack.c.b16 %v3486, %v3483
    %v3931 = vpack.c.b16 %v3490, %v3487
    %v3932 = vpack.c.b16 %v3491, %v3488
    %v3933 = vpack.c.b16 %v3492, %v3489
    %v3934 = vpack.c.b16 %v3496, %v3493
    %v3935 = vpack.c.b16 %v3497, %v3494
    %v3936 = vpack.c.b16 %v3498, %v3495
    %v3937 = vpack.c.b16 %v3502, %v3499
    %v3938 = vpack.c.b16 %v3503, %v3500
    %v3939 = vpack.c.b16 %v3504, %v3501
    %v3940 = vpack.c.b16 %v3508, %v3505
    %v3941 = vpack.c.b16 %v3509, %v3506
    %v3942 = vpack.c.b16 %v3510, %v3507
    %v3943 = vpack.c.b16 %v3514, %v3511
    %v3944 = vpack.c.b16 %v3515, %v3512
    %v3945 = vpack.c.b16 %v3516, %v3513
    %v3946 = vpack.c.b16 %v3520, %v3517
    %v3947 = vpack.c.b16 %v3521, %v3518
    %v3948 = vpack.c.b16 %v3522, %v3519
    %v3949 = vpack.c.b16 %v3526, %v3523
    %v3950 = vpack.c.b16 %v3527, %v3524
    %v3951 = vpack.c.b16 %v3528, %v3525
    %v3952 = vpack.c.b16 %v3532, %v3529
    %v3953 = vpack.c.b16 %v3533, %v3530
    %v3954 = vpack.c.b16 %v3534, %v3531
    %v3955 = vpack.c.b16 %v3538, %v3535
    %v3956 = vpack.c.b16 %v3539, %v3536
    %v3957 = vpack.c.b16 %v3540, %v3537
    %v3958 = vpack.c.b16 %v3544, %v3541
    %v3959 = vpack.c.b16 %v3545, %v3542
    %v3960 = vpack.c.b16 %v3546, %v3543
    %v3961 = vpack.c.b16 %v3550, %v3547
    %v3962 = vpack.c.b16 %v3551, %v3548
    %v3963 = vpack.c.b16 %v3552, %v3549
    %v3964 = vpack.c.b16 %v3556, %v3553
    %v3965 = vpack.c.b16 %v3557, %v3554
    %v3966 = vpack.c.b16 %v3558, %v3555
    %v3967 = vpack.c.b16 %v3562, %v3559
    %v3968 = vpack.c.b16 %v3563, %v3560
    %v3969 = vpack.c.b16 %v3564, %v3561
    %v3970 = vpack.c.b16 %v3568, %v3565
    %v3971 = vpack.c.b16 %v3569, %v3566
    %v3972 = vpack.c.b16 %v3570, %v3567
    %v3973 = vpack.c.b16 %v3574, %v3571
    %v3974 = vpack.c.b16 %v3575, %v3572
    %v3975 = vpack.c.b16 %v3576, %v3573
    %v3976 = vpack.c.b16 %v3580, %v3577
    %v3977 = vpack.c.b16 %v3581, %v3578
    %v3978 = vpack.c.b16 %v3582, %v3579
    %v3979 = vpack.c.b16 %v3586, %v3583
    %v3980 = vpack.c.b16 %v3587, %v3584
    %v3981 = vpack.c.b16 %v3588, %v3585
    %v3982 = vpack.c.b16 %v3592, %v3589
    %v3983 = vpack.c.b16 %v3593, %v3590
    %v3984 = vpack.c.b16 %v3594, %v3591
    %v3985 = vpack.c.b16 %v3598, %v3595
    %v3986 = vpack.c.b16 %v3599, %v3596
    %v3987 = vpack.c.b16 %v3600, %v3597
    %v3988 = vpack.c.b16 %v3604, %v3601
    %v3989 = vpack.c.b16 %v3605, %v3602
    %v3990 = vpack.c.b16 %v3606, %v3603
    %v3991 = vpack.c.b16 %v3610, %v3607
    %v3992 = vpack.c.b16 %v3611, %v3608
    %v3993 = vpack.c.b16 %v3612, %v3609
    %v3994 = vpack.c.b16 %v3616, %v3613
    %v3995 = vpack.c.b16 %v3617, %v3614
    %v3996 = vpack.c.b16 %v3618, %v3615
    %v3997 = vpack.c.b16 %v3622, %v3619
    %v3998 = vpack.c.b16 %v3623, %v3620
    %v3999 = vpack.c.b16 %v3624, %v3621
    %v4000 = vpack.c.b16 %v3628, %v3625
    %v4001 = vpack.c.b16 %v3629, %v3626
    %v4002 = vpack.c.b16 %v3630, %v3627
    %v4003 = vpack.c.b16 %v3634, %v3631
    %v4004 = vpack.c.b16 %v3635, %v3632
    %v4005 = vpack.c.b16 %v3636, %v3633
    %v4006 = vpack.c.b16 %v3640, %v3637
    %v4007 = vpack.c.b16 %v3641, %v3638
    %v4008 = vpack.c.b16 %v3642, %v3639
    %v4009 = vpack.c.b16 %v3646, %v3643
    %v4010 = vpack.c.b16 %v3647, %v3644
    %v4011 = vpack.c.b16 %v3648, %v3645
    %v4012 = vpack.c.b16 %v3652, %v3649
    %v4013 = vpack.c.b16 %v3653, %v3650
    %v4014 = vpack.c.b16 %v3654, %v3651
    %v4015 = vpack.c.b16 %v3658, %v3655
    %v4016 = vpack.c.b16 %v3659, %v3656
    %v4017 = vpack.c.b16 %v3660, %v3657
    %v4018 = vpack.c.b16 %v3664, %v3661
    %v4019 = vpack.c.b16 %v3665, %v3662
    %v4020 = vpack.c.b16 %v3666, %v3663
    %v4021 = vpack.c.b16 %v3670, %v3667
    %v4022 = vpack.c.b16 %v3671, %v3668
    %v4023 = vpack.c.b16 %v3672, %v3669
    %v4024 = vpack.c.b16 %v3676, %v3673
    %v4025 = vpack.c.b16 %v3677, %v3674
    %v4026 = vpack.c.b16 %v3678, %v3675
    %v4027 = vpack.c.b16 %v3682, %v3679
    %v4028 = vpack.c.b16 %v3683, %v3680
    %v4029 = vpack.c.b16 %v3684, %v3681
    %v4030 = vpack.c.b16 %v3688, %v3685
    %v4031 = vpack.c.b16 %v3689, %v3686
    %v4032 = vpack.c.b16 %v3690, %v3687
    %v4033 = vpack.c.b16 %v3694, %v3691
    %v4034 = vpack.c.b16 %v3695, %v3692
    %v4035 = vpack.c.b16 %v3696, %v3693
    %v4036 = vpack.c.b16 %v3700, %v3697
    %v4037 = vpack.c.b16 %v3701, %v3698
    %v4038 = vpack.c.b16 %v3702, %v3699
    %v4039 = vpack.c.b16 %v3706, %v3703
    %v4040 = vpack.c.b16 %v3707, %v3704
    %v4041 = vpack.c.b16 %v3708, %v3705
    %v4042 = vpack.c.b16 %v3712, %v3709
    %v4043 = vpack.c.b16 %v3713, %v3710
    %v4044 = vpack.c.b16 %v3714, %v3711
    %v4045 = vpack.c.b16 %v3718, %v3715
    %v4046 = vpack.c.b16 %v3719, %v3716
    %v4047 = vpack.c.b16 %v3720, %v3717
    %v4048 = vpack.c.b16 %v3724, %v3721
    %v4049 = vpack.c.b16 %v3725, %v3722
    %v4050 = vpack.c.b16 %v3726, %v3723
    %v4051 = vpack.c.b16 %v3730, %v3727
    %v4052 = vpack.c.b16 %v3731, %v3728
    %v4053 = vpack.c.b16 %v3732, %v3729
    %v4054 = vpack.c.b16 %v3736, %v3733
    %v4055 = vpack.c.b16 %v3737, %v3734
    %v4056 = vpack.c.b16 %v3738, %v3735
    %v4057 = vpack.c.b16 %v3742, %v3739
    %v4058 = vpack.c.b16 %v3743, %v3740
    %v4059 = vpack.c.b16 %v3744, %v3741
    %v4060 = vpack.c.b16 %v3748, %v3745
    %v4061 = vpack.c.b16 %v3749, %v3746
    %v4062 = vpack.c.b16 %v3750, %v3747
    %v4063 = vpack.c.b16 %v3754, %v3751
    %v4064 = vpack.c.b16 %v3755, %v3752
    %v4065 = vpack.c.b16 %v3756, %v3753
    %v4066 = vpack.c.b16 %v3760, %v3757
    %v4067 = vpack.c.b16 %v3761, %v3758
    %v4068 = vpack.c.b16 %v3762, %v3759
    %v4069 = vpack.c.b16 %v3766, %v3763
    %v4070 = vpack.c.b16 %v3767, %v3764
    %v4071 = vpack.c.b16 %v3768, %v3765
    %v4072 = vpack.c.b16 %v3772, %v3769
    %v4073 = vpack.c.b16 %v3773, %v3770
    %v4074 = vpack.c.b16 %v3774, %v3771
    %v4075 = vpack.c.b16 %v3778, %v3775
    %v4076 = vpack.c.b16 %v3779, %v3776
    %v4077 = vpack.c.b16 %v3780, %v3777
    %v4078 = vpack.c.b16 %v3784, %v3781
    %v4079 = vpack.c.b16 %v3785, %v3782
    %v4080 = vpack.c.b16 %v3786, %v3783
    %v4081 = vpack.c.b16 %v3790, %v3787
    %v4082 = vpack.c.b16 %v3791, %v3788
    %v4083 = vpack.c.b16 %v3792, %v3789
    %v4084 = vpack.c.b16 %v3796, %v3793
    %v4085 = vpack.c.b16 %v3797, %v3794
    %v4086 = vpack.c.b16 %v3798, %v3795
    %4375 = vmatprep.subr.bf16.mxu0 %v3800
    %4376 = vmatpush1.bf16.msra.mxu0 %v3799
    %4377 = vmatprep.subr.bf16.mxu0 %v3803
    %4378 = vmatpush1.bf16.msra.mxu0 %v3802
    %4379 = vmatprep.subr.bf16.mxu0 %v3806
    %4380 = vmatpush1.bf16.msra.mxu0 %v3805
    %4381 = vmatprep.subr.bf16.mxu0 %v3809
    %4382 = vmatpush1.bf16.msra.mxu0 %v3808
    %4383 = vmatprep.subr.bf16.mxu0 %v3812
    %4384 = vmatpush1.bf16.msra.mxu0 %v3811
    %4385 = vmatprep.subr.bf16.mxu0 %v3815
    %4386 = vmatpush1.bf16.msra.mxu0 %v3814
    %4387 = vmatprep.subr.bf16.mxu0 %v3818
    %4388 = vmatpush1.bf16.msra.mxu0 %v3817
    %4389 = vmatprep.subr.bf16.mxu0 %v3821
    %4390 = vmatpush1.bf16.msra.mxu0 %v3820
    %4391 = vmatprep.subr.bf16.mxu0 %v3824
    %4392 = vmatpush1.bf16.msra.mxu0 %v3823
    %4393 = vmatprep.subr.bf16.mxu0 %v3827
    %4394 = vmatpush1.bf16.msra.mxu0 %v3826
    %4395 = vmatprep.subr.bf16.mxu0 %v3830
    %4396 = vmatpush1.bf16.msra.mxu0 %v3829
    %4397 = vmatprep.subr.bf16.mxu0 %v3833
    %4398 = vmatpush1.bf16.msra.mxu0 %v3832
    %4399 = vmatprep.subr.bf16.mxu0 %v3836
    %4400 = vmatpush1.bf16.msra.mxu0 %v3835
    %4401 = vmatprep.subr.bf16.mxu0 %v3839
    %4402 = vmatpush1.bf16.msra.mxu0 %v3838
    %4403 = vmatprep.subr.bf16.mxu0 %v3842
    %4404 = vmatpush1.bf16.msra.mxu0 %v3841
    %4405 = vmatprep.subr.bf16.mxu0 %v3845
    %4406 = vmatpush1.bf16.msra.mxu0 %v3844
    %4407 = vmatprep.mubr.bf16.mxu0 %v2444
    %4408 = vmatmul.mubr.bf16.gmra.mrb[0].mxu0 %v2443
    %v4409 = vpop.f32.mrb[0].mxu0
    %v4410 = vadd.f32 0.0, %v4409
    %v4411 = vpop.f32.mrb[0].mxu0
    %v4412 = vadd.f32 0.0, %v4411
    %v4413 = vpop.f32.mrb[0].mxu0
    %v4414 = vadd.f32 0.0, %v4413
    %v4415 = vpop.f32.mrb[0].mxu0
    %v4416 = vadd.f32 0.0, %v4415
    %4417 = vdwg.mxu0
    %4418 = vmatprep.subr.bf16.mxu0 %v3848
    %4419 = vmatpush1.bf16.msra.mxu0 %v3847
    %4420 = vmatprep.subr.bf16.mxu0 %v3851
    %4421 = vmatpush1.bf16.msra.mxu0 %v3850
    %4422 = vmatprep.subr.bf16.mxu0 %v3854
    %4423 = vmatpush1.bf16.msra.mxu0 %v3853
    %4424 = vmatprep.subr.bf16.mxu0 %v3857
    %4425 = vmatpush1.bf16.msra.mxu0 %v3856
    %4426 = vmatprep.subr.bf16.mxu0 %v3860
    %4427 = vmatpush1.bf16.msra.mxu0 %v3859
    %4428 = vmatprep.subr.bf16.mxu0 %v3863
    %4429 = vmatpush1.bf16.msra.mxu0 %v3862
    %4430 = vmatprep.subr.bf16.mxu0 %v3866
    %4431 = vmatpush1.bf16.msra.mxu0 %v3865
    %4432 = vmatprep.subr.bf16.mxu0 %v3869
    %4433 = vmatpush1.bf16.msra.mxu0 %v3868
    %4434 = vmatprep.subr.bf16.mxu0 %v3872
    %4435 = vmatpush1.bf16.msra.mxu0 %v3871
    %4436 = vmatprep.subr.bf16.mxu0 %v3875
    %4437 = vmatpush1.bf16.msra.mxu0 %v3874
    %4438 = vmatprep.subr.bf16.mxu0 %v3878
    %4439 = vmatpush1.bf16.msra.mxu0 %v3877
    %4440 = vmatprep.subr.bf16.mxu0 %v3881
    %4441 = vmatpush1.bf16.msra.mxu0 %v3880
    %4442 = vmatprep.subr.bf16.mxu0 %v3884
    %4443 = vmatpush1.bf16.msra.mxu0 %v3883
    %4444 = vmatprep.subr.bf16.mxu0 %v3887
    %4445 = vmatpush1.bf16.msra.mxu0 %v3886
    %4446 = vmatprep.subr.bf16.mxu0 %v3890
    %4447 = vmatpush1.bf16.msra.mxu0 %v3889
    %4448 = vmatprep.subr.bf16.mxu0 %v3893
    %4449 = vmatpush1.bf16.msra.mxu0 %v3892
    %4450 = vmatprep.mubr.bf16.mxu0 %v2446
    %4451 = vmatmul.mubr.bf16.gmra.mrb[0].mxu0 %v2445
    %v4452 = vpop.f32.mrb[0].mxu0
    %v4453 = vadd.f32 %v4410, %v4452
    %v4454 = vpop.f32.mrb[0].mxu0
    %v4455 = vadd.f32 %v4412, %v4454
    %v4456 = vpop.f32.mrb[0].mxu0
    %v4457 = vadd.f32 %v4414, %v4456
    %v4458 = vpop.f32.mrb[0].mxu0
    %v4459 = vadd.f32 %v4416, %v4458
    %4460 = vdwg.mxu0
    %4461 = vmatprep.subr.bf16.mxu0 %v3896
    %4462 = vmatpush1.bf16.msra.mxu0 %v3895
    %4463 = vmatprep.subr.bf16.mxu0 %v3899
    %4464 = vmatpush1.bf16.msra.mxu0 %v3898
    %4465 = vmatprep.subr.bf16.mxu0 %v3902
    %4466 = vmatpush1.bf16.msra.mxu0 %v3901
    %4467 = vmatprep.subr.bf16.mxu0 %v3905
    %4468 = vmatpush1.bf16.msra.mxu0 %v3904
    %4469 = vmatprep.subr.bf16.mxu0 %v3908
    %4470 = vmatpush1.bf16.msra.mxu0 %v3907
    %4471 = vmatprep.subr.bf16.mxu0 %v3911
    %4472 = vmatpush1.bf16.msra.mxu0 %v3910
    %4473 = vmatprep.subr.bf16.mxu0 %v3914
    %4474 = vmatpush1.bf16.msra.mxu0 %v3913
    %4475 = vmatprep.subr.bf16.mxu0 %v3917
    %4476 = vmatpush1.bf16.msra.mxu0 %v3916
    %4477 = vmatprep.subr.bf16.mxu0 %v3920
    %4478 = vmatpush1.bf16.msra.mxu0 %v3919
    %4479 = vmatprep.subr.bf16.mxu0 %v3923
    %4480 = vmatpush1.bf16.msra.mxu0 %v3922
    %4481 = vmatprep.subr.bf16.mxu0 %v3926
    %4482 = vmatpush1.bf16.msra.mxu0 %v3925
    %4483 = vmatprep.subr.bf16.mxu0 %v3929
    %4484 = vmatpush1.bf16.msra.mxu0 %v3928
    %4485 = vmatprep.subr.bf16.mxu0 %v3932
    %4486 = vmatpush1.bf16.msra.mxu0 %v3931
    %4487 = vmatprep.subr.bf16.mxu0 %v3935
    %4488 = vmatpush1.bf16.msra.mxu0 %v3934
    %4489 = vmatprep.subr.bf16.mxu0 %v3938
    %4490 = vmatpush1.bf16.msra.mxu0 %v3937
    %4491 = vmatprep.subr.bf16.mxu0 %v3941
    %4492 = vmatpush1.bf16.msra.mxu0 %v3940
    %4493 = vmatprep.mubr.bf16.mxu0 %v2448
    %4494 = vmatmul.mubr.bf16.gmra.mrb[0].mxu0 %v2447
    %v4495 = vpop.f32.mrb[0].mxu0
    %v4496 = vadd.f32 %v4453, %v4495
    %v4497 = vpop.f32.mrb[0].mxu0
    %v4498 = vadd.f32 %v4455, %v4497
    %v4499 = vpop.f32.mrb[0].mxu0
    %v4500 = vadd.f32 %v4457, %v4499
    %v4501 = vpop.f32.mrb[0].mxu0
    %v4502 = vadd.f32 %v4459, %v4501
    %4503 = vdwg.mxu0
    %4504 = vmatprep.subr.bf16.mxu0 %v3944
    %4505 = vmatpush1.bf16.msra.mxu0 %v3943
    %4506 = vmatprep.subr.bf16.mxu0 %v3947
    %4507 = vmatpush1.bf16.msra.mxu0 %v3946
    %4508 = vmatprep.subr.bf16.mxu0 %v3950
    %4509 = vmatpush1.bf16.msra.mxu0 %v3949
    %4510 = vmatprep.subr.bf16.mxu0 %v3953
    %4511 = vmatpush1.bf16.msra.mxu0 %v3952
    %4512 = vmatprep.subr.bf16.mxu0 %v3956
    %4513 = vmatpush1.bf16.msra.mxu0 %v3955
    %4514 = vmatprep.subr.bf16.mxu0 %v3959
    %4515 = vmatpush1.bf16.msra.mxu0 %v3958
    %4516 = vmatprep.subr.bf16.mxu0 %v3962
    %4517 = vmatpush1.bf16.msra.mxu0 %v3961
    %4518 = vmatprep.subr.bf16.mxu0 %v3965
    %4519 = vmatpush1.bf16.msra.mxu0 %v3964
    %4520 = vmatprep.subr.bf16.mxu0 %v3968
    %4521 = vmatpush1.bf16.msra.mxu0 %v3967
    %4522 = vmatprep.subr.bf16.mxu0 %v3971
    %4523 = vmatpush1.bf16.msra.mxu0 %v3970
    %4524 = vmatprep.subr.bf16.mxu0 %v3974
    %4525 = vmatpush1.bf16.msra.mxu0 %v3973
    %4526 = vmatprep.subr.bf16.mxu0 %v3977
    %4527 = vmatpush1.bf16.msra.mxu0 %v3976
    %4528 = vmatprep.subr.bf16.mxu0 %v3980
    %4529 = vmatpush1.bf16.msra.mxu0 %v3979
    %4530 = vmatprep.subr.bf16.mxu0 %v3983
    %4531 = vmatpush1.bf16.msra.mxu0 %v3982
    %4532 = vmatprep.subr.bf16.mxu0 %v3986
    %4533 = vmatpush1.bf16.msra.mxu0 %v3985
    %4534 = vmatprep.subr.bf16.mxu0 %v3989
    %4535 = vmatpush1.bf16.msra.mxu0 %v3988
    %4536 = vmatprep.mubr.bf16.mxu0 %v2450
    %4537 = vmatmul.mubr.bf16.gmra.mrb[0].mxu0 %v2449
    %v4538 = vpop.f32.mrb[0].mxu0
    %v4539 = vadd.f32 %v4496, %v4538
    %v4540 = vpop.f32.mrb[0].mxu0
    %v4541 = vadd.f32 %v4498, %v4540
    %v4542 = vpop.f32.mrb[0].mxu0
    %v4543 = vadd.f32 %v4500, %v4542
    %v4544 = vpop.f32.mrb[0].mxu0
    %v4545 = vadd.f32 %v4502, %v4544
    %4546 = vdwg.mxu0
    %4547 = vmatprep.subr.bf16.mxu0 %v3992
    %4548 = vmatpush1.bf16.msra.mxu0 %v3991
    %4549 = vmatprep.subr.bf16.mxu0 %v3995
    %4550 = vmatpush1.bf16.msra.mxu0 %v3994
    %4551 = vmatprep.subr.bf16.mxu0 %v3998
    %4552 = vmatpush1.bf16.msra.mxu0 %v3997
    %4553 = vmatprep.subr.bf16.mxu0 %v4001
    %4554 = vmatpush1.bf16.msra.mxu0 %v4000
    %4555 = vmatprep.subr.bf16.mxu0 %v4004
    %4556 = vmatpush1.bf16.msra.mxu0 %v4003
    %4557 = vmatprep.subr.bf16.mxu0 %v4007
    %4558 = vmatpush1.bf16.msra.mxu0 %v4006
    %4559 = vmatprep.subr.bf16.mxu0 %v4010
    %4560 = vmatpush1.bf16.msra.mxu0 %v4009
    %4561 = vmatprep.subr.bf16.mxu0 %v4013
    %4562 = vmatpush1.bf16.msra.mxu0 %v4012
    %4563 = vmatprep.subr.bf16.mxu0 %v4016
    %4564 = vmatpush1.bf16.msra.mxu0 %v4015
    %4565 = vmatprep.subr.bf16.mxu0 %v4019
    %4566 = vmatpush1.bf16.msra.mxu0 %v4018
    %4567 = vmatprep.subr.bf16.mxu0 %v4022
    %4568 = vmatpush1.bf16.msra.mxu0 %v4021
    %4569 = vmatprep.subr.bf16.mxu0 %v4025
    %4570 = vmatpush1.bf16.msra.mxu0 %v4024
    %4571 = vmatprep.subr.bf16.mxu0 %v4028
    %4572 = vmatpush1.bf16.msra.mxu0 %v4027
    %4573 = vmatprep.subr.bf16.mxu0 %v4031
    %4574 = vmatpush1.bf16.msra.mxu0 %v4030
    %4575 = vmatprep.subr.bf16.mxu0 %v4034
    %4576 = vmatpush1.bf16.msra.mxu0 %v4033
    %4577 = vmatprep.subr.bf16.mxu0 %v4037
    %4578 = vmatpush1.bf16.msra.mxu0 %v4036
    %4579 = vmatprep.mubr.bf16.mxu0 %v2452
    %4580 = vmatmul.mubr.bf16.gmra.mrb[0].mxu0 %v2451
    %v4581 = vpop.f32.mrb[0].mxu0
    %v4582 = vadd.f32 %v4539, %v4581
    %v4583 = vpop.f32.mrb[0].mxu0
    %v4584 = vadd.f32 %v4541, %v4583
    %v4585 = vpop.f32.mrb[0].mxu0
    %v4586 = vadd.f32 %v4543, %v4585
    %v4587 = vpop.f32.mrb[0].mxu0
    %v4588 = vadd.f32 %v4545, %v4587
    %4589 = vdwg.mxu0
    %4590 = vmatprep.subr.bf16.mxu0 %v4040
    %4591 = vmatpush1.bf16.msra.mxu0 %v4039
    %4592 = vmatprep.subr.bf16.mxu0 %v4043
    %4593 = vmatpush1.bf16.msra.mxu0 %v4042
    %4594 = vmatprep.subr.bf16.mxu0 %v4046
    %4595 = vmatpush1.bf16.msra.mxu0 %v4045
    %4596 = vmatprep.subr.bf16.mxu0 %v4049
    %4597 = vmatpush1.bf16.msra.mxu0 %v4048
    %4598 = vmatprep.subr.bf16.mxu0 %v4052
    %4599 = vmatpush1.bf16.msra.mxu0 %v4051
    %4600 = vmatprep.subr.bf16.mxu0 %v4055
    %4601 = vmatpush1.bf16.msra.mxu0 %v4054
    %4602 = vmatprep.subr.bf16.mxu0 %v4058
    %4603 = vmatpush1.bf16.msra.mxu0 %v4057
    %4604 = vmatprep.subr.bf16.mxu0 %v4061
    %4605 = vmatpush1.bf16.msra.mxu0 %v4060
    %4606 = vmatprep.subr.bf16.mxu0 %v4064
    %4607 = vmatpush1.bf16.msra.mxu0 %v4063
    %4608 = vmatprep.subr.bf16.mxu0 %v4067
    %4609 = vmatpush1.bf16.msra.mxu0 %v4066
    %4610 = vmatprep.subr.bf16.mxu0 %v4070
    %4611 = vmatpush1.bf16.msra.mxu0 %v4069
    %4612 = vmatprep.subr.bf16.mxu0 %v4073
    %4613 = vmatpush1.bf16.msra.mxu0 %v4072
    %4614 = vmatprep.subr.bf16.mxu0 %v4076
    %4615 = vmatpush1.bf16.msra.mxu0 %v4075
    %4616 = vmatprep.subr.bf16.mxu0 %v4079
    %4617 = vmatpush1.bf16.msra.mxu0 %v4078
    %4618 = vmatprep.subr.bf16.mxu0 %v4082
    %4619 = vmatpush1.bf16.msra.mxu0 %v4081
    %4620 = vmatprep.subr.bf16.mxu0 %v4085
    %4621 = vmatpush1.bf16.msra.mxu0 %v4084
    %4622 = vmatprep.mubr.bf16.mxu0 %v2454
    %4623 = vmatmul.mubr.bf16.gmra.mrb[0].mxu0 %v2453
    %v4624 = vpop.f32.mrb[0].mxu0
    %v4625 = vadd.f32 %v4582, %v4624
    %v4626 = vpop.f32.mrb[0].mxu0
    %v4627 = vadd.f32 %v4584, %v4626
    %v4628 = vpop.f32.mrb[0].mxu0
    %v4629 = vadd.f32 %v4586, %v4628
    %v4630 = vpop.f32.mrb[0].mxu0
    %v4631 = vadd.f32 %v4588, %v4630
    %4632 = vdwg.mxu0
    %4633 = vmatprep.subr.bf16.mxu0 0
    %4634 = vmatpush1.bf16.msra.mxu0 %v3801
    %4635 = vmatprep.subr.bf16.mxu0 0
    %4636 = vmatpush1.bf16.msra.mxu0 %v3804
    %4637 = vmatprep.subr.bf16.mxu0 0
    %4638 = vmatpush1.bf16.msra.mxu0 %v3807
    %4639 = vmatprep.subr.bf16.mxu0 0
    %4640 = vmatpush1.bf16.msra.mxu0 %v3810
    %4641 = vmatprep.subr.bf16.mxu0 0
    %4642 = vmatpush1.bf16.msra.mxu0 %v3813
    %4643 = vmatprep.subr.bf16.mxu0 0
    %4644 = vmatpush1.bf16.msra.mxu0 %v3816
    %4645 = vmatprep.subr.bf16.mxu0 0
    %4646 = vmatpush1.bf16.msra.mxu0 %v3819
    %4647 = vmatprep.subr.bf16.mxu0 0
    %4648 = vmatpush1.bf16.msra.mxu0 %v3822
    %4649 = vmatprep.subr.bf16.mxu0 0
    %4650 = vmatpush1.bf16.msra.mxu0 %v3825
    %4651 = vmatprep.subr.bf16.mxu0 0
    %4652 = vmatpush1.bf16.msra.mxu0 %v3828
    %4653 = vmatprep.subr.bf16.mxu0 0
    %4654 = vmatpush1.bf16.msra.mxu0 %v3831
    %4655 = vmatprep.subr.bf16.mxu0 0
    %4656 = vmatpush1.bf16.msra.mxu0 %v3834
    %4657 = vmatprep.subr.bf16.mxu0 0
    %4658 = vmatpush1.bf16.msra.mxu0 %v3837
    %4659 = vmatprep.subr.bf16.mxu0 0
    %4660 = vmatpush1.bf16.msra.mxu0 %v3840
    %4661 = vmatprep.subr.bf16.mxu0 0
    %4662 = vmatpush1.bf16.msra.mxu0 %v3843
    %4663 = vmatprep.subr.bf16.mxu0 0
    %4664 = vmatpush1.bf16.msra.mxu0 %v3846
    %4665 = vmatprep.mubr.bf16.mxu0 %v2444
    %4666 = vmatmul.mubr.bf16.gmra.mrb[0].mxu0 %v2443
    %v4667 = vpop.f32.mrb[0].mxu0
    %v4668 = vadd.f32 0.0, %v4667
    %v4669 = vpop.f32.mrb[0].mxu0
    %v4670 = vpop.f32.mrb[0].mxu0
    %v4671 = vadd.f32 0.0, %v4670
    %v4672 = vpop.f32.mrb[0].mxu0
    %4673 = vdwg.mxu0
    %4674 = vmatprep.subr.bf16.mxu0 0
    %4675 = vmatpush1.bf16.msra.mxu0 %v3849
    %4676 = vmatprep.subr.bf16.mxu0 0
    %4677 = vmatpush1.bf16.msra.mxu0 %v3852
    %4678 = vmatprep.subr.bf16.mxu0 0
    %4679 = vmatpush1.bf16.msra.mxu0 %v3855
    %4680 = vmatprep.subr.bf16.mxu0 0
    %4681 = vmatpush1.bf16.msra.mxu0 %v3858
    %4682 = vmatprep.subr.bf16.mxu0 0
    %4683 = vmatpush1.bf16.msra.mxu0 %v3861
    %4684 = vmatprep.subr.bf16.mxu0 0
    %4685 = vmatpush1.bf16.msra.mxu0 %v3864
    %4686 = vmatprep.subr.bf16.mxu0 0
    %4687 = vmatpush1.bf16.msra.mxu0 %v3867
    %4688 = vmatprep.subr.bf16.mxu0 0
    %4689 = vmatpush1.bf16.msra.mxu0 %v3870
    %4690 = vmatprep.subr.bf16.mxu0 0
    %4691 = vmatpush1.bf16.msra.mxu0 %v3873
    %4692 = vmatprep.subr.bf16.mxu0 0
    %4693 = vmatpush1.bf16.msra.mxu0 %v3876
    %4694 = vmatprep.subr.bf16.mxu0 0
    %4695 = vmatpush1.bf16.msra.mxu0 %v3879
    %4696 = vmatprep.subr.bf16.mxu0 0
    %4697 = vmatpush1.bf16.msra.mxu0 %v3882
    %4698 = vmatprep.subr.bf16.mxu0 0
    %4699 = vmatpush1.bf16.msra.mxu0 %v3885
    %4700 = vmatprep.subr.bf16.mxu0 0
    %4701 = vmatpush1.bf16.msra.mxu0 %v3888
    %4702 = vmatprep.subr.bf16.mxu0 0
    %4703 = vmatpush1.bf16.msra.mxu0 %v3891
    %4704 = vmatprep.subr.bf16.mxu0 0
    %4705 = vmatpush1.bf16.msra.mxu0 %v3894
    %4706 = vmatprep.mubr.bf16.mxu0 %v2446
    %4707 = vmatmul.mubr.bf16.gmra.mrb[0].mxu0 %v2445
    %v4708 = vpop.f32.mrb[0].mxu0
    %v4709 = vadd.f32 %v4668, %v4708
    %v4710 = vpop.f32.mrb[0].mxu0
    %v4711 = vpop.f32.mrb[0].mxu0
    %v4712 = vadd.f32 %v4671, %v4711
    %v4713 = vpop.f32.mrb[0].mxu0
    %4714 = vdwg.mxu0
    %4715 = vmatprep.subr.bf16.mxu0 0
    %4716 = vmatpush1.bf16.msra.mxu0 %v3897
    %4717 = vmatprep.subr.bf16.mxu0 0
    %4718 = vmatpush1.bf16.msra.mxu0 %v3900
    %4719 = vmatprep.subr.bf16.mxu0 0
    %4720 = vmatpush1.bf16.msra.mxu0 %v3903
    %4721 = vmatprep.subr.bf16.mxu0 0
    %4722 = vmatpush1.bf16.msra.mxu0 %v3906
    %4723 = vmatprep.subr.bf16.mxu0 0
    %4724 = vmatpush1.bf16.msra.mxu0 %v3909
    %4725 = vmatprep.subr.bf16.mxu0 0
    %4726 = vmatpush1.bf16.msra.mxu0 %v3912
    %4727 = vmatprep.subr.bf16.mxu0 0
    %4728 = vmatpush1.bf16.msra.mxu0 %v3915
    %4729 = vmatprep.subr.bf16.mxu0 0
    %4730 = vmatpush1.bf16.msra.mxu0 %v3918
    %4731 = vmatprep.subr.bf16.mxu0 0
    %4732 = vmatpush1.bf16.msra.mxu0 %v3921
    %4733 = vmatprep.subr.bf16.mxu0 0
    %4734 = vmatpush1.bf16.msra.mxu0 %v3924
    %4735 = vmatprep.subr.bf16.mxu0 0
    %4736 = vmatpush1.bf16.msra.mxu0 %v3927
    %4737 = vmatprep.subr.bf16.mxu0 0
    %4738 = vmatpush1.bf16.msra.mxu0 %v3930
    %4739 = vmatprep.subr.bf16.mxu0 0
    %4740 = vmatpush1.bf16.msra.mxu0 %v3933
    %4741 = vmatprep.subr.bf16.mxu0 0
    %4742 = vmatpush1.bf16.msra.mxu0 %v3936
    %4743 = vmatprep.subr.bf16.mxu0 0
    %4744 = vmatpush1.bf16.msra.mxu0 %v3939
    %4745 = vmatprep.subr.bf16.mxu0 0
    %4746 = vmatpush1.bf16.msra.mxu0 %v3942
    %4747 = vmatprep.mubr.bf16.mxu0 %v2448
    %4748 = vmatmul.mubr.bf16.gmra.mrb[0].mxu0 %v2447
    %v4749 = vpop.f32.mrb[0].mxu0
    %v4750 = vadd.f32 %v4709, %v4749
    %v4751 = vpop.f32.mrb[0].mxu0
    %v4752 = vpop.f32.mrb[0].mxu0
    %v4753 = vadd.f32 %v4712, %v4752
    %v4754 = vpop.f32.mrb[0].mxu0
    %4755 = vdwg.mxu0
    %4756 = vmatprep.subr.bf16.mxu0 0
    %4757 = vmatpush1.bf16.msra.mxu0 %v3945
    %4758 = vmatprep.subr.bf16.mxu0 0
    %4759 = vmatpush1.bf16.msra.mxu0 %v3948
    %4760 = vmatprep.subr.bf16.mxu0 0
    %4761 = vmatpush1.bf16.msra.mxu0 %v3951
    %4762 = vmatprep.subr.bf16.mxu0 0
    %4763 = vmatpush1.bf16.msra.mxu0 %v3954
    %4764 = vmatprep.subr.bf16.mxu0 0
    %4765 = vmatpush1.bf16.msra.mxu0 %v3957
    %4766 = vmatprep.subr.bf16.mxu0 0
    %4767 = vmatpush1.bf16.msra.mxu0 %v3960
    %4768 = vmatprep.subr.bf16.mxu0 0
    %4769 = vmatpush1.bf16.msra.mxu0 %v3963
    %4770 = vmatprep.subr.bf16.mxu0 0
    %4771 = vmatpush1.bf16.msra.mxu0 %v3966
    %4772 = vmatprep.subr.bf16.mxu0 0
    %4773 = vmatpush1.bf16.msra.mxu0 %v3969
    %4774 = vmatprep.subr.bf16.mxu0 0
    %4775 = vmatpush1.bf16.msra.mxu0 %v3972
    %4776 = vmatprep.subr.bf16.mxu0 0
    %4777 = vmatpush1.bf16.msra.mxu0 %v3975
    %4778 = vmatprep.subr.bf16.mxu0 0
    %4779 = vmatpush1.bf16.msra.mxu0 %v3978
    %4780 = vmatprep.subr.bf16.mxu0 0
    %4781 = vmatpush1.bf16.msra.mxu0 %v3981
    %4782 = vmatprep.subr.bf16.mxu0 0
    %4783 = vmatpush1.bf16.msra.mxu0 %v3984
    %4784 = vmatprep.subr.bf16.mxu0 0
    %4785 = vmatpush1.bf16.msra.mxu0 %v3987
    %4786 = vmatprep.subr.bf16.mxu0 0
    %4787 = vmatpush1.bf16.msra.mxu0 %v3990
    %4788 = vmatprep.mubr.bf16.mxu0 %v2450
    %4789 = vmatmul.mubr.bf16.gmra.mrb[0].mxu0 %v2449
    %v4790 = vpop.f32.mrb[0].mxu0
    %v4791 = vadd.f32 %v4750, %v4790
    %v4792 = vpop.f32.mrb[0].mxu0
    %v4793 = vpop.f32.mrb[0].mxu0
    %v4794 = vadd.f32 %v4753, %v4793
    %v4795 = vpop.f32.mrb[0].mxu0
    %4796 = vdwg.mxu0
    %4797 = vmatprep.subr.bf16.mxu0 0
    %4798 = vmatpush1.bf16.msra.mxu0 %v3993
    %4799 = vmatprep.subr.bf16.mxu0 0
    %4800 = vmatpush1.bf16.msra.mxu0 %v3996
    %4801 = vmatprep.subr.bf16.mxu0 0
    %4802 = vmatpush1.bf16.msra.mxu0 %v3999
    %4803 = vmatprep.subr.bf16.mxu0 0
    %4804 = vmatpush1.bf16.msra.mxu0 %v4002
    %4805 = vmatprep.subr.bf16.mxu0 0
    %4806 = vmatpush1.bf16.msra.mxu0 %v4005
    %4807 = vmatprep.subr.bf16.mxu0 0
    %4808 = vmatpush1.bf16.msra.mxu0 %v4008
    %4809 = vmatprep.subr.bf16.mxu0 0
    %4810 = vmatpush1.bf16.msra.mxu0 %v4011
    %4811 = vmatprep.subr.bf16.mxu0 0
    %4812 = vmatpush1.bf16.msra.mxu0 %v4014
    %4813 = vmatprep.subr.bf16.mxu0 0
    %4814 = vmatpush1.bf16.msra.mxu0 %v4017
    %4815 = vmatprep.subr.bf16.mxu0 0
    %4816 = vmatpush1.bf16.msra.mxu0 %v4020
    %4817 = vmatprep.subr.bf16.mxu0 0
    %4818 = vmatpush1.bf16.msra.mxu0 %v4023
    %4819 = vmatprep.subr.bf16.mxu0 0
    %4820 = vmatpush1.bf16.msra.mxu0 %v4026
    %4821 = vmatprep.subr.bf16.mxu0 0
    %4822 = vmatpush1.bf16.msra.mxu0 %v4029
    %4823 = vmatprep.subr.bf16.mxu0 0
    %4824 = vmatpush1.bf16.msra.mxu0 %v4032
    %4825 = vmatprep.subr.bf16.mxu0 0
    %4826 = vmatpush1.bf16.msra.mxu0 %v4035
    %4827 = vmatprep.subr.bf16.mxu0 0
    %4828 = vmatpush1.bf16.msra.mxu0 %v4038
    %4829 = vmatprep.mubr.bf16.mxu0 %v2452
    %4830 = vmatmul.mubr.bf16.gmra.mrb[0].mxu0 %v2451
    %v4831 = vpop.f32.mrb[0].mxu0
    %v4832 = vadd.f32 %v4791, %v4831
    %v4833 = vpop.f32.mrb[0].mxu0
    %v4834 = vpop.f32.mrb[0].mxu0
    %v4835 = vadd.f32 %v4794, %v4834
    %v4836 = vpop.f32.mrb[0].mxu0
    %4837 = vdwg.mxu0
    %4838 = vmatprep.subr.bf16.mxu0 0
    %4839 = vmatpush1.bf16.msra.mxu0 %v4041
    %4840 = vmatprep.subr.bf16.mxu0 0
    %4841 = vmatpush1.bf16.msra.mxu0 %v4044
    %4842 = vmatprep.subr.bf16.mxu0 0
    %4843 = vmatpush1.bf16.msra.mxu0 %v4047
    %4844 = vmatprep.subr.bf16.mxu0 0
    %4845 = vmatpush1.bf16.msra.mxu0 %v4050
    %4846 = vmatprep.subr.bf16.mxu0 0
    %4847 = vmatpush1.bf16.msra.mxu0 %v4053
    %4848 = vmatprep.subr.bf16.mxu0 0
    %4849 = vmatpush1.bf16.msra.mxu0 %v4056
    %4850 = vmatprep.subr.bf16.mxu0 0
    %4851 = vmatpush1.bf16.msra.mxu0 %v4059
    %4852 = vmatprep.subr.bf16.mxu0 0
    %4853 = vmatpush1.bf16.msra.mxu0 %v4062
    %4854 = vmatprep.subr.bf16.mxu0 0
    %4855 = vmatpush1.bf16.msra.mxu0 %v4065
    %4856 = vmatprep.subr.bf16.mxu0 0
    %4857 = vmatpush1.bf16.msra.mxu0 %v4068
    %4858 = vmatprep.subr.bf16.mxu0 0
    %4859 = vmatpush1.bf16.msra.mxu0 %v4071
    %4860 = vmatprep.subr.bf16.mxu0 0
    %4861 = vmatpush1.bf16.msra.mxu0 %v4074
    %4862 = vmatprep.subr.bf16.mxu0 0
    %4863 = vmatpush1.bf16.msra.mxu0 %v4077
    %4864 = vmatprep.subr.bf16.mxu0 0
    %4865 = vmatpush1.bf16.msra.mxu0 %v4080
    %4866 = vmatprep.subr.bf16.mxu0 0
    %4867 = vmatpush1.bf16.msra.mxu0 %v4083
    %4868 = vmatprep.subr.bf16.mxu0 0
    %4869 = vmatpush1.bf16.msra.mxu0 %v4086
    %4870 = vmatprep.mubr.bf16.mxu0 %v2454
    %4871 = vmatmul.mubr.bf16.gmra.mrb[0].mxu0 %v2453
    %v4872 = vpop.f32.mrb[0].mxu0
    %v4873 = vadd.f32 %v4832, %v4872
    %v4874 = vpop.f32.mrb[0].mxu0
    %v4875 = vpop.f32.mrb[0].mxu0
    %v4876 = vadd.f32 %v4835, %v4875
    %v4877 = vpop.f32.mrb[0].mxu0
    %4878 = vdwg.mxu0
    %v4879 = vadd.f32 %v2437, %v4625
    %v4880 = vadd.f32 %v2438, %v4627
    %v4881 = vadd.f32 %v2439, %v4873
    %v4882 = vadd.f32 %v2440, %v4629
    %v4883 = vadd.f32 %v2441, %v4631
    %v4884 = vadd.f32 %v2442, %v4876
    %4885 = vst [vmem:[#allocation2] sm:$0xff] %v4879
    %4886 = vst [vmem:[#allocation2 + $0x8] sm:$0xff] %v4880
    %4887 = vst [vmem:[#allocation2 + $0x10] sm:$0xff] %v4881
    %4888 = vst [vmem:[#allocation2 + $0x18] sm:$0xff] %v4882
    %4889 = vst [vmem:[#allocation2 + $0x20] sm:$0xff] %v4883
    %4890 = vst [vmem:[#allocation2 + $0x28] sm:$0xff] %v4884
    // Predicated region
    $region46: #{tpu_custom_call.1} parent=1 // pred_check
      %p4891 = pneg %p86
    $region47: #{tpu_custom_call.1} parent=1 // pred_check_branch
      %4893 = sbr.rel (%p4891) target = $region49
    $region48: #{tpu_custom_call.1} parent=1 // pred_region
      %v4894 = vld [vmem:[#allocation2] sm:$0xff]
      %v4895 = vld [vmem:[#allocation2 + $0x8] sm:$0xff]
      %v4896 = vld [vmem:[#allocation2 + $0x10] sm:$0xff]
      %v4897 = vld [vmem:[#allocation2 + $0x18] sm:$0xff]
      %v4898 = vld [vmem:[#allocation2 + $0x20] sm:$0xff]
      %v4899 = vld [vmem:[#allocation2 + $0x28] sm:$0xff]
      %v4900 = vld [vmem:[#allocation11] sm:$0x7]
      %v4902 = vlaneseq
      %v4903 = vshrl.u32 %v4902, 7
      %v4904 = vsub.s32 0, %v4903
      %v4905 = vrot.slane %v4900, %v4904
      %v4906 = vlaneseq
      %v4907 = vshrl.u32 %v4906, 7
      %v4908 = vsub.s32 1, %v4907
      %v4909 = vrot.slane %v4900, %v4908
      %v4910 = vlaneseq
      %v4911 = vshrl.u32 %v4910, 7
      %v4912 = vsub.s32 2, %v4911
      %v4913 = vrot.slane %v4900, %v4912
      %v4917 = vadd.f32 %v4894, %v4905
      %v4918 = vadd.f32 %v4895, %v4909
      %v4919 = vadd.f32 %v4896, %v4913
      %v4920 = vadd.f32 %v4897, %v4905
      %v4921 = vadd.f32 %v4898, %v4909
      %v4922 = vadd.f32 %v4899, %v4913
      %4923 = vst [vmem:[#allocation12] sm:$0xff] %v4917
      %4924 = vst [vmem:[#allocation12 + $0x8] sm:$0xff] %v4918
      %4925 = vst [vmem:[#allocation12 + $0x10] sm:$0xff] %v4919
      %4926 = vst [vmem:[#allocation12 + $0x18] sm:$0xff] %v4920
      %4927 = vst [vmem:[#allocation12 + $0x20] sm:$0xff] %v4921
      %4928 = vst [vmem:[#allocation12 + $0x28] sm:$0xff] %v4922
    $region49: #{tpu_custom_call.1} parent=1 // pred_fallthru
      _
    // Predicated region
    $region50: #{tpu_custom_call.1} parent=1 // pred_check
      _
    $region51: #{tpu_custom_call.1} parent=1 // pred_check_branch
      %4930 = sbr.rel (0) target = $region53
    $region52: #{tpu_custom_call.1} parent=1 // pred_region
      %s4932 = ssub.s32 768, 768
      %4933 = vsyncadd [#allocation5], %s4932
      %s4934 = sshll.u32 [#allocation12], 4
      %s4935 = int_to_ptr.vmem [resolvable:$true] %s4934
      %4940 = dma.vmem_to_hbm [thread:$0]  %s4935, 768, %s5, [#allocation5], 384, 384, 24
    $region53: #{tpu_custom_call.1} parent=1 // pred_fallthru
      _
    // Predicated region
    $region54: #{tpu_custom_call.1} parent=1 // pred_check
      _
    $region55: #{tpu_custom_call.1} parent=1 // pred_check_branch
      %4942 = sbr.rel (0) target = $region57
    $region56: #{tpu_custom_call.1} parent=1 // pred_region
      %4943 = dma.done [#allocation5], 768
    $region57: #{tpu_custom_call.1} parent=1 // pred_fallthru
      _
    %4944 = vsyncpa [#allocation4], 1
    %4945 = vsyncpa [#allocation7], 1
    %4946 = vsyncpa [#allocation10], 1
    %4947 = vsyncpa [#allocation5], 1

</llo_original>
